<compile_context>
chip_gen: v6e
topology: v6e:2x2x1
jax: 0.10.0
libtpu: 0.0.40
codegen_flags: <defaults>
</compile_context>

<pallas_src>
import functools

import jax
import jax.numpy as jnp
from jax.experimental import pallas as pl
from jax.experimental.pallas import tpu as pltpu


def _round_up(x, m):
    return (x + m - 1) // m * m


# ---------------------------------------------------------------------------
# Stage 1: support1 = x @ W1   (row-tiled over nodes; K = padded feature dim)
# ---------------------------------------------------------------------------
def xw_kernel(x_ref, w1_ref, s1_ref):
    s1_ref[...] = jnp.dot(
        x_ref[...], w1_ref[...], preferred_element_type=jnp.float32
    ).astype(s1_ref.dtype)


# ---------------------------------------------------------------------------
# Fused stage 2+3 (adj read from HBM exactly once, resident in VMEM):
#   phase 0, row tile i: support2[i] = relu(adj[i] @ support1 + b1) @ W2  -> VMEM scratch
#   phase 1, row tile i: out[i]      = log_softmax(adj[i] @ support2 + b2)
# ---------------------------------------------------------------------------
def fused_layers_kernel(adj_ref, s1_ref, w2_ref, b1_ref, b2_ref, out_ref, s2_ref,
                        *, tm, num_classes):
    phase = pl.program_id(0)
    i = pl.program_id(1)
    row0 = pl.multiple_of(i * tm, tm)
    adj_tile = adj_ref[pl.ds(row0, tm), :]          # (tm, N_pad) slice of resident adj

    @pl.when(phase == 0)
    def _():
        h = jnp.dot(adj_tile, s1_ref[...], preferred_element_type=jnp.float32)
        h = jnp.maximum(h + b1_ref[...], 0.0)
        # TODO(synk): training-mode dropout (p=0.3) is identity at inference; not implemented.
        s2_ref[pl.ds(row0, tm), :] = jnp.dot(
            h.astype(jnp.bfloat16), w2_ref[...], preferred_element_type=jnp.float32
        ).astype(s2_ref.dtype)
        # Keep the (revisited) output block's writeback defined in phase 0; phase 1
        # fully overwrites it with the real values.
        out_ref[...] = jnp.zeros_like(out_ref)

    @pl.when(phase == 1)
    def _():
        z = jnp.dot(adj_tile, s2_ref[...], preferred_element_type=jnp.float32)
        z = z + b2_ref[...]
        # Padded class lanes must not pollute max / exp-sum (keep mask in f32!).
        lane = jax.lax.broadcasted_iota(jnp.int32, z.shape, 1)
        z = jnp.where(lane < num_classes, z, jnp.float32(-1e30))
        m = jnp.max(z, axis=1, keepdims=True)
        shifted = z - m
        lse = jnp.log(jnp.sum(jnp.exp(shifted), axis=1, keepdims=True))
        out_ref[...] = (shifted - lse).astype(out_ref.dtype)


# ---------------------------------------------------------------------------
# One-time padding / casting (hoist out of the per-forward path).
# ---------------------------------------------------------------------------
def prepare_gcn_inputs(x, adj, w1, b1, w2, b2, *, tm=256):
    assert tm % 128 == 0, "row tile must be a multiple of 128"
    N, F_in = x.shape
    H = w1.shape[1]
    C = w2.shape[1]

    N_pad = _round_up(N, max(tm, 128))
    F_pad = _round_up(F_in, 128)
    H_pad = _round_up(H, 128)
    C_pad = _round_up(C, 128)

    x_p = jnp.zeros((N_pad, F_pad), jnp.bfloat16).at[:N, :F_in].set(x.astype(jnp.bfloat16))
    adj_p = jnp.zeros((N_pad, N_pad), jnp.bfloat16).at[:N, :N].set(adj.astype(jnp.bfloat16))
    w1_p = jnp.zeros((F_pad, H_pad), jnp.bfloat16).at[:F_in, :H].set(w1.astype(jnp.bfloat16))
    w2_p = jnp.zeros((H_pad, C_pad), jnp.bfloat16).at[:H, :C].set(w2.astype(jnp.bfloat16))
    b1_p = jnp.zeros((1, H_pad), jnp.float32).at[0, :H].set(b1.astype(jnp.float32))
    b2_p = jnp.zeros((1, C_pad), jnp.float32).at[0, :C].set(b2.astype(jnp.float32))
    return x_p, adj_p, w1_p, b1_p, w2_p, b2_p


# ---------------------------------------------------------------------------
# Padded forward (jitted): two pallas_calls, adj streamed from HBM once.
# ---------------------------------------------------------------------------
@functools.partial(jax.jit, static_argnames=("n_nodes", "num_classes", "tm"))
def gcn_forward_padded(x_p, adj_p, w1_p, b1_p, w2_p, b2_p, *, n_nodes, num_classes, tm=256):
    N_pad, F_pad = x_p.shape
    H_pad = w1_p.shape[1]
    C_pad = w2_p.shape[1]
    nr = N_pad // tm

    vmem_limit = 48 << 20

    # Stage 1: support1 = x @ W1  -> [N_pad, H_pad] bf16  (rows independent -> parallel)
    support1 = pl.pallas_call(
        xw_kernel,
        out_shape=jax.ShapeDtypeStruct((N_pad, H_pad), jnp.bfloat16),
        grid=(nr,),
        in_specs=[
            pl.BlockSpec((tm, F_pad), lambda i: (i, 0)),        # x row tile
            pl.BlockSpec((F_pad, H_pad), lambda i: (0, 0)),     # W1 (resident)
        ],
        out_specs=pl.BlockSpec((tm, H_pad), lambda i: (i, 0)),
        compiler_params=pltpu.CompilerParams(
            dimension_semantics=("parallel",),
            vmem_limit_bytes=vmem_limit,
        ),
    )(x_p, w1_p)

    # Fused stages 2+3: adj resident in VMEM (DMA'd once), support2 in VMEM scratch.
    # Cross-phase scratch dependency -> both grid axes "arbitrary" (sequential, no
    # megacore row split).
    out_p = pl.pallas_call(
        functools.partial(fused_layers_kernel, tm=tm, num_classes=num_classes),
        out_shape=jax.ShapeDtypeStruct((N_pad, C_pad), jnp.float32),
        grid=(2, nr),
        in_specs=[
            pl.BlockSpec((N_pad, N_pad), lambda p, i: (0, 0)),  # adj (resident, read once)
            pl.BlockSpec((N_pad, H_pad), lambda p, i: (0, 0)),  # support1 (resident)
            pl.BlockSpec((H_pad, C_pad), lambda p, i: (0, 0)),  # W2 (resident)
            pl.BlockSpec((1, H_pad), lambda p, i: (0, 0)),      # b1
            pl.BlockSpec((1, C_pad), lambda p, i: (0, 0)),      # b2
        ],
        out_specs=pl.BlockSpec((tm, C_pad), lambda p, i: (i, 0)),
        scratch_shapes=[pltpu.VMEM((N_pad, C_pad), jnp.bfloat16)],  # persistent support2
        compiler_params=pltpu.CompilerParams(
            dimension_semantics=("arbitrary", "arbitrary"),
            vmem_limit_bytes=vmem_limit,
        ),
    )(adj_p, support1, w2_p, b1_p, b2_p)

    return out_p[:n_nodes, :num_classes]


def gcn_forward(x, adj, w1, b1, w2, b2, *, tm=256):
    """Convenience wrapper: pad once, then run the padded forward."""
    padded = prepare_gcn_inputs(x, adj, w1, b1, w2, b2, tm=tm)
    return gcn_forward_padded(*padded, n_nodes=x.shape[0], num_classes=w2.shape[1], tm=tm)


def reference_forward(x, adj, w1, b1, w2, b2):
    """Pure-JAX reference mirroring the kernel's bf16-input / f32-accumulate matmuls."""
    xb = x.astype(jnp.bfloat16)
    ab = adj.astype(jnp.bfloat16)
    w1b = w1.astype(jnp.bfloat16)
    w2b = w2.astype(jnp.bfloat16)
    s1 = jnp.dot(xb, w1b, preferred_element_type=jnp.float32).astype(jnp.bfloat16)
    h = jnp.maximum(jnp.dot(ab, s1, preferred_element_type=jnp.float32) + b1, 0.0)
    s2 = jnp.dot(h.astype(jnp.bfloat16), w2b, preferred_element_type=jnp.float32).astype(jnp.bfloat16)
    z = jnp.dot(ab, s2, preferred_element_type=jnp.float32) + b2
    return jax.nn.log_softmax(z, axis=1)


if __name__ == "__main__":
    key = jax.random.PRNGKey(0)
    k_x, k_a, k_w1, k_b1, k_w2, k_b2 = jax.random.split(key, 6)

    # Small problem consistent with the module: 1433 input features, 7 classes.
    N = 256           # number of graph nodes
    F_IN = 1433       # Cora feature dim (GraphConvolution(1433, hidden))
    HIDDEN = 32
    C = 7             # number of classes
    TM = 256          # row tile matched to the 256-wide MXU

    x = jax.random.normal(k_x, (N, F_IN), dtype=jnp.float32)

    # Symmetric row-normalized adjacency with self loops (deterministic).
    a_raw = (jax.random.uniform(k_a, (N, N)) > 0.95).astype(jnp.float32)
    a_sym = jnp.maximum(a_raw, a_raw.T) + jnp.eye(N, dtype=jnp.float32)
    deg = jnp.sum(a_sym, axis=1, keepdims=True)
    adj = a_sym / deg

    # Deterministic parameter init (uniform +-1/sqrt(fan_out), as in Kipf GCN).
    stdv1 = 1.0 / jnp.sqrt(HIDDEN)
    stdv2 = 1.0 / jnp.sqrt(C)
    w1 = jax.random.uniform(k_w1, (F_IN, HIDDEN), minval=-stdv1, maxval=stdv1).astype(jnp.float32)
    b1 = jax.random.uniform(k_b1, (HIDDEN,), minval=-stdv1, maxval=stdv1).astype(jnp.float32)
    w2 = jax.random.uniform(k_w2, (HIDDEN, C), minval=-stdv2, maxval=stdv2).astype(jnp.float32)
    b2 = jax.random.uniform(k_b2, (C,), minval=-stdv2, maxval=stdv2).astype(jnp.float32)

    # Padding / casting hoisted out of the forward path (done once).
    padded = prepare_gcn_inputs(x, adj, w1, b1, w2, b2, tm=TM)
    out = gcn_forward_padded(*padded, n_nodes=N, num_classes=C, tm=TM)
    out = jax.block_until_ready(out)

    ref = reference_forward(x, adj, w1, b1, w2, b2)
    assert out.shape == (N, C)
    assert jnp.allclose(out, ref, atol=2e-3, rtol=2e-3), "mismatch vs reference"

    print("KERNEL_OK")
</pallas_src>

<mosaic_0001>
module attributes {stable_mosaic.version = 11 : i64} {
  func.func @xw_kernel(%arg0: i32, %arg1: memref<256x1536xbf16, #tpu.memory_space<vmem>>, %arg2: memref<1536x128xbf16, #tpu.memory_space<vmem>>, %arg3: memref<256x128xbf16, #tpu.memory_space<vmem>>) attributes {dimension_semantics = [#tpu.dimension_semantics<parallel>], iteration_bounds = array<i64: 1>, scalar_prefetch = 0 : i64, scratch_operands = 0 : i64, tpu.core_type = #tpu.core_type<tc>, window_params = [{transform_indices = @transform_0, window_bounds = array<i64: 256, 1536>}, {pipeline_mode = #tpu.pipeline_mode<synchronous>, transform_indices = @transform_1, window_bounds = array<i64: 1536, 128>}, {transform_indices = @transform_2, window_bounds = array<i64: 256, 128>}]} {
    %c0 = arith.constant 0 : index
    %c0_0 = arith.constant 0 : index
    %0 = vector.load %arg1[%c0, %c0_0] : memref<256x1536xbf16, #tpu.memory_space<vmem>>, vector<256x1536xbf16>
    %c0_1 = arith.constant 0 : index
    %c0_2 = arith.constant 0 : index
    %1 = vector.load %arg2[%c0_1, %c0_2] : memref<1536x128xbf16, #tpu.memory_space<vmem>>, vector<1536x128xbf16>
    %cst = arith.constant dense<0.000000e+00> : vector<256x128xf32>
    %2 = tpu.matmul %0, %1, %cst {dimension_numbers = #tpu.dot_dimension_numbers<[1], [0], [0], [1], [0, 0, 1, 1], [], []>} : vector<256x1536xbf16>, vector<1536x128xbf16>, vector<256x128xf32> -> vector<256x128xf32>
    %3 = arith.truncf %2 : vector<256x128xf32> to vector<256x128xbf16>
    %c0_3 = arith.constant 0 : index
    %c0_4 = arith.constant 0 : index
    %4 = vector.load %arg3[%c0_3, %c0_4] : memref<256x128xbf16, #tpu.memory_space<vmem>>, vector<256x128xbf16>
    tpu.vector_store %arg3[%c0_3, %c0_4], %3 {strides = array<i32>} : memref<256x128xbf16, #tpu.memory_space<vmem>>, vector<256x128xbf16>,
    return
  }
  func.func @transform_0(%arg0: i32) -> (i32, i32) {
    %c0_i32 = arith.constant 0 : i32
    %c0_i32_0 = arith.constant 0 : i32
    return %arg0, %c0_i32 : i32, i32
  }
  func.func @transform_1(%arg0: i32) -> (i32, i32) {
    %c0_i32 = arith.constant 0 : i32
    %c0_i32_0 = arith.constant 0 : i32
    %c0_i32_1 = arith.constant 0 : i32
    return %c0_i32, %c0_i32_0 : i32, i32
  }
  func.func @transform_2(%arg0: i32) -> (i32, i32) {
    %c0_i32 = arith.constant 0 : i32
    %c0_i32_0 = arith.constant 0 : i32
    return %arg0, %c0_i32 : i32, i32
  }
}

module attributes {stable_mosaic.version = 11 : i64} {
  func.func @fused_layers_kernel(%arg0: i32, %arg1: i32, %arg2: memref<256x256xbf16, #tpu.memory_space<vmem>>, %arg3: memref<256x128xbf16, #tpu.memory_space<vmem>>, %arg4: memref<128x128xbf16, #tpu.memory_space<vmem>>, %arg5: memref<1x128xf32, #tpu.memory_space<vmem>>, %arg6: memref<1x128xf32, #tpu.memory_space<vmem>>, %arg7: memref<256x128xf32, #tpu.memory_space<vmem>>, %arg8: memref<256x128xbf16, #tpu.memory_space<vmem>>) attributes {dimension_semantics = [#tpu.dimension_semantics<arbitrary>, #tpu.dimension_semantics<arbitrary>], iteration_bounds = array<i64: 2, 1>, scalar_prefetch = 0 : i64, scratch_operands = 1 : i64, tpu.core_type = #tpu.core_type<tc>, window_params = [{pipeline_mode = #tpu.pipeline_mode<synchronous>, transform_indices = @transform_0, window_bounds = array<i64: 256, 256>}, {pipeline_mode = #tpu.pipeline_mode<synchronous>, transform_indices = @transform_1, window_bounds = array<i64: 256, 128>}, {pipeline_mode = #tpu.pipeline_mode<synchronous>, transform_indices = @transform_2, window_bounds = array<i64: 128, 128>}, {pipeline_mode = #tpu.pipeline_mode<synchronous>, transform_indices = @transform_3, window_bounds = array<i64: 1, 128>}, {pipeline_mode = #tpu.pipeline_mode<synchronous>, transform_indices = @transform_4, window_bounds = array<i64: 1, 128>}, {transform_indices = @transform_5, window_bounds = array<i64: 256, 128>}]} {
    %c256_i32 = arith.constant 256 : i32
    %0 = arith.muli %arg1, %c256_i32 : i32
    %1 = tpu.assume_multiple %0, 256 : i32
    %2 = arith.index_cast %1 : i32 to index
    %c0 = arith.constant 0 : index
    %3 = vector.load %arg2[%2, %c0] : memref<256x256xbf16, #tpu.memory_space<vmem>>, vector<256x256xbf16>
    %c0_i32 = arith.constant 0 : i32
    %4 = arith.cmpi eq, %arg0, %c0_i32 : i32
    %5 = arith.extui %4 : i1 to i32
    %c0_i32_0 = arith.constant 0 : i32
    %6 = arith.cmpi ne, %5, %c0_i32_0 : i32
    scf.if %6 {
      %c0_2 = arith.constant 0 : index
      %c0_3 = arith.constant 0 : index
      %10 = vector.load %arg3[%c0_2, %c0_3] : memref<256x128xbf16, #tpu.memory_space<vmem>>, vector<256x128xbf16>
      %cst = arith.constant dense<0.000000e+00> : vector<256x128xf32>
      %11 = tpu.matmul %3, %10, %cst {dimension_numbers = #tpu.dot_dimension_numbers<[1], [0], [0], [1], [0, 0, 1, 1], [], []>} : vector<256x256xbf16>, vector<256x128xbf16>, vector<256x128xf32> -> vector<256x128xf32>
      %c0_4 = arith.constant 0 : index
      %c0_5 = arith.constant 0 : index
      %12 = vector.load %arg5[%c0_4, %c0_5] : memref<1x128xf32, #tpu.memory_space<vmem>>, vector<1x128xf32>
      %13 = vector.broadcast %12 : vector<1x128xf32> to vector<256x128xf32>
      %14 = arith.addf %11, %13 : vector<256x128xf32>
      %cst_6 = arith.constant 0.000000e+00 : f32
      %15 = vector.broadcast %cst_6 : f32 to vector<256x128xf32>
      %16 = arith.maximumf %14, %15 : vector<256x128xf32>
      %17 = arith.truncf %16 : vector<256x128xf32> to vector<256x128xbf16>
      %c0_7 = arith.constant 0 : index
      %c0_8 = arith.constant 0 : index
      %18 = vector.load %arg4[%c0_7, %c0_8] : memref<128x128xbf16, #tpu.memory_space<vmem>>, vector<128x128xbf16>
      %cst_9 = arith.constant dense<0.000000e+00> : vector<256x128xf32>
      %19 = tpu.matmul %17, %18, %cst_9 {dimension_numbers = #tpu.dot_dimension_numbers<[1], [0], [0], [1], [0, 0, 1, 1], [], []>} : vector<256x128xbf16>, vector<128x128xbf16>, vector<256x128xf32> -> vector<256x128xf32>
      %20 = arith.truncf %19 : vector<256x128xf32> to vector<256x128xbf16>
      %21 = arith.index_cast %1 : i32 to index
      %c0_10 = arith.constant 0 : index
      %22 = vector.load %arg8[%21, %c0_10] : memref<256x128xbf16, #tpu.memory_space<vmem>>, vector<256x128xbf16>
      tpu.vector_store %arg8[%21, %c0_10], %20 {strides = array<i32>} : memref<256x128xbf16, #tpu.memory_space<vmem>>, vector<256x128xbf16>,
      %cst_11 = arith.constant 0.000000e+00 : f32
      %23 = vector.broadcast %cst_11 : f32 to vector<256x128xf32>
      %c0_12 = arith.constant 0 : index
      %c0_13 = arith.constant 0 : index
      %24 = vector.load %arg7[%c0_12, %c0_13] : memref<256x128xf32, #tpu.memory_space<vmem>>, vector<256x128xf32>
      tpu.vector_store %arg7[%c0_12, %c0_13], %23 {strides = array<i32>} : memref<256x128xf32, #tpu.memory_space<vmem>>, vector<256x128xf32>,
    } else {
    }
    %c1_i32 = arith.constant 1 : i32
    %7 = arith.cmpi eq, %arg0, %c1_i32 : i32
    %8 = arith.extui %7 : i1 to i32
    %c0_i32_1 = arith.constant 0 : i32
    %9 = arith.cmpi ne, %8, %c0_i32_1 : i32
    scf.if %9 {
      %c0_2 = arith.constant 0 : index
      %c0_3 = arith.constant 0 : index
      %10 = vector.load %arg8[%c0_2, %c0_3] : memref<256x128xbf16, #tpu.memory_space<vmem>>, vector<256x128xbf16>
      %cst = arith.constant dense<0.000000e+00> : vector<256x128xf32>
      %11 = tpu.matmul %3, %10, %cst {dimension_numbers = #tpu.dot_dimension_numbers<[1], [0], [0], [1], [0, 0, 1, 1], [], []>} : vector<256x256xbf16>, vector<256x128xbf16>, vector<256x128xf32> -> vector<256x128xf32>
      %c0_4 = arith.constant 0 : index
      %c0_5 = arith.constant 0 : index
      %12 = vector.load %arg6[%c0_4, %c0_5] : memref<1x128xf32, #tpu.memory_space<vmem>>, vector<1x128xf32>
      %13 = vector.broadcast %12 : vector<1x128xf32> to vector<256x128xf32>
      %14 = arith.addf %11, %13 : vector<256x128xf32>
      %15 = tpu.iota {dimensions = array<i32: 1>} : vector<256x128xi32>
      %c7_i32 = arith.constant 7 : i32
      %16 = vector.broadcast %c7_i32 : i32 to vector<256x128xi32>
      %17 = arith.cmpi slt, %15, %16 : vector<256x128xi32>
      %cst_6 = arith.constant -1.000000e+30 : f32
      %18 = vector.broadcast %cst_6 : f32 to vector<256x128xf32>
      %19 = arith.select %17, %14, %18 : vector<256x128xi1>, vector<256x128xf32>
      %cst_7 = arith.constant dense<0xFF800000> : vector<256xf32>
      %20 = vector.multi_reduction <maximumf>, %19, %cst_7 [1] : vector<256x128xf32> to vector<256xf32>
      %21 = vector.shape_cast %20 : vector<256xf32> to vector<256x1xf32>
      %22 = vector.broadcast %21 : vector<256x1xf32> to vector<256x128xf32>
      %23 = arith.subf %19, %22 : vector<256x128xf32>
      %24 = math.exp %23 : vector<256x128xf32>
      %cst_8 = arith.constant dense<0.000000e+00> : vector<256xf32>
      %25 = vector.multi_reduction <add>, %24, %cst_8 [1] : vector<256x128xf32> to vector<256xf32>
      %26 = vector.shape_cast %25 : vector<256xf32> to vector<256x1xf32>
      %27 = math.log %26 : vector<256x1xf32>
      %28 = vector.broadcast %27 : vector<256x1xf32> to vector<256x128xf32>
      %29 = arith.subf %23, %28 : vector<256x128xf32>
      %c0_9 = arith.constant 0 : index
      %c0_10 = arith.constant 0 : index
      %30 = vector.load %arg7[%c0_9, %c0_10] : memref<256x128xf32, #tpu.memory_space<vmem>>, vector<256x128xf32>
      tpu.vector_store %arg7[%c0_9, %c0_10], %29 {strides = array<i32>} : memref<256x128xf32, #tpu.memory_space<vmem>>, vector<256x128xf32>,
    } else {
    }
    return
  }
  func.func @transform_0(%arg0: i32, %arg1: i32) -> (i32, i32) {
    %c0_i32 = arith.constant 0 : i32
    %c0_i32_0 = arith.constant 0 : i32
    %c0_i32_1 = arith.constant 0 : i32
    return %c0_i32, %c0_i32_0 : i32, i32
  }
  func.func @transform_1(%arg0: i32, %arg1: i32) -> (i32, i32) {
    %c0_i32 = arith.constant 0 : i32
    %c0_i32_0 = arith.constant 0 : i32
    %c0_i32_1 = arith.constant 0 : i32
    return %c0_i32, %c0_i32_0 : i32, i32
  }
  func.func @transform_2(%arg0: i32, %arg1: i32) -> (i32, i32) {
    %c0_i32 = arith.constant 0 : i32
    %c0_i32_0 = arith.constant 0 : i32
    %c0_i32_1 = arith.constant 0 : i32
    return %c0_i32, %c0_i32_0 : i32, i32
  }
  func.func @transform_3(%arg0: i32, %arg1: i32) -> (i32, i32) {
    %c0_i32 = arith.constant 0 : i32
    %c0_i32_0 = arith.constant 0 : i32
    %c0_i32_1 = arith.constant 0 : i32
    return %c0_i32, %c0_i32_0 : i32, i32
  }
  func.func @transform_4(%arg0: i32, %arg1: i32) -> (i32, i32) {
    %c0_i32 = arith.constant 0 : i32
    %c0_i32_0 = arith.constant 0 : i32
    %c0_i32_1 = arith.constant 0 : i32
    return %c0_i32, %c0_i32_0 : i32, i32
  }
  func.func @transform_5(%arg0: i32, %arg1: i32) -> (i32, i32) {
    %c0_i32 = arith.constant 0 : i32
    %c0_i32_0 = arith.constant 0 : i32
    return %arg1, %c0_i32 : i32, i32
  }
}

</mosaic_0001>

<llo_original>
// kernel: gcn_forward_padded.3
$region0: #{gcn_forward_padded.3}
  #allocation0 [shape = 'u32[]', space=smem, size = 0x4, offset = 0x4, fixed_abs, tag = 'smem constant byte address 0x4 - core index']
  #allocation1 [shape = 'u32[144,128]{1,0:T(1,128)}', space=vmem, size = 0x12000, scoped, tag = 'internal scratch']
  #allocation2 [shape = 'bf16[256,128]{1,0:T(8,128)(2,1)}', space=vmem, size = 0x10000, scoped, tag = 'scratch operand']
  %s0 = inlined_call_operand.vmem [shape: bf16[256,256], index: 0, kind: input, shape index: {}]
  %s1 = inlined_call_operand.vmem [shape: bf16[256,128], index: 1, kind: input, shape index: {}]
  %s2 = inlined_call_operand.vmem [shape: bf16[128,128], index: 2, kind: input, shape index: {}]
  %s3 = inlined_call_operand.vmem [shape: f32[1,128], index: 3, kind: input, shape index: {}]
  %s4 = inlined_call_operand.vmem [shape: f32[1,128], index: 4, kind: input, shape index: {}]
  %s5 = inlined_call_operand.vmem [shape: f32[256,128], index: 5, kind: output, shape index: {}]
  %s6 = sld [smem:[#allocation0]]
  $region61: #{gcn_forward_padded.3} parent=0
    _
  %s8 = ssub.s32 1, %s6
  %s9 = scalar_select 0, %s8, %s6
  loop: start=0, step=1, limit=4
  $region2: #{gcn_forward_padded.3} parent=0 // loop_pre_header
    _
  $region3: #{gcn_forward_padded.3} parent=0 // loop_header
    %s11 = sphi 0, %s15
    %p12 = scmp.ge.s32.totalorder %s11, 4
    %s18 = sphi 0, %s30
    %s19 = sphi 0, %s26
    %s20 = sphi 0, %s18
    %s21 = sphi 0, %s19
    %s22 = sphi 0, %s20
    %s23 = sphi 0, %s21
    %s31 = sphi 0, %s31
    %s33 = sphi 0, %s31
    %s34 = sphi 0, %s33
    %s48 = sphi 0, %s34
    %s52 = sphi 0, %s52
    %s54 = sphi 0, %s52
    %s55 = sphi 0, %s54
    %s69 = sphi 0, %s55
    %s73 = sphi 0, %s73
    %s75 = sphi 0, %s73
    %s76 = sphi 0, %s75
    %s90 = sphi 0, %s76
    %s94 = sphi 0, %s94
    %s96 = sphi 0, %s94
    %s97 = sphi 0, %s96
    %s111 = sphi 0, %s97
    %s115 = sphi 0, %s115
    %s117 = sphi 0, %s115
    %s118 = sphi 0, %s117
    %s132 = sphi 0, %s118
    %s138 = sphi 0, %s140
    %s141 = sphi 0, %s138
    %s142 = sphi 0, %s141
    %s158 = sphi 0, %s142
  $region4: #{gcn_forward_padded.3} parent=0 // loop_header_branch
    %14 = sbr.rel (%p12) target = $region8
  $region5: #{gcn_forward_padded.3} parent=0 // loop_body
    %s16 = ssub.s32 %s11, 1
    %s17 = ssub.s32 %s11, 2
    %s24 = sadd.s32 1, %s19
    %p25 = scmp.ge.s32.totalorder %s24, 1
    %s26 = scalar_select %p25, 0, %s24
    %s27 = sadd.s32 1, %s18
    %s28 = scalar_select %p25, %s27, %s18
    %p29 = scmp.ge.s32.totalorder %s28, 2
    %s30 = scalar_select %p29, 0, %s28
    %s32 = sadd.s32 %s31, 1
    %p35 = scmp.eq.s32.totalorder %s11, 1
    %p36 = scmp.ne.s32.totalorder %s31, %s33
    %p37 = scmp.eq.s32.totalorder %s11, 0
    %p38 = por %p36, %p37
    %p39 = scmp.ne.s32.totalorder %s31, %s33
    %p40 = scmp.eq.s32.totalorder %s16, 1
    %p41 = por %p39, %p40
    %p42 = scmp.ne.s32.totalorder %s33, %s34
    %p43 = scmp.eq.s32.totalorder %s16, 0
    %p44 = por %p42, %p43
    %p45 = scmp.ne.s32.totalorder %s33, %s34
    %p46 = scmp.eq.s32.totalorder %s17, 1
    %p47 = por %p45, %p46
    %p49 = scmp.ne.s32.totalorder %s34, %s48
    %p50 = scmp.eq.s32.totalorder %s17, 0
    %p51 = por %p49, %p50
    %s53 = sadd.s32 %s52, 1
    %p56 = scmp.eq.s32.totalorder %s11, 1
    %p57 = scmp.ne.s32.totalorder %s52, %s54
    %p58 = scmp.eq.s32.totalorder %s11, 0
    %p59 = por %p57, %p58
    %p60 = scmp.ne.s32.totalorder %s52, %s54
    %p61 = scmp.eq.s32.totalorder %s16, 1
    %p62 = por %p60, %p61
    %p63 = scmp.ne.s32.totalorder %s54, %s55
    %p64 = scmp.eq.s32.totalorder %s16, 0
    %p65 = por %p63, %p64
    %p66 = scmp.ne.s32.totalorder %s54, %s55
    %p67 = scmp.eq.s32.totalorder %s17, 1
    %p68 = por %p66, %p67
    %p70 = scmp.ne.s32.totalorder %s55, %s69
    %p71 = scmp.eq.s32.totalorder %s17, 0
    %p72 = por %p70, %p71
    %s74 = sadd.s32 %s73, 1
    %p77 = scmp.eq.s32.totalorder %s11, 1
    %p78 = scmp.ne.s32.totalorder %s73, %s75
    %p79 = scmp.eq.s32.totalorder %s11, 0
    %p80 = por %p78, %p79
    %p81 = scmp.ne.s32.totalorder %s73, %s75
    %p82 = scmp.eq.s32.totalorder %s16, 1
    %p83 = por %p81, %p82
    %p84 = scmp.ne.s32.totalorder %s75, %s76
    %p85 = scmp.eq.s32.totalorder %s16, 0
    %p86 = por %p84, %p85
    %p87 = scmp.ne.s32.totalorder %s75, %s76
    %p88 = scmp.eq.s32.totalorder %s17, 1
    %p89 = por %p87, %p88
    %p91 = scmp.ne.s32.totalorder %s76, %s90
    %p92 = scmp.eq.s32.totalorder %s17, 0
    %p93 = por %p91, %p92
    %s95 = sadd.s32 %s94, 1
    %p98 = scmp.eq.s32.totalorder %s11, 1
    %p99 = scmp.ne.s32.totalorder %s94, %s96
    %p100 = scmp.eq.s32.totalorder %s11, 0
    %p101 = por %p99, %p100
    %p102 = scmp.ne.s32.totalorder %s94, %s96
    %p103 = scmp.eq.s32.totalorder %s16, 1
    %p104 = por %p102, %p103
    %p105 = scmp.ne.s32.totalorder %s96, %s97
    %p106 = scmp.eq.s32.totalorder %s16, 0
    %p107 = por %p105, %p106
    %p108 = scmp.ne.s32.totalorder %s96, %s97
    %p109 = scmp.eq.s32.totalorder %s17, 1
    %p110 = por %p108, %p109
    %p112 = scmp.ne.s32.totalorder %s97, %s111
    %p113 = scmp.eq.s32.totalorder %s17, 0
    %p114 = por %p112, %p113
    %s116 = sadd.s32 %s115, 1
    %p119 = scmp.eq.s32.totalorder %s11, 1
    %p120 = scmp.ne.s32.totalorder %s115, %s117
    %p121 = scmp.eq.s32.totalorder %s11, 0
    %p122 = por %p120, %p121
    %p123 = scmp.ne.s32.totalorder %s115, %s117
    %p124 = scmp.eq.s32.totalorder %s16, 1
    %p125 = por %p123, %p124
    %p126 = scmp.ne.s32.totalorder %s117, %s118
    %p127 = scmp.eq.s32.totalorder %s16, 0
    %p128 = por %p126, %p127
    %p129 = scmp.ne.s32.totalorder %s117, %s118
    %p130 = scmp.eq.s32.totalorder %s17, 1
    %p131 = por %p129, %p130
    %p133 = scmp.ne.s32.totalorder %s118, %s132
    %p134 = scmp.eq.s32.totalorder %s17, 0
    %p135 = por %p133, %p134
    %s136 = ssub.s32 %s19, %s26
    %p137 = scmp.eq.s32.totalorder %s136, 0
    %s139 = sadd.s32 %s138, 1
    %s140 = scalar_select %p137, %s138, %s139
    %p143 = pneg %p137
    %p144 = scmp.eq.s32.totalorder %s11, 1
    %p145 = por %p143, %p144
    %p146 = scmp.ne.s32.totalorder %s138, %s141
    %p147 = scmp.eq.s32.totalorder %s11, 0
    %p148 = por %p146, %p147
    %p149 = scmp.ne.s32.totalorder %s138, %s141
    %p150 = scmp.eq.s32.totalorder %s16, 1
    %p151 = por %p149, %p150
    %p152 = scmp.ne.s32.totalorder %s141, %s142
    %p153 = scmp.eq.s32.totalorder %s16, 0
    %p154 = por %p152, %p153
    %p155 = scmp.ne.s32.totalorder %s141, %s142
    %p156 = scmp.eq.s32.totalorder %s17, 1
    %p157 = por %p155, %p156
    %p159 = scmp.ne.s32.totalorder %s142, %s158
    %p160 = scmp.eq.s32.totalorder %s17, 0
    %p161 = por %p159, %p160
    %p162 = scmp.le.s32.totalorder 1, %s11
    %p163 = scmp.lt.s32.totalorder %s11, 3
    %p164 = pnand %p162, %p163
    %p165 = pneg %p164
    // Predicated region
    $region9: #{gcn_forward_padded.3} parent=5 // pred_check
      _
    $region10: #{gcn_forward_padded.3} parent=5 // pred_check_branch
      %167 = sbr.rel (%p164) target = $region12
    $region11: #{gcn_forward_padded.3} parent=5 // pred_region
      %s168 = ssub.s32 %s11, 1
      // Predicated region
      $region13: #{gcn_forward_padded.3} parent=11 // pred_check
        %p169 = pneg %p44
      $region14: #{gcn_forward_padded.3} parent=11 // pred_check_branch
        %171 = sbr.rel (%p169) target = $region16
      $region15: #{gcn_forward_padded.3} parent=11 // pred_region
        _
      $region16: #{gcn_forward_padded.3} parent=11 // pred_fallthru
        _
      // Predicated region
      $region17: #{gcn_forward_padded.3} parent=11 // pred_check
        %p172 = pneg %p65
      $region18: #{gcn_forward_padded.3} parent=11 // pred_check_branch
        %174 = sbr.rel (%p172) target = $region20
      $region19: #{gcn_forward_padded.3} parent=11 // pred_region
        _
      $region20: #{gcn_forward_padded.3} parent=11 // pred_fallthru
        _
      // Predicated region
      $region21: #{gcn_forward_padded.3} parent=11 // pred_check
        %p175 = pneg %p86
      $region22: #{gcn_forward_padded.3} parent=11 // pred_check_branch
        %177 = sbr.rel (%p175) target = $region24
      $region23: #{gcn_forward_padded.3} parent=11 // pred_region
        _
      $region24: #{gcn_forward_padded.3} parent=11 // pred_fallthru
        _
      // Predicated region
      $region25: #{gcn_forward_padded.3} parent=11 // pred_check
        %p178 = pneg %p107
      $region26: #{gcn_forward_padded.3} parent=11 // pred_check_branch
        %180 = sbr.rel (%p178) target = $region28
      $region27: #{gcn_forward_padded.3} parent=11 // pred_region
        _
      $region28: #{gcn_forward_padded.3} parent=11 // pred_fallthru
        _
      // Predicated region
      $region29: #{gcn_forward_padded.3} parent=11 // pred_check
        %p181 = pneg %p128
      $region30: #{gcn_forward_padded.3} parent=11 // pred_check_branch
        %183 = sbr.rel (%p181) target = $region32
      $region31: #{gcn_forward_padded.3} parent=11 // pred_region
        _
      $region32: #{gcn_forward_padded.3} parent=11 // pred_fallthru
        _
    $region12: #{gcn_forward_padded.3} parent=5 // pred_fallthru
      _
    %p184 = scmp.lt.s32.totalorder %s11, 2
    // Predicated region
    $region33: #{gcn_forward_padded.3} parent=5 // pred_check
      %p185 = pneg %p184
    $region34: #{gcn_forward_padded.3} parent=5 // pred_check_branch
      %187 = sbr.rel (%p185) target = $region36
    $region35: #{gcn_forward_padded.3} parent=5 // pred_region
      _
    $region36: #{gcn_forward_padded.3} parent=5 // pred_fallthru
      _
    %p188 = scmp.le.s32.totalorder 1, %s11
    %p189 = scmp.lt.s32.totalorder %s11, 3
    %p190 = pnand %p188, %p189
    %p191 = pneg %p190
    // Predicated region
    $region37: #{gcn_forward_padded.3} parent=5 // pred_check
      _
    $region38: #{gcn_forward_padded.3} parent=5 // pred_check_branch
      %193 = sbr.rel (%p190) target = $region40
    $region39: #{gcn_forward_padded.3} parent=5 // pred_region
      %s194 = ssub.s32 %s11, 1
      %p195 = pneg %p44
      %p196 = pneg %p41
      %p197 = pneg %p65
      %p198 = pneg %p62
      %p199 = pneg %p86
      %p200 = pneg %p83
      %p201 = pneg %p107
      %p202 = pneg %p104
      %p203 = pneg %p128
      %p204 = pneg %p125
      %p205 = pneg %p154
      %p206 = pneg %p151
      %s207 = smul.u32 32, %s21
      %p208 = scmp.lt.s32.totalorder %s207, 31
      %s209 = scalar_select %p208, %s207, 31
      %s210 = smul.addr %s209, 8
      %s211 = scalar_lea.vmem %s5, %s210
      %s212 = smul.u32 32, %s21
      %p213 = scmp.lt.s32.totalorder %s212, 31
      %s214 = scalar_select %p213, %s212, 31
      %s215 = smul.addr %s214, 8
      %s216 = scalar_lea.vmem %s5, %s215
      %s217 = smul.u32 32, %s21
      %s219 = smul.u32 %s21, 256
      %s220 = sshra.s32 %s219, 3
      %s221 = sand.u32 %s219, 7
      %s222 = smul.u32 %s220, 2
      %s223 = smul.addr %s222, 4
      %s224 = scalar_lea.vmem %s0, %s223
      %v225 = vld [vmem:[%s224] sm:$0xff]
      %v226 = vld [vmem:[%s224 + $0x8] sm:$0xff]
      %v227 = vld [vmem:[%s224 + $0x10] sm:$0xff]
      %v228 = vld [vmem:[%s224 + $0x18] sm:$0xff]
      %v229 = vld [vmem:[%s224 + $0x20] sm:$0xff]
      %v230 = vld [vmem:[%s224 + $0x28] sm:$0xff]
      %v231 = vld [vmem:[%s224 + $0x30] sm:$0xff]
      %v232 = vld [vmem:[%s224 + $0x38] sm:$0xff]
      %v233 = vld [vmem:[%s224 + $0x40] sm:$0xff]
      %v234 = vld [vmem:[%s224 + $0x48] sm:$0xff]
      %v235 = vld [vmem:[%s224 + $0x50] sm:$0xff]
      %v236 = vld [vmem:[%s224 + $0x58] sm:$0xff]
      %v237 = vld [vmem:[%s224 + $0x60] sm:$0xff]
      %v238 = vld [vmem:[%s224 + $0x68] sm:$0xff]
      %v239 = vld [vmem:[%s224 + $0x70] sm:$0xff]
      %v240 = vld [vmem:[%s224 + $0x78] sm:$0xff]
      %v241 = vld [vmem:[%s224 + $0x80] sm:$0xff]
      %v242 = vld [vmem:[%s224 + $0x88] sm:$0xff]
      %v243 = vld [vmem:[%s224 + $0x90] sm:$0xff]
      %v244 = vld [vmem:[%s224 + $0x98] sm:$0xff]
      %v245 = vld [vmem:[%s224 + $0xa0] sm:$0xff]
      %v246 = vld [vmem:[%s224 + $0xa8] sm:$0xff]
      %v247 = vld [vmem:[%s224 + $0xb0] sm:$0xff]
      %v248 = vld [vmem:[%s224 + $0xb8] sm:$0xff]
      %v249 = vld [vmem:[%s224 + $0xc0] sm:$0xff]
      %v250 = vld [vmem:[%s224 + $0xc8] sm:$0xff]
      %v251 = vld [vmem:[%s224 + $0xd0] sm:$0xff]
      %v252 = vld [vmem:[%s224 + $0xd8] sm:$0xff]
      %v253 = vld [vmem:[%s224 + $0xe0] sm:$0xff]
      %v254 = vld [vmem:[%s224 + $0xe8] sm:$0xff]
      %v255 = vld [vmem:[%s224 + $0xf0] sm:$0xff]
      %v256 = vld [vmem:[%s224 + $0xf8] sm:$0xff]
      %p257 = scmp.eq.s32.totalorder %s20, 0
      // Predicated region
      $region41: #{gcn_forward_padded.3} parent=39 // pred_check
        %p258 = pneg %p257
      $region42: #{gcn_forward_padded.3} parent=39 // pred_check_branch
        %260 = sbr.rel (%p258) target = $region44
      $region43: #{gcn_forward_padded.3} parent=39 // pred_region
        %v261 = vld [vmem:[%s1] sm:$0xf]
        %v262 = vld [vmem:[%s1 + $0x4] sm:$0xf]
        %v263 = vld [vmem:[%s1 + $0x8] sm:$0xf]
        %v264 = vld [vmem:[%s1 + $0xc] sm:$0xf]
        %v265 = vld [vmem:[%s1 + $0x10] sm:$0xf]
        %v266 = vld [vmem:[%s1 + $0x14] sm:$0xf]
        %v267 = vld [vmem:[%s1 + $0x18] sm:$0xf]
        %v268 = vld [vmem:[%s1 + $0x1c] sm:$0xf]
        %v269 = vld [vmem:[%s1 + $0x20] sm:$0xf]
        %v270 = vld [vmem:[%s1 + $0x24] sm:$0xf]
        %v271 = vld [vmem:[%s1 + $0x28] sm:$0xf]
        %v272 = vld [vmem:[%s1 + $0x2c] sm:$0xf]
        %v273 = vld [vmem:[%s1 + $0x30] sm:$0xf]
        %v274 = vld [vmem:[%s1 + $0x34] sm:$0xf]
        %v275 = vld [vmem:[%s1 + $0x38] sm:$0xf]
        %v276 = vld [vmem:[%s1 + $0x3c] sm:$0xf]
        %v277 = vld [vmem:[%s1 + $0x40] sm:$0xf]
        %v278 = vld [vmem:[%s1 + $0x44] sm:$0xf]
        %v279 = vld [vmem:[%s1 + $0x48] sm:$0xf]
        %v280 = vld [vmem:[%s1 + $0x4c] sm:$0xf]
        %v281 = vld [vmem:[%s1 + $0x50] sm:$0xf]
        %v282 = vld [vmem:[%s1 + $0x54] sm:$0xf]
        %v283 = vld [vmem:[%s1 + $0x58] sm:$0xf]
        %v284 = vld [vmem:[%s1 + $0x5c] sm:$0xf]
        %v285 = vld [vmem:[%s1 + $0x60] sm:$0xf]
        %v286 = vld [vmem:[%s1 + $0x64] sm:$0xf]
        %v287 = vld [vmem:[%s1 + $0x68] sm:$0xf]
        %v288 = vld [vmem:[%s1 + $0x6c] sm:$0xf]
        %v289 = vld [vmem:[%s1 + $0x70] sm:$0xf]
        %v290 = vld [vmem:[%s1 + $0x74] sm:$0xf]
        %v291 = vld [vmem:[%s1 + $0x78] sm:$0xf]
        %v292 = vld [vmem:[%s1 + $0x7c] sm:$0xf]
        %v293 = vld [vmem:[%s3] sm:$0x1]
        %v295 = vlaneseq
        %v296 = vshrl.u32 %v295, 7
        %v297 = vsub.s32 0, %v296
        %v298 = vrot.slane %v293, %v297
        %v332 = vunpack.c.l.b16 %v225
        %v333 = vunpack.c.h.b16 %v225
        %v334 = vunpack.c.l.b16 %v226
        %v335 = vunpack.c.h.b16 %v226
        %v336 = vunpack.c.l.b16 %v227
        %v337 = vunpack.c.h.b16 %v227
        %v338 = vunpack.c.l.b16 %v228
        %v339 = vunpack.c.h.b16 %v228
        %v340 = vunpack.c.l.b16 %v229
        %v341 = vunpack.c.h.b16 %v229
        %v342 = vunpack.c.l.b16 %v230
        %v343 = vunpack.c.h.b16 %v230
        %v344 = vunpack.c.l.b16 %v231
        %v345 = vunpack.c.h.b16 %v231
        %v346 = vunpack.c.l.b16 %v232
        %v347 = vunpack.c.h.b16 %v232
        %v348 = vunpack.c.l.b16 %v233
        %v349 = vunpack.c.h.b16 %v233
        %v350 = vunpack.c.l.b16 %v234
        %v351 = vunpack.c.h.b16 %v234
        %v352 = vunpack.c.l.b16 %v235
        %v353 = vunpack.c.h.b16 %v235
        %v354 = vunpack.c.l.b16 %v236
        %v355 = vunpack.c.h.b16 %v236
        %v356 = vunpack.c.l.b16 %v237
        %v357 = vunpack.c.h.b16 %v237
        %v358 = vunpack.c.l.b16 %v238
        %v359 = vunpack.c.h.b16 %v238
        %v360 = vunpack.c.l.b16 %v239
        %v361 = vunpack.c.h.b16 %v239
        %v362 = vunpack.c.l.b16 %v240
        %v363 = vunpack.c.h.b16 %v240
        %v364 = vunpack.c.l.b16 %v241
        %v365 = vunpack.c.h.b16 %v241
        %v366 = vunpack.c.l.b16 %v242
        %v367 = vunpack.c.h.b16 %v242
        %v368 = vunpack.c.l.b16 %v243
        %v369 = vunpack.c.h.b16 %v243
        %v370 = vunpack.c.l.b16 %v244
        %v371 = vunpack.c.h.b16 %v244
        %v372 = vunpack.c.l.b16 %v245
        %v373 = vunpack.c.h.b16 %v245
        %v374 = vunpack.c.l.b16 %v246
        %v375 = vunpack.c.h.b16 %v246
        %v376 = vunpack.c.l.b16 %v247
        %v377 = vunpack.c.h.b16 %v247
        %v378 = vunpack.c.l.b16 %v248
        %v379 = vunpack.c.h.b16 %v248
        %v380 = vunpack.c.l.b16 %v249
        %v381 = vunpack.c.h.b16 %v249
        %v382 = vunpack.c.l.b16 %v250
        %v383 = vunpack.c.h.b16 %v250
        %v384 = vunpack.c.l.b16 %v251
        %v385 = vunpack.c.h.b16 %v251
        %v386 = vunpack.c.l.b16 %v252
        %v387 = vunpack.c.h.b16 %v252
        %v388 = vunpack.c.l.b16 %v253
        %v389 = vunpack.c.h.b16 %v253
        %v390 = vunpack.c.l.b16 %v254
        %v391 = vunpack.c.h.b16 %v254
        %v392 = vunpack.c.l.b16 %v255
        %v393 = vunpack.c.h.b16 %v255
        %v394 = vunpack.c.l.b16 %v256
        %v395 = vunpack.c.h.b16 %v256
        %v396 = vpack.c.b16 %v334, %v332
        %v397 = vpack.c.b16 %v335, %v333
        %v398 = vpack.c.b16 %v338, %v336
        %v399 = vpack.c.b16 %v339, %v337
        %v400 = vpack.c.b16 %v342, %v340
        %v401 = vpack.c.b16 %v343, %v341
        %v402 = vpack.c.b16 %v346, %v344
        %v403 = vpack.c.b16 %v347, %v345
        %v404 = vpack.c.b16 %v350, %v348
        %v405 = vpack.c.b16 %v351, %v349
        %v406 = vpack.c.b16 %v354, %v352
        %v407 = vpack.c.b16 %v355, %v353
        %v408 = vpack.c.b16 %v358, %v356
        %v409 = vpack.c.b16 %v359, %v357
        %v410 = vpack.c.b16 %v362, %v360
        %v411 = vpack.c.b16 %v363, %v361
        %v412 = vpack.c.b16 %v366, %v364
        %v413 = vpack.c.b16 %v367, %v365
        %v414 = vpack.c.b16 %v370, %v368
        %v415 = vpack.c.b16 %v371, %v369
        %v416 = vpack.c.b16 %v374, %v372
        %v417 = vpack.c.b16 %v375, %v373
        %v418 = vpack.c.b16 %v378, %v376
        %v419 = vpack.c.b16 %v379, %v377
        %v420 = vpack.c.b16 %v382, %v380
        %v421 = vpack.c.b16 %v383, %v381
        %v422 = vpack.c.b16 %v386, %v384
        %v423 = vpack.c.b16 %v387, %v385
        %v424 = vpack.c.b16 %v390, %v388
        %v425 = vpack.c.b16 %v391, %v389
        %v426 = vpack.c.b16 %v394, %v392
        %v427 = vpack.c.b16 %v395, %v393
        %v492 = vunpack.c.l.b16 %v261
        %v493 = vunpack.c.l.b16 %v262
        %v494 = vunpack.c.l.b16 %v263
        %v495 = vunpack.c.l.b16 %v264
        %v496 = vunpack.c.l.b16 %v265
        %v497 = vunpack.c.l.b16 %v266
        %v498 = vunpack.c.l.b16 %v267
        %v499 = vunpack.c.l.b16 %v268
        %v500 = vunpack.c.l.b16 %v269
        %v501 = vunpack.c.l.b16 %v270
        %v502 = vunpack.c.l.b16 %v271
        %v503 = vunpack.c.l.b16 %v272
        %v504 = vunpack.c.l.b16 %v273
        %v505 = vunpack.c.l.b16 %v274
        %v506 = vunpack.c.l.b16 %v275
        %v507 = vunpack.c.l.b16 %v276
        %v508 = vunpack.c.l.b16 %v277
        %v509 = vunpack.c.l.b16 %v278
        %v510 = vunpack.c.l.b16 %v279
        %v511 = vunpack.c.l.b16 %v280
        %v512 = vunpack.c.l.b16 %v281
        %v513 = vunpack.c.l.b16 %v282
        %v514 = vunpack.c.l.b16 %v283
        %v515 = vunpack.c.l.b16 %v284
        %v516 = vunpack.c.l.b16 %v285
        %v517 = vunpack.c.l.b16 %v286
        %v518 = vunpack.c.l.b16 %v287
        %v519 = vunpack.c.l.b16 %v288
        %v520 = vunpack.c.l.b16 %v289
        %v521 = vunpack.c.l.b16 %v290
        %v522 = vunpack.c.l.b16 %v291
        %v523 = vunpack.c.l.b16 %v292
        %v524 = vpack.c.b16 %v493, %v492
        %v525 = vpack.c.b16 %v495, %v494
        %v526 = vpack.c.b16 %v497, %v496
        %v527 = vpack.c.b16 %v499, %v498
        %v528 = vpack.c.b16 %v501, %v500
        %v529 = vpack.c.b16 %v503, %v502
        %v530 = vpack.c.b16 %v505, %v504
        %v531 = vpack.c.b16 %v507, %v506
        %v532 = vpack.c.b16 %v509, %v508
        %v533 = vpack.c.b16 %v511, %v510
        %v534 = vpack.c.b16 %v513, %v512
        %v535 = vpack.c.b16 %v515, %v514
        %v536 = vpack.c.b16 %v517, %v516
        %v537 = vpack.c.b16 %v519, %v518
        %v538 = vpack.c.b16 %v521, %v520
        %v539 = vpack.c.b16 %v523, %v522
        %556 = vmatprep.subr.bf16.mxu0 0
        %557 = vmatpush1.bf16.msra.mxu0 %v531
        %558 = vmatprep.subr.bf16.mxu0 0
        %559 = vmatpush1.bf16.msra.mxu0 %v530
        %560 = vmatprep.subr.bf16.mxu0 0
        %561 = vmatpush1.bf16.msra.mxu0 %v529
        %562 = vmatprep.subr.bf16.mxu0 0
        %563 = vmatpush1.bf16.msra.mxu0 %v528
        %564 = vmatprep.subr.bf16.mxu0 0
        %565 = vmatpush1.bf16.msra.mxu0 %v527
        %566 = vmatprep.subr.bf16.mxu0 0
        %567 = vmatpush1.bf16.msra.mxu0 %v526
        %568 = vmatprep.subr.bf16.mxu0 0
        %569 = vmatpush1.bf16.msra.mxu0 %v525
        %570 = vmatprep.subr.bf16.mxu0 0
        %571 = vmatpush1.bf16.msra.mxu0 %v524
        %572 = vmatprep.subr.bf16.mxu0 0
        %573 = vmatpush2.bf16.msra.mxu0 %v539
        %574 = vmatprep.subr.bf16.mxu0 0
        %575 = vmatpush2.bf16.msra.mxu0 %v538
        %576 = vmatprep.subr.bf16.mxu0 0
        %577 = vmatpush2.bf16.msra.mxu0 %v537
        %578 = vmatprep.subr.bf16.mxu0 0
        %579 = vmatpush2.bf16.msra.mxu0 %v536
        %580 = vmatprep.subr.bf16.mxu0 0
        %581 = vmatpush2.bf16.msra.mxu0 %v535
        %582 = vmatprep.subr.bf16.mxu0 0
        %583 = vmatpush2.bf16.msra.mxu0 %v534
        %584 = vmatprep.subr.bf16.mxu0 0
        %585 = vmatpush2.bf16.msra.mxu0 %v533
        %586 = vmatprep.subr.bf16.mxu0 0
        %587 = vmatpush2.bf16.msra.mxu0 %v532
        %588 = vmatprep.mubr.bf16.mxu0 %v397
        %589 = vmatmul.mubr.bf16.gmra.mxu0 %v396
        %v590 = vpop.f32.mrf.mxu0
        %v591 = vadd.f32 %v298, %v590
        %v592 = vpop.f32.mrf.mxu0
        %v593 = vpop.f32.mrf.mxu0
        %v594 = vadd.f32 %v298, %v593
        %v595 = vpop.f32.mrf.mxu0
        %596 = vmatprep.mubr.bf16.mxu0 %v399
        %597 = vmatmul.mubr.bf16.gmra.mxu0 %v398
        %v598 = vpop.f32.mrf.mxu0
        %v599 = vadd.f32 %v298, %v598
        %v600 = vpop.f32.mrf.mxu0
        %v601 = vpop.f32.mrf.mxu0
        %v602 = vadd.f32 %v298, %v601
        %v603 = vpop.f32.mrf.mxu0
        %604 = vmatprep.mubr.bf16.mxu0 %v401
        %605 = vmatmul.mubr.bf16.gmra.mxu0 %v400
        %v606 = vpop.f32.mrf.mxu0
        %v607 = vadd.f32 %v298, %v606
        %v608 = vpop.f32.mrf.mxu0
        %v609 = vpop.f32.mrf.mxu0
        %v610 = vadd.f32 %v298, %v609
        %v611 = vpop.f32.mrf.mxu0
        %612 = vmatprep.mubr.bf16.mxu0 %v403
        %613 = vmatmul.mubr.bf16.gmra.mxu0 %v402
        %v614 = vpop.f32.mrf.mxu0
        %v615 = vadd.f32 %v298, %v614
        %v616 = vpop.f32.mrf.mxu0
        %v617 = vpop.f32.mrf.mxu0
        %v618 = vadd.f32 %v298, %v617
        %v619 = vpop.f32.mrf.mxu0
        %620 = vmatprep.mubr.bf16.mxu0 %v405
        %621 = vmatmul.mubr.bf16.gmra.mxu0 %v404
        %v622 = vpop.f32.mrf.mxu0
        %v623 = vadd.f32 %v298, %v622
        %v624 = vpop.f32.mrf.mxu0
        %v625 = vpop.f32.mrf.mxu0
        %v626 = vadd.f32 %v298, %v625
        %v627 = vpop.f32.mrf.mxu0
        %628 = vmatprep.mubr.bf16.mxu0 %v407
        %629 = vmatmul.mubr.bf16.gmra.mxu0 %v406
        %v630 = vpop.f32.mrf.mxu0
        %v631 = vadd.f32 %v298, %v630
        %v632 = vpop.f32.mrf.mxu0
        %v633 = vpop.f32.mrf.mxu0
        %v634 = vadd.f32 %v298, %v633
        %v635 = vpop.f32.mrf.mxu0
        %636 = vmatprep.mubr.bf16.mxu0 %v409
        %637 = vmatmul.mubr.bf16.gmra.mxu0 %v408
        %v638 = vpop.f32.mrf.mxu0
        %v639 = vadd.f32 %v298, %v638
        %v640 = vpop.f32.mrf.mxu0
        %v641 = vpop.f32.mrf.mxu0
        %v642 = vadd.f32 %v298, %v641
        %v643 = vpop.f32.mrf.mxu0
        %644 = vmatprep.mubr.bf16.mxu0 %v411
        %645 = vmatmul.mubr.bf16.gmra.mxu0 %v410
        %v646 = vpop.f32.mrf.mxu0
        %v647 = vadd.f32 %v298, %v646
        %v648 = vpop.f32.mrf.mxu0
        %v649 = vpop.f32.mrf.mxu0
        %v650 = vadd.f32 %v298, %v649
        %v651 = vpop.f32.mrf.mxu0
        %652 = vmatprep.mubr.bf16.mxu0 %v413
        %653 = vmatmul.mubr.bf16.gmra.mxu0 %v412
        %v654 = vpop.f32.mrf.mxu0
        %v655 = vadd.f32 %v298, %v654
        %v656 = vpop.f32.mrf.mxu0
        %v657 = vpop.f32.mrf.mxu0
        %v658 = vadd.f32 %v298, %v657
        %v659 = vpop.f32.mrf.mxu0
        %660 = vmatprep.mubr.bf16.mxu0 %v415
        %661 = vmatmul.mubr.bf16.gmra.mxu0 %v414
        %v662 = vpop.f32.mrf.mxu0
        %v663 = vadd.f32 %v298, %v662
        %v664 = vpop.f32.mrf.mxu0
        %v665 = vpop.f32.mrf.mxu0
        %v666 = vadd.f32 %v298, %v665
        %v667 = vpop.f32.mrf.mxu0
        %668 = vmatprep.mubr.bf16.mxu0 %v417
        %669 = vmatmul.mubr.bf16.gmra.mxu0 %v416
        %v670 = vpop.f32.mrf.mxu0
        %v671 = vadd.f32 %v298, %v670
        %v672 = vpop.f32.mrf.mxu0
        %v673 = vpop.f32.mrf.mxu0
        %v674 = vadd.f32 %v298, %v673
        %v675 = vpop.f32.mrf.mxu0
        %676 = vmatprep.mubr.bf16.mxu0 %v419
        %677 = vmatmul.mubr.bf16.gmra.mxu0 %v418
        %v678 = vpop.f32.mrf.mxu0
        %v679 = vadd.f32 %v298, %v678
        %v680 = vpop.f32.mrf.mxu0
        %v681 = vpop.f32.mrf.mxu0
        %v682 = vadd.f32 %v298, %v681
        %v683 = vpop.f32.mrf.mxu0
        %684 = vmatprep.mubr.bf16.mxu0 %v421
        %685 = vmatmul.mubr.bf16.gmra.mxu0 %v420
        %v686 = vpop.f32.mrf.mxu0
        %v687 = vadd.f32 %v298, %v686
        %v688 = vpop.f32.mrf.mxu0
        %v689 = vpop.f32.mrf.mxu0
        %v690 = vadd.f32 %v298, %v689
        %v691 = vpop.f32.mrf.mxu0
        %692 = vmatprep.mubr.bf16.mxu0 %v423
        %693 = vmatmul.mubr.bf16.gmra.mxu0 %v422
        %v694 = vpop.f32.mrf.mxu0
        %v695 = vadd.f32 %v298, %v694
        %v696 = vpop.f32.mrf.mxu0
        %v697 = vpop.f32.mrf.mxu0
        %v698 = vadd.f32 %v298, %v697
        %v699 = vpop.f32.mrf.mxu0
        %700 = vmatprep.mubr.bf16.mxu0 %v425
        %701 = vmatmul.mubr.bf16.gmra.mxu0 %v424
        %v702 = vpop.f32.mrf.mxu0
        %v703 = vadd.f32 %v298, %v702
        %v704 = vpop.f32.mrf.mxu0
        %v705 = vpop.f32.mrf.mxu0
        %v706 = vadd.f32 %v298, %v705
        %v707 = vpop.f32.mrf.mxu0
        %708 = vmatprep.mubr.bf16.mxu0 %v427
        %709 = vmatmul.mubr.bf16.gmra.mxu0 %v426
        %v710 = vpop.f32.mrf.mxu0
        %v711 = vadd.f32 %v298, %v710
        %v712 = vpop.f32.mrf.mxu0
        %v713 = vpop.f32.mrf.mxu0
        %v714 = vadd.f32 %v298, %v713
        %v715 = vpop.f32.mrf.mxu0
        %716 = vdwg.mxu0
        %v717 = vmax.f32 %v591, 0.0
        %v718 = vmax.f32 %v594, 0.0
        %v719 = vmax.f32 %v599, 0.0
        %v720 = vmax.f32 %v602, 0.0
        %v721 = vmax.f32 %v607, 0.0
        %v722 = vmax.f32 %v610, 0.0
        %v723 = vmax.f32 %v615, 0.0
        %v724 = vmax.f32 %v618, 0.0
        %v725 = vmax.f32 %v623, 0.0
        %v726 = vmax.f32 %v626, 0.0
        %v727 = vmax.f32 %v631, 0.0
        %v728 = vmax.f32 %v634, 0.0
        %v729 = vmax.f32 %v639, 0.0
        %v730 = vmax.f32 %v642, 0.0
        %v731 = vmax.f32 %v647, 0.0
        %v732 = vmax.f32 %v650, 0.0
        %v733 = vmax.f32 %v655, 0.0
        %v734 = vmax.f32 %v658, 0.0
        %v735 = vmax.f32 %v663, 0.0
        %v736 = vmax.f32 %v666, 0.0
        %v737 = vmax.f32 %v671, 0.0
        %v738 = vmax.f32 %v674, 0.0
        %v739 = vmax.f32 %v679, 0.0
        %v740 = vmax.f32 %v682, 0.0
        %v741 = vmax.f32 %v687, 0.0
        %v742 = vmax.f32 %v690, 0.0
        %v743 = vmax.f32 %v695, 0.0
        %v744 = vmax.f32 %v698, 0.0
        %v745 = vmax.f32 %v703, 0.0
        %v746 = vmax.f32 %v706, 0.0
        %v747 = vmax.f32 %v711, 0.0
        %v748 = vmax.f32 %v714, 0.0
        %v749 = vpack.c.bf16 %v718, %v717
        %v750 = vpack.c.bf16 %v720, %v719
        %v751 = vpack.c.bf16 %v722, %v721
        %v752 = vpack.c.bf16 %v724, %v723
        %v753 = vpack.c.bf16 %v726, %v725
        %v754 = vpack.c.bf16 %v728, %v727
        %v755 = vpack.c.bf16 %v730, %v729
        %v756 = vpack.c.bf16 %v732, %v731
        %v757 = vpack.c.bf16 %v734, %v733
        %v758 = vpack.c.bf16 %v736, %v735
        %v759 = vpack.c.bf16 %v738, %v737
        %v760 = vpack.c.bf16 %v740, %v739
        %v761 = vpack.c.bf16 %v742, %v741
        %v762 = vpack.c.bf16 %v744, %v743
        %v763 = vpack.c.bf16 %v746, %v745
        %v764 = vpack.c.bf16 %v748, %v747
        %v765 = vld [vmem:[%s2] sm:$0xf]
        %v766 = vld [vmem:[%s2 + $0x4] sm:$0xf]
        %v767 = vld [vmem:[%s2 + $0x8] sm:$0xf]
        %v768 = vld [vmem:[%s2 + $0xc] sm:$0xf]
        %v769 = vld [vmem:[%s2 + $0x10] sm:$0xf]
        %v770 = vld [vmem:[%s2 + $0x14] sm:$0xf]
        %v771 = vld [vmem:[%s2 + $0x18] sm:$0xf]
        %v772 = vld [vmem:[%s2 + $0x1c] sm:$0xf]
        %v773 = vld [vmem:[%s2 + $0x20] sm:$0xf]
        %v774 = vld [vmem:[%s2 + $0x24] sm:$0xf]
        %v775 = vld [vmem:[%s2 + $0x28] sm:$0xf]
        %v776 = vld [vmem:[%s2 + $0x2c] sm:$0xf]
        %v777 = vld [vmem:[%s2 + $0x30] sm:$0xf]
        %v778 = vld [vmem:[%s2 + $0x34] sm:$0xf]
        %v779 = vld [vmem:[%s2 + $0x38] sm:$0xf]
        %v780 = vld [vmem:[%s2 + $0x3c] sm:$0xf]
        %v797 = vunpack.c.l.b16 %v765
        %v798 = vunpack.c.l.b16 %v766
        %v799 = vunpack.c.l.b16 %v767
        %v800 = vunpack.c.l.b16 %v768
        %v801 = vunpack.c.l.b16 %v769
        %v802 = vunpack.c.l.b16 %v770
        %v803 = vunpack.c.l.b16 %v771
        %v804 = vunpack.c.l.b16 %v772
        %v805 = vunpack.c.l.b16 %v773
        %v806 = vunpack.c.l.b16 %v774
        %v807 = vunpack.c.l.b16 %v775
        %v808 = vunpack.c.l.b16 %v776
        %v809 = vunpack.c.l.b16 %v777
        %v810 = vunpack.c.l.b16 %v778
        %v811 = vunpack.c.l.b16 %v779
        %v812 = vunpack.c.l.b16 %v780
        %v813 = vpack.c.b16 %v798, %v797
        %v814 = vpack.c.b16 %v800, %v799
        %v815 = vpack.c.b16 %v802, %v801
        %v816 = vpack.c.b16 %v804, %v803
        %v817 = vpack.c.b16 %v806, %v805
        %v818 = vpack.c.b16 %v808, %v807
        %v819 = vpack.c.b16 %v810, %v809
        %v820 = vpack.c.b16 %v812, %v811
        %829 = vmatprep.subr.bf16.mxu0 0
        %830 = vmatpush1.bf16.msra.mxu0 %v820
        %831 = vmatprep.subr.bf16.mxu0 0
        %832 = vmatpush1.bf16.msra.mxu0 %v819
        %833 = vmatprep.subr.bf16.mxu0 0
        %834 = vmatpush1.bf16.msra.mxu0 %v818
        %835 = vmatprep.subr.bf16.mxu0 0
        %836 = vmatpush1.bf16.msra.mxu0 %v817
        %837 = vmatprep.subr.bf16.mxu0 0
        %838 = vmatpush1.bf16.msra.mxu0 %v816
        %839 = vmatprep.subr.bf16.mxu0 0
        %840 = vmatpush1.bf16.msra.mxu0 %v815
        %841 = vmatprep.subr.bf16.mxu0 0
        %842 = vmatpush1.bf16.msra.mxu0 %v814
        %843 = vmatprep.subr.bf16.mxu0 0
        %844 = vmatpush1.bf16.msra.mxu0 %v813
        %845 = vmatprep.subr.bf16.mxu0 0
        %846 = vmatpush2.bf16.msra.mxu0 0
        %847 = vmatprep.subr.bf16.mxu0 0
        %848 = vmatpush2.bf16.msra.mxu0 0
        %849 = vmatprep.subr.bf16.mxu0 0
        %850 = vmatpush2.bf16.msra.mxu0 0
        %851 = vmatprep.subr.bf16.mxu0 0
        %852 = vmatpush2.bf16.msra.mxu0 0
        %853 = vmatprep.subr.bf16.mxu0 0
        %854 = vmatpush2.bf16.msra.mxu0 0
        %855 = vmatprep.subr.bf16.mxu0 0
        %856 = vmatpush2.bf16.msra.mxu0 0
        %857 = vmatprep.subr.bf16.mxu0 0
        %858 = vmatpush2.bf16.msra.mxu0 0
        %859 = vmatprep.subr.bf16.mxu0 0
        %860 = vmatpush2.bf16.msra.mxu0 0
        %861 = vmatprep.mubr.bf16.mxu0 0
        %862 = vmatmul.mubr.bf16.gmra.mxu0 %v749
        %v863 = vpop.f32.mrf.mxu0
        %v864 = vadd.f32 0.0, %v863
        %v865 = vpop.f32.mrf.mxu0
        %v866 = vpop.f32.mrf.mxu0
        %v867 = vadd.f32 0.0, %v866
        %v868 = vpop.f32.mrf.mxu0
        %869 = vmatprep.mubr.bf16.mxu0 0
        %870 = vmatmul.mubr.bf16.gmra.mxu0 %v750
        %v871 = vpop.f32.mrf.mxu0
        %v872 = vadd.f32 0.0, %v871
        %v873 = vpop.f32.mrf.mxu0
        %v874 = vpop.f32.mrf.mxu0
        %v875 = vadd.f32 0.0, %v874
        %v876 = vpop.f32.mrf.mxu0
        %877 = vmatprep.mubr.bf16.mxu0 0
        %878 = vmatmul.mubr.bf16.gmra.mxu0 %v751
        %v879 = vpop.f32.mrf.mxu0
        %v880 = vadd.f32 0.0, %v879
        %v881 = vpop.f32.mrf.mxu0
        %v882 = vpop.f32.mrf.mxu0
        %v883 = vadd.f32 0.0, %v882
        %v884 = vpop.f32.mrf.mxu0
        %885 = vmatprep.mubr.bf16.mxu0 0
        %886 = vmatmul.mubr.bf16.gmra.mxu0 %v752
        %v887 = vpop.f32.mrf.mxu0
        %v888 = vadd.f32 0.0, %v887
        %v889 = vpop.f32.mrf.mxu0
        %v890 = vpop.f32.mrf.mxu0
        %v891 = vadd.f32 0.0, %v890
        %v892 = vpop.f32.mrf.mxu0
        %893 = vmatprep.mubr.bf16.mxu0 0
        %894 = vmatmul.mubr.bf16.gmra.mxu0 %v753
        %v895 = vpop.f32.mrf.mxu0
        %v896 = vadd.f32 0.0, %v895
        %v897 = vpop.f32.mrf.mxu0
        %v898 = vpop.f32.mrf.mxu0
        %v899 = vadd.f32 0.0, %v898
        %v900 = vpop.f32.mrf.mxu0
        %901 = vmatprep.mubr.bf16.mxu0 0
        %902 = vmatmul.mubr.bf16.gmra.mxu0 %v754
        %v903 = vpop.f32.mrf.mxu0
        %v904 = vadd.f32 0.0, %v903
        %v905 = vpop.f32.mrf.mxu0
        %v906 = vpop.f32.mrf.mxu0
        %v907 = vadd.f32 0.0, %v906
        %v908 = vpop.f32.mrf.mxu0
        %909 = vmatprep.mubr.bf16.mxu0 0
        %910 = vmatmul.mubr.bf16.gmra.mxu0 %v755
        %v911 = vpop.f32.mrf.mxu0
        %v912 = vadd.f32 0.0, %v911
        %v913 = vpop.f32.mrf.mxu0
        %v914 = vpop.f32.mrf.mxu0
        %v915 = vadd.f32 0.0, %v914
        %v916 = vpop.f32.mrf.mxu0
        %917 = vmatprep.mubr.bf16.mxu0 0
        %918 = vmatmul.mubr.bf16.gmra.mxu0 %v756
        %v919 = vpop.f32.mrf.mxu0
        %v920 = vadd.f32 0.0, %v919
        %v921 = vpop.f32.mrf.mxu0
        %v922 = vpop.f32.mrf.mxu0
        %v923 = vadd.f32 0.0, %v922
        %v924 = vpop.f32.mrf.mxu0
        %925 = vmatprep.mubr.bf16.mxu0 0
        %926 = vmatmul.mubr.bf16.gmra.mxu0 %v757
        %v927 = vpop.f32.mrf.mxu0
        %v928 = vadd.f32 0.0, %v927
        %v929 = vpop.f32.mrf.mxu0
        %v930 = vpop.f32.mrf.mxu0
        %v931 = vadd.f32 0.0, %v930
        %v932 = vpop.f32.mrf.mxu0
        %933 = vmatprep.mubr.bf16.mxu0 0
        %934 = vmatmul.mubr.bf16.gmra.mxu0 %v758
        %v935 = vpop.f32.mrf.mxu0
        %v936 = vadd.f32 0.0, %v935
        %v937 = vpop.f32.mrf.mxu0
        %v938 = vpop.f32.mrf.mxu0
        %v939 = vadd.f32 0.0, %v938
        %v940 = vpop.f32.mrf.mxu0
        %941 = vmatprep.mubr.bf16.mxu0 0
        %942 = vmatmul.mubr.bf16.gmra.mxu0 %v759
        %v943 = vpop.f32.mrf.mxu0
        %v944 = vadd.f32 0.0, %v943
        %v945 = vpop.f32.mrf.mxu0
        %v946 = vpop.f32.mrf.mxu0
        %v947 = vadd.f32 0.0, %v946
        %v948 = vpop.f32.mrf.mxu0
        %949 = vmatprep.mubr.bf16.mxu0 0
        %950 = vmatmul.mubr.bf16.gmra.mxu0 %v760
        %v951 = vpop.f32.mrf.mxu0
        %v952 = vadd.f32 0.0, %v951
        %v953 = vpop.f32.mrf.mxu0
        %v954 = vpop.f32.mrf.mxu0
        %v955 = vadd.f32 0.0, %v954
        %v956 = vpop.f32.mrf.mxu0
        %957 = vmatprep.mubr.bf16.mxu0 0
        %958 = vmatmul.mubr.bf16.gmra.mxu0 %v761
        %v959 = vpop.f32.mrf.mxu0
        %v960 = vadd.f32 0.0, %v959
        %v961 = vpop.f32.mrf.mxu0
        %v962 = vpop.f32.mrf.mxu0
        %v963 = vadd.f32 0.0, %v962
        %v964 = vpop.f32.mrf.mxu0
        %965 = vmatprep.mubr.bf16.mxu0 0
        %966 = vmatmul.mubr.bf16.gmra.mxu0 %v762
        %v967 = vpop.f32.mrf.mxu0
        %v968 = vadd.f32 0.0, %v967
        %v969 = vpop.f32.mrf.mxu0
        %v970 = vpop.f32.mrf.mxu0
        %v971 = vadd.f32 0.0, %v970
        %v972 = vpop.f32.mrf.mxu0
        %973 = vmatprep.mubr.bf16.mxu0 0
        %974 = vmatmul.mubr.bf16.gmra.mxu0 %v763
        %v975 = vpop.f32.mrf.mxu0
        %v976 = vadd.f32 0.0, %v975
        %v977 = vpop.f32.mrf.mxu0
        %v978 = vpop.f32.mrf.mxu0
        %v979 = vadd.f32 0.0, %v978
        %v980 = vpop.f32.mrf.mxu0
        %981 = vmatprep.mubr.bf16.mxu0 0
        %982 = vmatmul.mubr.bf16.gmra.mxu0 %v764
        %v983 = vpop.f32.mrf.mxu0
        %v984 = vadd.f32 0.0, %v983
        %v985 = vpop.f32.mrf.mxu0
        %v986 = vpop.f32.mrf.mxu0
        %v987 = vadd.f32 0.0, %v986
        %v988 = vpop.f32.mrf.mxu0
        %989 = vdwg.mxu0
        %v990 = vpack.c.bf16 %v867, %v864
        %v991 = vpack.c.bf16 %v875, %v872
        %v992 = vpack.c.bf16 %v883, %v880
        %v993 = vpack.c.bf16 %v891, %v888
        %v994 = vpack.c.bf16 %v899, %v896
        %v995 = vpack.c.bf16 %v907, %v904
        %v996 = vpack.c.bf16 %v915, %v912
        %v997 = vpack.c.bf16 %v923, %v920
        %v998 = vpack.c.bf16 %v931, %v928
        %v999 = vpack.c.bf16 %v939, %v936
        %v1000 = vpack.c.bf16 %v947, %v944
        %v1001 = vpack.c.bf16 %v955, %v952
        %v1002 = vpack.c.bf16 %v963, %v960
        %v1003 = vpack.c.bf16 %v971, %v968
        %v1004 = vpack.c.bf16 %v979, %v976
        %v1005 = vpack.c.bf16 %v987, %v984
        %v1022 = vunpack.c.l.b16 %v990
        %v1023 = vunpack.c.h.b16 %v990
        %v1024 = vunpack.c.l.b16 %v991
        %v1025 = vunpack.c.h.b16 %v991
        %v1026 = vunpack.c.l.b16 %v992
        %v1027 = vunpack.c.h.b16 %v992
        %v1028 = vunpack.c.l.b16 %v993
        %v1029 = vunpack.c.h.b16 %v993
        %v1030 = vunpack.c.l.b16 %v994
        %v1031 = vunpack.c.h.b16 %v994
        %v1032 = vunpack.c.l.b16 %v995
        %v1033 = vunpack.c.h.b16 %v995
        %v1034 = vunpack.c.l.b16 %v996
        %v1035 = vunpack.c.h.b16 %v996
        %v1036 = vunpack.c.l.b16 %v997
        %v1037 = vunpack.c.h.b16 %v997
        %v1038 = vunpack.c.l.b16 %v998
        %v1039 = vunpack.c.h.b16 %v998
        %v1040 = vunpack.c.l.b16 %v999
        %v1041 = vunpack.c.h.b16 %v999
        %v1042 = vunpack.c.l.b16 %v1000
        %v1043 = vunpack.c.h.b16 %v1000
        %v1044 = vunpack.c.l.b16 %v1001
        %v1045 = vunpack.c.h.b16 %v1001
        %v1046 = vunpack.c.l.b16 %v1002
        %v1047 = vunpack.c.h.b16 %v1002
        %v1048 = vunpack.c.l.b16 %v1003
        %v1049 = vunpack.c.h.b16 %v1003
        %v1050 = vunpack.c.l.b16 %v1004
        %v1051 = vunpack.c.h.b16 %v1004
        %v1052 = vunpack.c.l.b16 %v1005
        %v1053 = vunpack.c.h.b16 %v1005
        %v1054 = vpack.c.b16 %v1022, %v1022
        %v1055 = vpack.c.b16 %v1023, %v1023
        %v1056 = vpack.c.b16 %v1024, %v1024
        %v1057 = vpack.c.b16 %v1025, %v1025
        %v1058 = vpack.c.b16 %v1026, %v1026
        %v1059 = vpack.c.b16 %v1027, %v1027
        %v1060 = vpack.c.b16 %v1028, %v1028
        %v1061 = vpack.c.b16 %v1029, %v1029
        %v1062 = vpack.c.b16 %v1030, %v1030
        %v1063 = vpack.c.b16 %v1031, %v1031
        %v1064 = vpack.c.b16 %v1032, %v1032
        %v1065 = vpack.c.b16 %v1033, %v1033
        %v1066 = vpack.c.b16 %v1034, %v1034
        %v1067 = vpack.c.b16 %v1035, %v1035
        %v1068 = vpack.c.b16 %v1036, %v1036
        %v1069 = vpack.c.b16 %v1037, %v1037
        %v1070 = vpack.c.b16 %v1038, %v1038
        %v1071 = vpack.c.b16 %v1039, %v1039
        %v1072 = vpack.c.b16 %v1040, %v1040
        %v1073 = vpack.c.b16 %v1041, %v1041
        %v1074 = vpack.c.b16 %v1042, %v1042
        %v1075 = vpack.c.b16 %v1043, %v1043
        %v1076 = vpack.c.b16 %v1044, %v1044
        %v1077 = vpack.c.b16 %v1045, %v1045
        %v1078 = vpack.c.b16 %v1046, %v1046
        %v1079 = vpack.c.b16 %v1047, %v1047
        %v1080 = vpack.c.b16 %v1048, %v1048
        %v1081 = vpack.c.b16 %v1049, %v1049
        %v1082 = vpack.c.b16 %v1050, %v1050
        %v1083 = vpack.c.b16 %v1051, %v1051
        %v1084 = vpack.c.b16 %v1052, %v1052
        %v1085 = vpack.c.b16 %v1053, %v1053
        %s1118 = smul.addr %s220, 4
        %s1119 = scalar_lea.vmem [#allocation2], %s1118
        %1120 = vst [vmem:[%s1119] sm:$0xf] %v1054
        %1121 = vst [vmem:[%s1119 + $0x4] sm:$0xf] %v1055
        %1122 = vst [vmem:[%s1119 + $0x8] sm:$0xf] %v1056
        %1123 = vst [vmem:[%s1119 + $0xc] sm:$0xf] %v1057
        %1124 = vst [vmem:[%s1119 + $0x10] sm:$0xf] %v1058
        %1125 = vst [vmem:[%s1119 + $0x14] sm:$0xf] %v1059
        %1126 = vst [vmem:[%s1119 + $0x18] sm:$0xf] %v1060
        %1127 = vst [vmem:[%s1119 + $0x1c] sm:$0xf] %v1061
        %1128 = vst [vmem:[%s1119 + $0x20] sm:$0xf] %v1062
        %1129 = vst [vmem:[%s1119 + $0x24] sm:$0xf] %v1063
        %1130 = vst [vmem:[%s1119 + $0x28] sm:$0xf] %v1064
        %1131 = vst [vmem:[%s1119 + $0x2c] sm:$0xf] %v1065
        %1132 = vst [vmem:[%s1119 + $0x30] sm:$0xf] %v1066
        %1133 = vst [vmem:[%s1119 + $0x34] sm:$0xf] %v1067
        %1134 = vst [vmem:[%s1119 + $0x38] sm:$0xf] %v1068
        %1135 = vst [vmem:[%s1119 + $0x3c] sm:$0xf] %v1069
        %1136 = vst [vmem:[%s1119 + $0x40] sm:$0xf] %v1070
        %1137 = vst [vmem:[%s1119 + $0x44] sm:$0xf] %v1071
        %1138 = vst [vmem:[%s1119 + $0x48] sm:$0xf] %v1072
        %1139 = vst [vmem:[%s1119 + $0x4c] sm:$0xf] %v1073
        %1140 = vst [vmem:[%s1119 + $0x50] sm:$0xf] %v1074
        %1141 = vst [vmem:[%s1119 + $0x54] sm:$0xf] %v1075
        %1142 = vst [vmem:[%s1119 + $0x58] sm:$0xf] %v1076
        %1143 = vst [vmem:[%s1119 + $0x5c] sm:$0xf] %v1077
        %1144 = vst [vmem:[%s1119 + $0x60] sm:$0xf] %v1078
        %1145 = vst [vmem:[%s1119 + $0x64] sm:$0xf] %v1079
        %1146 = vst [vmem:[%s1119 + $0x68] sm:$0xf] %v1080
        %1147 = vst [vmem:[%s1119 + $0x6c] sm:$0xf] %v1081
        %1148 = vst [vmem:[%s1119 + $0x70] sm:$0xf] %v1082
        %1149 = vst [vmem:[%s1119 + $0x74] sm:$0xf] %v1083
        %1150 = vst [vmem:[%s1119 + $0x78] sm:$0xf] %v1084
        %1151 = vst [vmem:[%s1119 + $0x7c] sm:$0xf] %v1085
        %1152 = vst [vmem:[%s216] sm:$0xff] 0.0
        %1153 = vst [vmem:[%s216 + $0x8] sm:$0xff] 0.0
        %1154 = vst [vmem:[%s216 + $0x10] sm:$0xff] 0.0
        %1155 = vst [vmem:[%s216 + $0x18] sm:$0xff] 0.0
        %1156 = vst [vmem:[%s216 + $0x20] sm:$0xff] 0.0
        %1157 = vst [vmem:[%s216 + $0x28] sm:$0xff] 0.0
        %1158 = vst [vmem:[%s216 + $0x30] sm:$0xff] 0.0
        %1159 = vst [vmem:[%s216 + $0x38] sm:$0xff] 0.0
        %1160 = vst [vmem:[%s216 + $0x40] sm:$0xff] 0.0
        %1161 = vst [vmem:[%s216 + $0x48] sm:$0xff] 0.0
        %1162 = vst [vmem:[%s216 + $0x50] sm:$0xff] 0.0
        %1163 = vst [vmem:[%s216 + $0x58] sm:$0xff] 0.0
        %1164 = vst [vmem:[%s216 + $0x60] sm:$0xff] 0.0
        %1165 = vst [vmem:[%s216 + $0x68] sm:$0xff] 0.0
        %1166 = vst [vmem:[%s216 + $0x70] sm:$0xff] 0.0
        %1167 = vst [vmem:[%s216 + $0x78] sm:$0xff] 0.0
        %1168 = vst [vmem:[%s216 + $0x80] sm:$0xff] 0.0
        %1169 = vst [vmem:[%s216 + $0x88] sm:$0xff] 0.0
        %1170 = vst [vmem:[%s216 + $0x90] sm:$0xff] 0.0
        %1171 = vst [vmem:[%s216 + $0x98] sm:$0xff] 0.0
        %1172 = vst [vmem:[%s216 + $0xa0] sm:$0xff] 0.0
        %1173 = vst [vmem:[%s216 + $0xa8] sm:$0xff] 0.0
        %1174 = vst [vmem:[%s216 + $0xb0] sm:$0xff] 0.0
        %1175 = vst [vmem:[%s216 + $0xb8] sm:$0xff] 0.0
        %1176 = vst [vmem:[%s216 + $0xc0] sm:$0xff] 0.0
        %1177 = vst [vmem:[%s216 + $0xc8] sm:$0xff] 0.0
        %1178 = vst [vmem:[%s216 + $0xd0] sm:$0xff] 0.0
        %1179 = vst [vmem:[%s216 + $0xd8] sm:$0xff] 0.0
        %1180 = vst [vmem:[%s216 + $0xe0] sm:$0xff] 0.0
        %1181 = vst [vmem:[%s216 + $0xe8] sm:$0xff] 0.0
        %1182 = vst [vmem:[%s216 + $0xf0] sm:$0xff] 0.0
        %1183 = vst [vmem:[%s216 + $0xf8] sm:$0xff] 0.0
      $region44: #{gcn_forward_padded.3} parent=39 // pred_fallthru
        _
      %p1184 = scmp.eq.s32.totalorder %s20, 1
      // Predicated region
      $region45: #{gcn_forward_padded.3} parent=39 // pred_check
        %p1185 = pneg %p1184
      $region46: #{gcn_forward_padded.3} parent=39 // pred_check_branch
        %1187 = sbr.rel (%p1185) target = $region48
      $region47: #{gcn_forward_padded.3} parent=39 // pred_region
        %v1188 = vld [vmem:[#allocation2] sm:$0xf]
        %v1189 = vld [vmem:[#allocation2 + $0x4] sm:$0xf]
        %v1190 = vld [vmem:[#allocation2 + $0x8] sm:$0xf]
        %v1191 = vld [vmem:[#allocation2 + $0xc] sm:$0xf]
        %v1192 = vld [vmem:[#allocation2 + $0x10] sm:$0xf]
        %v1193 = vld [vmem:[#allocation2 + $0x14] sm:$0xf]
        %v1194 = vld [vmem:[#allocation2 + $0x18] sm:$0xf]
        %v1195 = vld [vmem:[#allocation2 + $0x1c] sm:$0xf]
        %v1196 = vld [vmem:[#allocation2 + $0x20] sm:$0xf]
        %v1197 = vld [vmem:[#allocation2 + $0x24] sm:$0xf]
        %v1198 = vld [vmem:[#allocation2 + $0x28] sm:$0xf]
        %v1199 = vld [vmem:[#allocation2 + $0x2c] sm:$0xf]
        %v1200 = vld [vmem:[#allocation2 + $0x30] sm:$0xf]
        %v1201 = vld [vmem:[#allocation2 + $0x34] sm:$0xf]
        %v1202 = vld [vmem:[#allocation2 + $0x38] sm:$0xf]
        %v1203 = vld [vmem:[#allocation2 + $0x3c] sm:$0xf]
        %v1204 = vld [vmem:[#allocation2 + $0x40] sm:$0xf]
        %v1205 = vld [vmem:[#allocation2 + $0x44] sm:$0xf]
        %v1206 = vld [vmem:[#allocation2 + $0x48] sm:$0xf]
        %v1207 = vld [vmem:[#allocation2 + $0x4c] sm:$0xf]
        %v1208 = vld [vmem:[#allocation2 + $0x50] sm:$0xf]
        %v1209 = vld [vmem:[#allocation2 + $0x54] sm:$0xf]
        %v1210 = vld [vmem:[#allocation2 + $0x58] sm:$0xf]
        %v1211 = vld [vmem:[#allocation2 + $0x5c] sm:$0xf]
        %v1212 = vld [vmem:[#allocation2 + $0x60] sm:$0xf]
        %v1213 = vld [vmem:[#allocation2 + $0x64] sm:$0xf]
        %v1214 = vld [vmem:[#allocation2 + $0x68] sm:$0xf]
        %v1215 = vld [vmem:[#allocation2 + $0x6c] sm:$0xf]
        %v1216 = vld [vmem:[#allocation2 + $0x70] sm:$0xf]
        %v1217 = vld [vmem:[#allocation2 + $0x74] sm:$0xf]
        %v1218 = vld [vmem:[#allocation2 + $0x78] sm:$0xf]
        %v1219 = vld [vmem:[#allocation2 + $0x7c] sm:$0xf]
        %v1220 = vld [vmem:[%s4] sm:$0x1]
        %v1222 = vlaneseq
        %v1223 = vshrl.u32 %v1222, 7
        %v1224 = vsub.s32 0, %v1223
        %v1225 = vrot.slane %v1220, %v1224
        %v1259 = vunpack.c.l.b16 %v225
        %v1260 = vunpack.c.h.b16 %v225
        %v1261 = vunpack.c.l.b16 %v226
        %v1262 = vunpack.c.h.b16 %v226
        %v1263 = vunpack.c.l.b16 %v227
        %v1264 = vunpack.c.h.b16 %v227
        %v1265 = vunpack.c.l.b16 %v228
        %v1266 = vunpack.c.h.b16 %v228
        %v1267 = vunpack.c.l.b16 %v229
        %v1268 = vunpack.c.h.b16 %v229
        %v1269 = vunpack.c.l.b16 %v230
        %v1270 = vunpack.c.h.b16 %v230
        %v1271 = vunpack.c.l.b16 %v231
        %v1272 = vunpack.c.h.b16 %v231
        %v1273 = vunpack.c.l.b16 %v232
        %v1274 = vunpack.c.h.b16 %v232
        %v1275 = vunpack.c.l.b16 %v233
        %v1276 = vunpack.c.h.b16 %v233
        %v1277 = vunpack.c.l.b16 %v234
        %v1278 = vunpack.c.h.b16 %v234
        %v1279 = vunpack.c.l.b16 %v235
        %v1280 = vunpack.c.h.b16 %v235
        %v1281 = vunpack.c.l.b16 %v236
        %v1282 = vunpack.c.h.b16 %v236
        %v1283 = vunpack.c.l.b16 %v237
        %v1284 = vunpack.c.h.b16 %v237
        %v1285 = vunpack.c.l.b16 %v238
        %v1286 = vunpack.c.h.b16 %v238
        %v1287 = vunpack.c.l.b16 %v239
        %v1288 = vunpack.c.h.b16 %v239
        %v1289 = vunpack.c.l.b16 %v240
        %v1290 = vunpack.c.h.b16 %v240
        %v1291 = vunpack.c.l.b16 %v241
        %v1292 = vunpack.c.h.b16 %v241
        %v1293 = vunpack.c.l.b16 %v242
        %v1294 = vunpack.c.h.b16 %v242
        %v1295 = vunpack.c.l.b16 %v243
        %v1296 = vunpack.c.h.b16 %v243
        %v1297 = vunpack.c.l.b16 %v244
        %v1298 = vunpack.c.h.b16 %v244
        %v1299 = vunpack.c.l.b16 %v245
        %v1300 = vunpack.c.h.b16 %v245
        %v1301 = vunpack.c.l.b16 %v246
        %v1302 = vunpack.c.h.b16 %v246
        %v1303 = vunpack.c.l.b16 %v247
        %v1304 = vunpack.c.h.b16 %v247
        %v1305 = vunpack.c.l.b16 %v248
        %v1306 = vunpack.c.h.b16 %v248
        %v1307 = vunpack.c.l.b16 %v249
        %v1308 = vunpack.c.h.b16 %v249
        %v1309 = vunpack.c.l.b16 %v250
        %v1310 = vunpack.c.h.b16 %v250
        %v1311 = vunpack.c.l.b16 %v251
        %v1312 = vunpack.c.h.b16 %v251
        %v1313 = vunpack.c.l.b16 %v252
        %v1314 = vunpack.c.h.b16 %v252
        %v1315 = vunpack.c.l.b16 %v253
        %v1316 = vunpack.c.h.b16 %v253
        %v1317 = vunpack.c.l.b16 %v254
        %v1318 = vunpack.c.h.b16 %v254
        %v1319 = vunpack.c.l.b16 %v255
        %v1320 = vunpack.c.h.b16 %v255
        %v1321 = vunpack.c.l.b16 %v256
        %v1322 = vunpack.c.h.b16 %v256
        %v1323 = vpack.c.b16 %v1261, %v1259
        %v1324 = vpack.c.b16 %v1262, %v1260
        %v1325 = vpack.c.b16 %v1265, %v1263
        %v1326 = vpack.c.b16 %v1266, %v1264
        %v1327 = vpack.c.b16 %v1269, %v1267
        %v1328 = vpack.c.b16 %v1270, %v1268
        %v1329 = vpack.c.b16 %v1273, %v1271
        %v1330 = vpack.c.b16 %v1274, %v1272
        %v1331 = vpack.c.b16 %v1277, %v1275
        %v1332 = vpack.c.b16 %v1278, %v1276
        %v1333 = vpack.c.b16 %v1281, %v1279
        %v1334 = vpack.c.b16 %v1282, %v1280
        %v1335 = vpack.c.b16 %v1285, %v1283
        %v1336 = vpack.c.b16 %v1286, %v1284
        %v1337 = vpack.c.b16 %v1289, %v1287
        %v1338 = vpack.c.b16 %v1290, %v1288
        %v1339 = vpack.c.b16 %v1293, %v1291
        %v1340 = vpack.c.b16 %v1294, %v1292
        %v1341 = vpack.c.b16 %v1297, %v1295
        %v1342 = vpack.c.b16 %v1298, %v1296
        %v1343 = vpack.c.b16 %v1301, %v1299
        %v1344 = vpack.c.b16 %v1302, %v1300
        %v1345 = vpack.c.b16 %v1305, %v1303
        %v1346 = vpack.c.b16 %v1306, %v1304
        %v1347 = vpack.c.b16 %v1309, %v1307
        %v1348 = vpack.c.b16 %v1310, %v1308
        %v1349 = vpack.c.b16 %v1313, %v1311
        %v1350 = vpack.c.b16 %v1314, %v1312
        %v1351 = vpack.c.b16 %v1317, %v1315
        %v1352 = vpack.c.b16 %v1318, %v1316
        %v1353 = vpack.c.b16 %v1321, %v1319
        %v1354 = vpack.c.b16 %v1322, %v1320
        %v1419 = vunpack.c.l.b16 %v1188
        %v1420 = vunpack.c.l.b16 %v1189
        %v1421 = vunpack.c.l.b16 %v1190
        %v1422 = vunpack.c.l.b16 %v1191
        %v1423 = vunpack.c.l.b16 %v1192
        %v1424 = vunpack.c.l.b16 %v1193
        %v1425 = vunpack.c.l.b16 %v1194
        %v1426 = vunpack.c.l.b16 %v1195
        %v1427 = vunpack.c.l.b16 %v1196
        %v1428 = vunpack.c.l.b16 %v1197
        %v1429 = vunpack.c.l.b16 %v1198
        %v1430 = vunpack.c.l.b16 %v1199
        %v1431 = vunpack.c.l.b16 %v1200
        %v1432 = vunpack.c.l.b16 %v1201
        %v1433 = vunpack.c.l.b16 %v1202
        %v1434 = vunpack.c.l.b16 %v1203
        %v1435 = vunpack.c.l.b16 %v1204
        %v1436 = vunpack.c.l.b16 %v1205
        %v1437 = vunpack.c.l.b16 %v1206
        %v1438 = vunpack.c.l.b16 %v1207
        %v1439 = vunpack.c.l.b16 %v1208
        %v1440 = vunpack.c.l.b16 %v1209
        %v1441 = vunpack.c.l.b16 %v1210
        %v1442 = vunpack.c.l.b16 %v1211
        %v1443 = vunpack.c.l.b16 %v1212
        %v1444 = vunpack.c.l.b16 %v1213
        %v1445 = vunpack.c.l.b16 %v1214
        %v1446 = vunpack.c.l.b16 %v1215
        %v1447 = vunpack.c.l.b16 %v1216
        %v1448 = vunpack.c.l.b16 %v1217
        %v1449 = vunpack.c.l.b16 %v1218
        %v1450 = vunpack.c.l.b16 %v1219
        %v1451 = vpack.c.b16 %v1420, %v1419
        %v1452 = vpack.c.b16 %v1422, %v1421
        %v1453 = vpack.c.b16 %v1424, %v1423
        %v1454 = vpack.c.b16 %v1426, %v1425
        %v1455 = vpack.c.b16 %v1428, %v1427
        %v1456 = vpack.c.b16 %v1430, %v1429
        %v1457 = vpack.c.b16 %v1432, %v1431
        %v1458 = vpack.c.b16 %v1434, %v1433
        %v1459 = vpack.c.b16 %v1436, %v1435
        %v1460 = vpack.c.b16 %v1438, %v1437
        %v1461 = vpack.c.b16 %v1440, %v1439
        %v1462 = vpack.c.b16 %v1442, %v1441
        %v1463 = vpack.c.b16 %v1444, %v1443
        %v1464 = vpack.c.b16 %v1446, %v1445
        %v1465 = vpack.c.b16 %v1448, %v1447
        %v1466 = vpack.c.b16 %v1450, %v1449
        %1483 = vmatprep.subr.bf16.mxu0 0
        %1484 = vmatpush1.bf16.msra.mxu0 %v1458
        %1485 = vmatprep.subr.bf16.mxu0 0
        %1486 = vmatpush1.bf16.msra.mxu0 %v1457
        %1487 = vmatprep.subr.bf16.mxu0 0
        %1488 = vmatpush1.bf16.msra.mxu0 %v1456
        %1489 = vmatprep.subr.bf16.mxu0 0
        %1490 = vmatpush1.bf16.msra.mxu0 %v1455
        %1491 = vmatprep.subr.bf16.mxu0 0
        %1492 = vmatpush1.bf16.msra.mxu0 %v1454
        %1493 = vmatprep.subr.bf16.mxu0 0
        %1494 = vmatpush1.bf16.msra.mxu0 %v1453
        %1495 = vmatprep.subr.bf16.mxu0 0
        %1496 = vmatpush1.bf16.msra.mxu0 %v1452
        %1497 = vmatprep.subr.bf16.mxu0 0
        %1498 = vmatpush1.bf16.msra.mxu0 %v1451
        %1499 = vmatprep.subr.bf16.mxu0 0
        %1500 = vmatpush2.bf16.msra.mxu0 %v1466
        %1501 = vmatprep.subr.bf16.mxu0 0
        %1502 = vmatpush2.bf16.msra.mxu0 %v1465
        %1503 = vmatprep.subr.bf16.mxu0 0
        %1504 = vmatpush2.bf16.msra.mxu0 %v1464
        %1505 = vmatprep.subr.bf16.mxu0 0
        %1506 = vmatpush2.bf16.msra.mxu0 %v1463
        %1507 = vmatprep.subr.bf16.mxu0 0
        %1508 = vmatpush2.bf16.msra.mxu0 %v1462
        %1509 = vmatprep.subr.bf16.mxu0 0
        %1510 = vmatpush2.bf16.msra.mxu0 %v1461
        %1511 = vmatprep.subr.bf16.mxu0 0
        %1512 = vmatpush2.bf16.msra.mxu0 %v1460
        %1513 = vmatprep.subr.bf16.mxu0 0
        %1514 = vmatpush2.bf16.msra.mxu0 %v1459
        %1515 = vmatprep.mubr.bf16.mxu0 %v1324
        %1516 = vmatmul.mubr.bf16.gmra.mxu0 %v1323
        %v1517 = vpop.f32.mrf.mxu0
        %v1518 = vadd.f32 %v1225, %v1517
        %v1519 = vpop.f32.mrf.mxu0
        %v1520 = vpop.f32.mrf.mxu0
        %v1521 = vadd.f32 %v1225, %v1520
        %v1522 = vpop.f32.mrf.mxu0
        %1523 = vmatprep.mubr.bf16.mxu0 %v1326
        %1524 = vmatmul.mubr.bf16.gmra.mxu0 %v1325
        %v1525 = vpop.f32.mrf.mxu0
        %v1526 = vadd.f32 %v1225, %v1525
        %v1527 = vpop.f32.mrf.mxu0
        %v1528 = vpop.f32.mrf.mxu0
        %v1529 = vadd.f32 %v1225, %v1528
        %v1530 = vpop.f32.mrf.mxu0
        %1531 = vmatprep.mubr.bf16.mxu0 %v1328
        %1532 = vmatmul.mubr.bf16.gmra.mxu0 %v1327
        %v1533 = vpop.f32.mrf.mxu0
        %v1534 = vadd.f32 %v1225, %v1533
        %v1535 = vpop.f32.mrf.mxu0
        %v1536 = vpop.f32.mrf.mxu0
        %v1537 = vadd.f32 %v1225, %v1536
        %v1538 = vpop.f32.mrf.mxu0
        %1539 = vmatprep.mubr.bf16.mxu0 %v1330
        %1540 = vmatmul.mubr.bf16.gmra.mxu0 %v1329
        %v1541 = vpop.f32.mrf.mxu0
        %v1542 = vadd.f32 %v1225, %v1541
        %v1543 = vpop.f32.mrf.mxu0
        %v1544 = vpop.f32.mrf.mxu0
        %v1545 = vadd.f32 %v1225, %v1544
        %v1546 = vpop.f32.mrf.mxu0
        %1547 = vmatprep.mubr.bf16.mxu0 %v1332
        %1548 = vmatmul.mubr.bf16.gmra.mxu0 %v1331
        %v1549 = vpop.f32.mrf.mxu0
        %v1550 = vadd.f32 %v1225, %v1549
        %v1551 = vpop.f32.mrf.mxu0
        %v1552 = vpop.f32.mrf.mxu0
        %v1553 = vadd.f32 %v1225, %v1552
        %v1554 = vpop.f32.mrf.mxu0
        %1555 = vmatprep.mubr.bf16.mxu0 %v1334
        %1556 = vmatmul.mubr.bf16.gmra.mxu0 %v1333
        %v1557 = vpop.f32.mrf.mxu0
        %v1558 = vadd.f32 %v1225, %v1557
        %v1559 = vpop.f32.mrf.mxu0
        %v1560 = vpop.f32.mrf.mxu0
        %v1561 = vadd.f32 %v1225, %v1560
        %v1562 = vpop.f32.mrf.mxu0
        %1563 = vmatprep.mubr.bf16.mxu0 %v1336
        %1564 = vmatmul.mubr.bf16.gmra.mxu0 %v1335
        %v1565 = vpop.f32.mrf.mxu0
        %v1566 = vadd.f32 %v1225, %v1565
        %v1567 = vpop.f32.mrf.mxu0
        %v1568 = vpop.f32.mrf.mxu0
        %v1569 = vadd.f32 %v1225, %v1568
        %v1570 = vpop.f32.mrf.mxu0
        %1571 = vmatprep.mubr.bf16.mxu0 %v1338
        %1572 = vmatmul.mubr.bf16.gmra.mxu0 %v1337
        %v1573 = vpop.f32.mrf.mxu0
        %v1574 = vadd.f32 %v1225, %v1573
        %v1575 = vpop.f32.mrf.mxu0
        %v1576 = vpop.f32.mrf.mxu0
        %v1577 = vadd.f32 %v1225, %v1576
        %v1578 = vpop.f32.mrf.mxu0
        %1579 = vmatprep.mubr.bf16.mxu0 %v1340
        %1580 = vmatmul.mubr.bf16.gmra.mxu0 %v1339
        %v1581 = vpop.f32.mrf.mxu0
        %v1582 = vadd.f32 %v1225, %v1581
        %v1583 = vpop.f32.mrf.mxu0
        %v1584 = vpop.f32.mrf.mxu0
        %v1585 = vadd.f32 %v1225, %v1584
        %v1586 = vpop.f32.mrf.mxu0
        %1587 = vmatprep.mubr.bf16.mxu0 %v1342
        %1588 = vmatmul.mubr.bf16.gmra.mxu0 %v1341
        %v1589 = vpop.f32.mrf.mxu0
        %v1590 = vadd.f32 %v1225, %v1589
        %v1591 = vpop.f32.mrf.mxu0
        %v1592 = vpop.f32.mrf.mxu0
        %v1593 = vadd.f32 %v1225, %v1592
        %v1594 = vpop.f32.mrf.mxu0
        %1595 = vmatprep.mubr.bf16.mxu0 %v1344
        %1596 = vmatmul.mubr.bf16.gmra.mxu0 %v1343
        %v1597 = vpop.f32.mrf.mxu0
        %v1598 = vadd.f32 %v1225, %v1597
        %v1599 = vpop.f32.mrf.mxu0
        %v1600 = vpop.f32.mrf.mxu0
        %v1601 = vadd.f32 %v1225, %v1600
        %v1602 = vpop.f32.mrf.mxu0
        %1603 = vmatprep.mubr.bf16.mxu0 %v1346
        %1604 = vmatmul.mubr.bf16.gmra.mxu0 %v1345
        %v1605 = vpop.f32.mrf.mxu0
        %v1606 = vadd.f32 %v1225, %v1605
        %v1607 = vpop.f32.mrf.mxu0
        %v1608 = vpop.f32.mrf.mxu0
        %v1609 = vadd.f32 %v1225, %v1608
        %v1610 = vpop.f32.mrf.mxu0
        %1611 = vmatprep.mubr.bf16.mxu0 %v1348
        %1612 = vmatmul.mubr.bf16.gmra.mxu0 %v1347
        %v1613 = vpop.f32.mrf.mxu0
        %v1614 = vadd.f32 %v1225, %v1613
        %v1615 = vpop.f32.mrf.mxu0
        %v1616 = vpop.f32.mrf.mxu0
        %v1617 = vadd.f32 %v1225, %v1616
        %v1618 = vpop.f32.mrf.mxu0
        %1619 = vmatprep.mubr.bf16.mxu0 %v1350
        %1620 = vmatmul.mubr.bf16.gmra.mxu0 %v1349
        %v1621 = vpop.f32.mrf.mxu0
        %v1622 = vadd.f32 %v1225, %v1621
        %v1623 = vpop.f32.mrf.mxu0
        %v1624 = vpop.f32.mrf.mxu0
        %v1625 = vadd.f32 %v1225, %v1624
        %v1626 = vpop.f32.mrf.mxu0
        %1627 = vmatprep.mubr.bf16.mxu0 %v1352
        %1628 = vmatmul.mubr.bf16.gmra.mxu0 %v1351
        %v1629 = vpop.f32.mrf.mxu0
        %v1630 = vadd.f32 %v1225, %v1629
        %v1631 = vpop.f32.mrf.mxu0
        %v1632 = vpop.f32.mrf.mxu0
        %v1633 = vadd.f32 %v1225, %v1632
        %v1634 = vpop.f32.mrf.mxu0
        %1635 = vmatprep.mubr.bf16.mxu0 %v1354
        %1636 = vmatmul.mubr.bf16.gmra.mxu0 %v1353
        %v1637 = vpop.f32.mrf.mxu0
        %v1638 = vadd.f32 %v1225, %v1637
        %v1639 = vpop.f32.mrf.mxu0
        %v1640 = vpop.f32.mrf.mxu0
        %v1641 = vadd.f32 %v1225, %v1640
        %v1642 = vpop.f32.mrf.mxu0
        %1643 = vdwg.mxu0
        %v1644 = vlaneseq
        %v1645 = vand.u32 %v1644, 127
        %vm1646 = vcmp.lt.s32.totalorder %v1645, 7
        %v1647 = vsel %vm1646, %v1518, -1e+30
        %v1648 = vsel %vm1646, %v1521, -1e+30
        %v1649 = vsel %vm1646, %v1526, -1e+30
        %v1650 = vsel %vm1646, %v1529, -1e+30
        %v1651 = vsel %vm1646, %v1534, -1e+30
        %v1652 = vsel %vm1646, %v1537, -1e+30
        %v1653 = vsel %vm1646, %v1542, -1e+30
        %v1654 = vsel %vm1646, %v1545, -1e+30
        %v1655 = vsel %vm1646, %v1550, -1e+30
        %v1656 = vsel %vm1646, %v1553, -1e+30
        %v1657 = vsel %vm1646, %v1558, -1e+30
        %v1658 = vsel %vm1646, %v1561, -1e+30
        %v1659 = vsel %vm1646, %v1566, -1e+30
        %v1660 = vsel %vm1646, %v1569, -1e+30
        %v1661 = vsel %vm1646, %v1574, -1e+30
        %v1662 = vsel %vm1646, %v1577, -1e+30
        %v1663 = vsel %vm1646, %v1582, -1e+30
        %v1664 = vsel %vm1646, %v1585, -1e+30
        %v1665 = vsel %vm1646, %v1590, -1e+30
        %v1666 = vsel %vm1646, %v1593, -1e+30
        %v1667 = vsel %vm1646, %v1598, -1e+30
        %v1668 = vsel %vm1646, %v1601, -1e+30
        %v1669 = vsel %vm1646, %v1606, -1e+30
        %v1670 = vsel %vm1646, %v1609, -1e+30
        %v1671 = vsel %vm1646, %v1614, -1e+30
        %v1672 = vsel %vm1646, %v1617, -1e+30
        %v1673 = vsel %vm1646, %v1622, -1e+30
        %v1674 = vsel %vm1646, %v1625, -1e+30
        %v1675 = vsel %vm1646, %v1630, -1e+30
        %v1676 = vsel %vm1646, %v1633, -1e+30
        %v1677 = vsel %vm1646, %v1638, -1e+30
        %v1678 = vsel %vm1646, %v1641, -1e+30
        %1679 = vmax.xlane.f32.xlu0 %v1647
        %v1680 = vpop.xlane.xlu0 %1679
        %1681 = vmax.xlane.f32.xlu0 %v1648
        %v1682 = vpop.xlane.xlu0 %1681
        %1683 = vmax.xlane.f32.xlu0 %v1649
        %v1684 = vpop.xlane.xlu0 %1683
        %1685 = vmax.xlane.f32.xlu0 %v1650
        %v1686 = vpop.xlane.xlu0 %1685
        %1687 = vmax.xlane.f32.xlu0 %v1651
        %v1688 = vpop.xlane.xlu0 %1687
        %1689 = vmax.xlane.f32.xlu0 %v1652
        %v1690 = vpop.xlane.xlu0 %1689
        %1691 = vmax.xlane.f32.xlu0 %v1653
        %v1692 = vpop.xlane.xlu0 %1691
        %1693 = vmax.xlane.f32.xlu0 %v1654
        %v1694 = vpop.xlane.xlu0 %1693
        %1695 = vmax.xlane.f32.xlu0 %v1655
        %v1696 = vpop.xlane.xlu0 %1695
        %1697 = vmax.xlane.f32.xlu0 %v1656
        %v1698 = vpop.xlane.xlu0 %1697
        %1699 = vmax.xlane.f32.xlu0 %v1657
        %v1700 = vpop.xlane.xlu0 %1699
        %1701 = vmax.xlane.f32.xlu0 %v1658
        %v1702 = vpop.xlane.xlu0 %1701
        %1703 = vmax.xlane.f32.xlu0 %v1659
        %v1704 = vpop.xlane.xlu0 %1703
        %1705 = vmax.xlane.f32.xlu0 %v1660
        %v1706 = vpop.xlane.xlu0 %1705
        %1707 = vmax.xlane.f32.xlu0 %v1661
        %v1708 = vpop.xlane.xlu0 %1707
        %1709 = vmax.xlane.f32.xlu0 %v1662
        %v1710 = vpop.xlane.xlu0 %1709
        %1711 = vmax.xlane.f32.xlu0 %v1663
        %v1712 = vpop.xlane.xlu0 %1711
        %1713 = vmax.xlane.f32.xlu0 %v1664
        %v1714 = vpop.xlane.xlu0 %1713
        %1715 = vmax.xlane.f32.xlu0 %v1665
        %v1716 = vpop.xlane.xlu0 %1715
        %1717 = vmax.xlane.f32.xlu0 %v1666
        %v1718 = vpop.xlane.xlu0 %1717
        %1719 = vmax.xlane.f32.xlu0 %v1667
        %v1720 = vpop.xlane.xlu0 %1719
        %1721 = vmax.xlane.f32.xlu0 %v1668
        %v1722 = vpop.xlane.xlu0 %1721
        %1723 = vmax.xlane.f32.xlu0 %v1669
        %v1724 = vpop.xlane.xlu0 %1723
        %1725 = vmax.xlane.f32.xlu0 %v1670
        %v1726 = vpop.xlane.xlu0 %1725
        %1727 = vmax.xlane.f32.xlu0 %v1671
        %v1728 = vpop.xlane.xlu0 %1727
        %1729 = vmax.xlane.f32.xlu0 %v1672
        %v1730 = vpop.xlane.xlu0 %1729
        %1731 = vmax.xlane.f32.xlu0 %v1673
        %v1732 = vpop.xlane.xlu0 %1731
        %1733 = vmax.xlane.f32.xlu0 %v1674
        %v1734 = vpop.xlane.xlu0 %1733
        %1735 = vmax.xlane.f32.xlu0 %v1675
        %v1736 = vpop.xlane.xlu0 %1735
        %1737 = vmax.xlane.f32.xlu0 %v1676
        %v1738 = vpop.xlane.xlu0 %1737
        %1739 = vmax.xlane.f32.xlu0 %v1677
        %v1740 = vpop.xlane.xlu0 %1739
        %1741 = vmax.xlane.f32.xlu0 %v1678
        %v1742 = vpop.xlane.xlu0 %1741
        %v1743 = vsub.f32 %v1647, %v1680
        %v1744 = vsub.f32 %v1648, %v1682
        %v1745 = vsub.f32 %v1649, %v1684
        %v1746 = vsub.f32 %v1650, %v1686
        %v1747 = vsub.f32 %v1651, %v1688
        %v1748 = vsub.f32 %v1652, %v1690
        %v1749 = vsub.f32 %v1653, %v1692
        %v1750 = vsub.f32 %v1654, %v1694
        %v1751 = vsub.f32 %v1655, %v1696
        %v1752 = vsub.f32 %v1656, %v1698
        %v1753 = vsub.f32 %v1657, %v1700
        %v1754 = vsub.f32 %v1658, %v1702
        %v1755 = vsub.f32 %v1659, %v1704
        %v1756 = vsub.f32 %v1660, %v1706
        %v1757 = vsub.f32 %v1661, %v1708
        %v1758 = vsub.f32 %v1662, %v1710
        %v1759 = vsub.f32 %v1663, %v1712
        %v1760 = vsub.f32 %v1664, %v1714
        %v1761 = vsub.f32 %v1665, %v1716
        %v1762 = vsub.f32 %v1666, %v1718
        %v1763 = vsub.f32 %v1667, %v1720
        %v1764 = vsub.f32 %v1668, %v1722
        %v1765 = vsub.f32 %v1669, %v1724
        %v1766 = vsub.f32 %v1670, %v1726
        %v1767 = vsub.f32 %v1671, %v1728
        %v1768 = vsub.f32 %v1672, %v1730
        %v1769 = vsub.f32 %v1673, %v1732
        %v1770 = vsub.f32 %v1674, %v1734
        %v1771 = vsub.f32 %v1675, %v1736
        %v1772 = vsub.f32 %v1676, %v1738
        %v1773 = vsub.f32 %v1677, %v1740
        %v1774 = vsub.f32 %v1678, %v1742
        %v1775 = vmul.f32 %v1743, 1.442695
        %v1776 = vpow.pop %v1775
        %v1777 = vmul.f32 %v1744, 1.442695
        %v1778 = vpow.pop %v1777
        %v1779 = vmul.f32 %v1745, 1.442695
        %v1780 = vpow.pop %v1779
        %v1781 = vmul.f32 %v1746, 1.442695
        %v1782 = vpow.pop %v1781
        %v1783 = vmul.f32 %v1747, 1.442695
        %v1784 = vpow.pop %v1783
        %v1785 = vmul.f32 %v1748, 1.442695
        %v1786 = vpow.pop %v1785
        %v1787 = vmul.f32 %v1749, 1.442695
        %v1788 = vpow.pop %v1787
        %v1789 = vmul.f32 %v1750, 1.442695
        %v1790 = vpow.pop %v1789
        %v1791 = vmul.f32 %v1751, 1.442695
        %v1792 = vpow.pop %v1791
        %v1793 = vmul.f32 %v1752, 1.442695
        %v1794 = vpow.pop %v1793
        %v1795 = vmul.f32 %v1753, 1.442695
        %v1796 = vpow.pop %v1795
        %v1797 = vmul.f32 %v1754, 1.442695
        %v1798 = vpow.pop %v1797
        %v1799 = vmul.f32 %v1755, 1.442695
        %v1800 = vpow.pop %v1799
        %v1801 = vmul.f32 %v1756, 1.442695
        %v1802 = vpow.pop %v1801
        %v1803 = vmul.f32 %v1757, 1.442695
        %v1804 = vpow.pop %v1803
        %v1805 = vmul.f32 %v1758, 1.442695
        %v1806 = vpow.pop %v1805
        %v1807 = vmul.f32 %v1759, 1.442695
        %v1808 = vpow.pop %v1807
        %v1809 = vmul.f32 %v1760, 1.442695
        %v1810 = vpow.pop %v1809
        %v1811 = vmul.f32 %v1761, 1.442695
        %v1812 = vpow.pop %v1811
        %v1813 = vmul.f32 %v1762, 1.442695
        %v1814 = vpow.pop %v1813
        %v1815 = vmul.f32 %v1763, 1.442695
        %v1816 = vpow.pop %v1815
        %v1817 = vmul.f32 %v1764, 1.442695
        %v1818 = vpow.pop %v1817
        %v1819 = vmul.f32 %v1765, 1.442695
        %v1820 = vpow.pop %v1819
        %v1821 = vmul.f32 %v1766, 1.442695
        %v1822 = vpow.pop %v1821
        %v1823 = vmul.f32 %v1767, 1.442695
        %v1824 = vpow.pop %v1823
        %v1825 = vmul.f32 %v1768, 1.442695
        %v1826 = vpow.pop %v1825
        %v1827 = vmul.f32 %v1769, 1.442695
        %v1828 = vpow.pop %v1827
        %v1829 = vmul.f32 %v1770, 1.442695
        %v1830 = vpow.pop %v1829
        %v1831 = vmul.f32 %v1771, 1.442695
        %v1832 = vpow.pop %v1831
        %v1833 = vmul.f32 %v1772, 1.442695
        %v1834 = vpow.pop %v1833
        %v1835 = vmul.f32 %v1773, 1.442695
        %v1836 = vpow.pop %v1835
        %v1837 = vmul.f32 %v1774, 1.442695
        %v1838 = vpow.pop %v1837
        %1839 = vadd.xlane.f32.xlu0 %v1776
        %v1840 = vpop.xlane.xlu0 %1839
        %1841 = vadd.xlane.f32.xlu0 %v1778
        %v1842 = vpop.xlane.xlu0 %1841
        %1843 = vadd.xlane.f32.xlu0 %v1780
        %v1844 = vpop.xlane.xlu0 %1843
        %1845 = vadd.xlane.f32.xlu0 %v1782
        %v1846 = vpop.xlane.xlu0 %1845
        %1847 = vadd.xlane.f32.xlu0 %v1784
        %v1848 = vpop.xlane.xlu0 %1847
        %1849 = vadd.xlane.f32.xlu0 %v1786
        %v1850 = vpop.xlane.xlu0 %1849
        %1851 = vadd.xlane.f32.xlu0 %v1788
        %v1852 = vpop.xlane.xlu0 %1851
        %1853 = vadd.xlane.f32.xlu0 %v1790
        %v1854 = vpop.xlane.xlu0 %1853
        %1855 = vadd.xlane.f32.xlu0 %v1792
        %v1856 = vpop.xlane.xlu0 %1855
        %1857 = vadd.xlane.f32.xlu0 %v1794
        %v1858 = vpop.xlane.xlu0 %1857
        %1859 = vadd.xlane.f32.xlu0 %v1796
        %v1860 = vpop.xlane.xlu0 %1859
        %1861 = vadd.xlane.f32.xlu0 %v1798
        %v1862 = vpop.xlane.xlu0 %1861
        %1863 = vadd.xlane.f32.xlu0 %v1800
        %v1864 = vpop.xlane.xlu0 %1863
        %1865 = vadd.xlane.f32.xlu0 %v1802
        %v1866 = vpop.xlane.xlu0 %1865
        %1867 = vadd.xlane.f32.xlu0 %v1804
        %v1868 = vpop.xlane.xlu0 %1867
        %1869 = vadd.xlane.f32.xlu0 %v1806
        %v1870 = vpop.xlane.xlu0 %1869
        %1871 = vadd.xlane.f32.xlu0 %v1808
        %v1872 = vpop.xlane.xlu0 %1871
        %1873 = vadd.xlane.f32.xlu0 %v1810
        %v1874 = vpop.xlane.xlu0 %1873
        %1875 = vadd.xlane.f32.xlu0 %v1812
        %v1876 = vpop.xlane.xlu0 %1875
        %1877 = vadd.xlane.f32.xlu0 %v1814
        %v1878 = vpop.xlane.xlu0 %1877
        %1879 = vadd.xlane.f32.xlu0 %v1816
        %v1880 = vpop.xlane.xlu0 %1879
        %1881 = vadd.xlane.f32.xlu0 %v1818
        %v1882 = vpop.xlane.xlu0 %1881
        %1883 = vadd.xlane.f32.xlu0 %v1820
        %v1884 = vpop.xlane.xlu0 %1883
        %1885 = vadd.xlane.f32.xlu0 %v1822
        %v1886 = vpop.xlane.xlu0 %1885
        %1887 = vadd.xlane.f32.xlu0 %v1824
        %v1888 = vpop.xlane.xlu0 %1887
        %1889 = vadd.xlane.f32.xlu0 %v1826
        %v1890 = vpop.xlane.xlu0 %1889
        %1891 = vadd.xlane.f32.xlu0 %v1828
        %v1892 = vpop.xlane.xlu0 %1891
        %1893 = vadd.xlane.f32.xlu0 %v1830
        %v1894 = vpop.xlane.xlu0 %1893
        %1895 = vadd.xlane.f32.xlu0 %v1832
        %v1896 = vpop.xlane.xlu0 %1895
        %1897 = vadd.xlane.f32.xlu0 %v1834
        %v1898 = vpop.xlane.xlu0 %1897
        %1899 = vadd.xlane.f32.xlu0 %v1836
        %v1900 = vpop.xlane.xlu0 %1899
        %1901 = vadd.xlane.f32.xlu0 %v1838
        %v1902 = vpop.xlane.xlu0 %1901
        %v1903 = vlog2.pop %v1840
        %v1904 = vmul.f32 %v1903, 0.6931472
        %v1905 = vlog2.pop %v1842
        %v1906 = vmul.f32 %v1905, 0.6931472
        %v1907 = vlog2.pop %v1844
        %v1908 = vmul.f32 %v1907, 0.6931472
        %v1909 = vlog2.pop %v1846
        %v1910 = vmul.f32 %v1909, 0.6931472
        %v1911 = vlog2.pop %v1848
        %v1912 = vmul.f32 %v1911, 0.6931472
        %v1913 = vlog2.pop %v1850
        %v1914 = vmul.f32 %v1913, 0.6931472
        %v1915 = vlog2.pop %v1852
        %v1916 = vmul.f32 %v1915, 0.6931472
        %v1917 = vlog2.pop %v1854
        %v1918 = vmul.f32 %v1917, 0.6931472
        %v1919 = vlog2.pop %v1856
        %v1920 = vmul.f32 %v1919, 0.6931472
        %v1921 = vlog2.pop %v1858
        %v1922 = vmul.f32 %v1921, 0.6931472
        %v1923 = vlog2.pop %v1860
        %v1924 = vmul.f32 %v1923, 0.6931472
        %v1925 = vlog2.pop %v1862
        %v1926 = vmul.f32 %v1925, 0.6931472
        %v1927 = vlog2.pop %v1864
        %v1928 = vmul.f32 %v1927, 0.6931472
        %v1929 = vlog2.pop %v1866
        %v1930 = vmul.f32 %v1929, 0.6931472
        %v1931 = vlog2.pop %v1868
        %v1932 = vmul.f32 %v1931, 0.6931472
        %v1933 = vlog2.pop %v1870
        %v1934 = vmul.f32 %v1933, 0.6931472
        %v1935 = vlog2.pop %v1872
        %v1936 = vmul.f32 %v1935, 0.6931472
        %v1937 = vlog2.pop %v1874
        %v1938 = vmul.f32 %v1937, 0.6931472
        %v1939 = vlog2.pop %v1876
        %v1940 = vmul.f32 %v1939, 0.6931472
        %v1941 = vlog2.pop %v1878
        %v1942 = vmul.f32 %v1941, 0.6931472
        %v1943 = vlog2.pop %v1880
        %v1944 = vmul.f32 %v1943, 0.6931472
        %v1945 = vlog2.pop %v1882
        %v1946 = vmul.f32 %v1945, 0.6931472
        %v1947 = vlog2.pop %v1884
        %v1948 = vmul.f32 %v1947, 0.6931472
        %v1949 = vlog2.pop %v1886
        %v1950 = vmul.f32 %v1949, 0.6931472
        %v1951 = vlog2.pop %v1888
        %v1952 = vmul.f32 %v1951, 0.6931472
        %v1953 = vlog2.pop %v1890
        %v1954 = vmul.f32 %v1953, 0.6931472
        %v1955 = vlog2.pop %v1892
        %v1956 = vmul.f32 %v1955, 0.6931472
        %v1957 = vlog2.pop %v1894
        %v1958 = vmul.f32 %v1957, 0.6931472
        %v1959 = vlog2.pop %v1896
        %v1960 = vmul.f32 %v1959, 0.6931472
        %v1961 = vlog2.pop %v1898
        %v1962 = vmul.f32 %v1961, 0.6931472
        %v1963 = vlog2.pop %v1900
        %v1964 = vmul.f32 %v1963, 0.6931472
        %v1965 = vlog2.pop %v1902
        %v1966 = vmul.f32 %v1965, 0.6931472
        %v1967 = vsub.f32 %v1743, %v1904
        %v1968 = vsub.f32 %v1744, %v1906
        %v1969 = vsub.f32 %v1745, %v1908
        %v1970 = vsub.f32 %v1746, %v1910
        %v1971 = vsub.f32 %v1747, %v1912
        %v1972 = vsub.f32 %v1748, %v1914
        %v1973 = vsub.f32 %v1749, %v1916
        %v1974 = vsub.f32 %v1750, %v1918
        %v1975 = vsub.f32 %v1751, %v1920
        %v1976 = vsub.f32 %v1752, %v1922
        %v1977 = vsub.f32 %v1753, %v1924
        %v1978 = vsub.f32 %v1754, %v1926
        %v1979 = vsub.f32 %v1755, %v1928
        %v1980 = vsub.f32 %v1756, %v1930
        %v1981 = vsub.f32 %v1757, %v1932
        %v1982 = vsub.f32 %v1758, %v1934
        %v1983 = vsub.f32 %v1759, %v1936
        %v1984 = vsub.f32 %v1760, %v1938
        %v1985 = vsub.f32 %v1761, %v1940
        %v1986 = vsub.f32 %v1762, %v1942
        %v1987 = vsub.f32 %v1763, %v1944
        %v1988 = vsub.f32 %v1764, %v1946
        %v1989 = vsub.f32 %v1765, %v1948
        %v1990 = vsub.f32 %v1766, %v1950
        %v1991 = vsub.f32 %v1767, %v1952
        %v1992 = vsub.f32 %v1768, %v1954
        %v1993 = vsub.f32 %v1769, %v1956
        %v1994 = vsub.f32 %v1770, %v1958
        %v1995 = vsub.f32 %v1771, %v1960
        %v1996 = vsub.f32 %v1772, %v1962
        %v1997 = vsub.f32 %v1773, %v1964
        %v1998 = vsub.f32 %v1774, %v1966
        %1999 = vst [vmem:[%s216] sm:$0xff] %v1967
        %2000 = vst [vmem:[%s216 + $0x8] sm:$0xff] %v1968
        %2001 = vst [vmem:[%s216 + $0x10] sm:$0xff] %v1969
        %2002 = vst [vmem:[%s216 + $0x18] sm:$0xff] %v1970
        %2003 = vst [vmem:[%s216 + $0x20] sm:$0xff] %v1971
        %2004 = vst [vmem:[%s216 + $0x28] sm:$0xff] %v1972
        %2005 = vst [vmem:[%s216 + $0x30] sm:$0xff] %v1973
        %2006 = vst [vmem:[%s216 + $0x38] sm:$0xff] %v1974
        %2007 = vst [vmem:[%s216 + $0x40] sm:$0xff] %v1975
        %2008 = vst [vmem:[%s216 + $0x48] sm:$0xff] %v1976
        %2009 = vst [vmem:[%s216 + $0x50] sm:$0xff] %v1977
        %2010 = vst [vmem:[%s216 + $0x58] sm:$0xff] %v1978
        %2011 = vst [vmem:[%s216 + $0x60] sm:$0xff] %v1979
        %2012 = vst [vmem:[%s216 + $0x68] sm:$0xff] %v1980
        %2013 = vst [vmem:[%s216 + $0x70] sm:$0xff] %v1981
        %2014 = vst [vmem:[%s216 + $0x78] sm:$0xff] %v1982
        %2015 = vst [vmem:[%s216 + $0x80] sm:$0xff] %v1983
        %2016 = vst [vmem:[%s216 + $0x88] sm:$0xff] %v1984
        %2017 = vst [vmem:[%s216 + $0x90] sm:$0xff] %v1985
        %2018 = vst [vmem:[%s216 + $0x98] sm:$0xff] %v1986
        %2019 = vst [vmem:[%s216 + $0xa0] sm:$0xff] %v1987
        %2020 = vst [vmem:[%s216 + $0xa8] sm:$0xff] %v1988
        %2021 = vst [vmem:[%s216 + $0xb0] sm:$0xff] %v1989
        %2022 = vst [vmem:[%s216 + $0xb8] sm:$0xff] %v1990
        %2023 = vst [vmem:[%s216 + $0xc0] sm:$0xff] %v1991
        %2024 = vst [vmem:[%s216 + $0xc8] sm:$0xff] %v1992
        %2025 = vst [vmem:[%s216 + $0xd0] sm:$0xff] %v1993
        %2026 = vst [vmem:[%s216 + $0xd8] sm:$0xff] %v1994
        %2027 = vst [vmem:[%s216 + $0xe0] sm:$0xff] %v1995
        %2028 = vst [vmem:[%s216 + $0xe8] sm:$0xff] %v1996
        %2029 = vst [vmem:[%s216 + $0xf0] sm:$0xff] %v1997
        %2030 = vst [vmem:[%s216 + $0xf8] sm:$0xff] %v1998
      $region48: #{gcn_forward_padded.3} parent=39 // pred_fallthru
        _
      %s2031 = smul.u32 32, %s21
      %p2032 = scmp.lt.s32.totalorder %s2031, 31
      %s2033 = scalar_select %p2032, %s2031, 31
      %s2034 = smul.addr %s2033, 8
      %s2035 = scalar_lea.vmem %s5, %s2034
      // Predicated region
      $region49: #{gcn_forward_padded.3} parent=39 // pred_check
        %p2036 = pneg %p151
      $region50: #{gcn_forward_padded.3} parent=39 // pred_check_branch
        %2038 = sbr.rel (%p2036) target = $region52
      $region51: #{gcn_forward_padded.3} parent=39 // pred_region
        %s2039 = smul.u32 32, %s21
      $region52: #{gcn_forward_padded.3} parent=39 // pred_fallthru
        _
      // Predicated region
      $region53: #{gcn_forward_padded.3} parent=39 // pred_check
        %p2040 = pneg %p151
      $region54: #{gcn_forward_padded.3} parent=39 // pred_check_branch
        %2042 = sbr.rel (%p2040) target = $region56
      $region55: #{gcn_forward_padded.3} parent=39 // pred_region
        %s2043 = smul.u32 32, %s21
        %p2044 = scmp.lt.s32.totalorder %s2043, 31
        %s2045 = scalar_select %p2044, %s2043, 31
        %s2046 = smul.addr %s2045, 8
        %s2047 = scalar_lea.vmem %s5, %s2046
      $region56: #{gcn_forward_padded.3} parent=39 // pred_fallthru
        _
    $region40: #{gcn_forward_padded.3} parent=5 // pred_fallthru
      _
    %p2048 = scmp.le.s32.totalorder 2, %s11
    // Predicated region
    $region57: #{gcn_forward_padded.3} parent=5 // pred_check
      %p2049 = pneg %p2048
    $region58: #{gcn_forward_padded.3} parent=5 // pred_check_branch
      %2051 = sbr.rel (%p2049) target = $region60
    $region59: #{gcn_forward_padded.3} parent=5 // pred_region
      %s2052 = ssub.s32 %s11, 2
    $region60: #{gcn_forward_padded.3} parent=5 // pred_fallthru
      _
  $region6: #{gcn_forward_padded.3} parent=0 // loop_footer
    %s15 = sadd.s32 1, %s11
  $region7: #{gcn_forward_padded.3} parent=0 // loop_footer_branch
    %10 = sbr.rel target = $region3
  $region8: #{gcn_forward_padded.3} parent=0 // loop_exit
    _

// kernel: gcn_forward_padded.2
$region0: #{gcn_forward_padded.2}
  #allocation0 [shape = 'u32[]', space=smem, size = 0x4, offset = 0x4, fixed_abs, tag = 'smem constant byte address 0x4 - core index']
  #allocation1 [shape = 'u32[144,128]{1,0:T(1,128)}', space=vmem, size = 0x12000, scoped, tag = 'internal scratch']
  %s0 = inlined_call_operand.hbm [shape: bf16[256,1536], index: 0, kind: input, shape index: {}]
  %s1 = inlined_call_operand.hbm [shape: bf16[1536,128], index: 1, kind: input, shape index: {}]
  %s2 = inlined_call_operand.vmem [shape: bf16[256,128], index: 2, kind: output, shape index: {}]
  %s3 = sld [smem:[#allocation0]]
  $region26: #{gcn_forward_padded.2} parent=0
    _
  %s5 = ssub.s32 1, %s3
  %s6 = scalar_select 0, %s5, %s3
  $region1: #{gcn_forward_padded.2} parent=0
    #allocation2 [shape = 'u8[786432]{0}', space=vmem, size = 0xc0000, scoped, tag = 'input window, operand 0, single buffered']
    #allocation3 [shape = 's32[1]{0}', space=sflag, size = 0x4, scoped, tag = 'scoped memory for gcn_forward_padded.2']
    #allocation4 [shape = 'u8[393216]{0}', space=vmem, size = 0x60000, scoped, tag = 'input window, operand 1, single buffered']
    #allocation5 [shape = 's32[1]{0}', space=sflag, size = 0x4, scoped, tag = 'scoped memory for gcn_forward_padded.2']
    %7 = vsyncpa [#allocation3], 0
    %8 = vsyncpa [#allocation5], 0
    // Predicated region
    $region2: #{gcn_forward_padded.2} parent=1 // pred_check
      _
    $region3: #{gcn_forward_padded.2} parent=1 // pred_check_branch
      %10 = sbr.rel (0) target = $region5
    $region4: #{gcn_forward_padded.2} parent=1 // pred_region
      %s12 = ssub.s32 24576, 24576
      %13 = vsyncadd [#allocation3], %s12
      %s14 = sshll.u32 [#allocation2], 4
      %s15 = int_to_ptr.vmem [resolvable:$true] %s14
      %20 = dma.hbm_to_vmem [thread:$0]  %s0, 24576, %s15, [#allocation3], 768, 768, 48
    $region5: #{gcn_forward_padded.2} parent=1 // pred_fallthru
      _
    // Predicated region
    $region6: #{gcn_forward_padded.2} parent=1 // pred_check
      _
    $region7: #{gcn_forward_padded.2} parent=1 // pred_check_branch
      %22 = sbr.rel (0) target = $region9
    $region8: #{gcn_forward_padded.2} parent=1 // pred_region
      %s24 = ssub.s32 12288, 12288
      %25 = vsyncadd [#allocation5], %s24
      %s26 = sshll.u32 [#allocation4], 4
      %s27 = int_to_ptr.vmem [resolvable:$true] %s26
      %32 = dma.hbm_to_vmem [thread:$0]  %s1, 12288, %s27, [#allocation5], 64, 64, 4
    $region9: #{gcn_forward_padded.2} parent=1 // pred_fallthru
      _
    // Predicated region
    $region10: #{gcn_forward_padded.2} parent=1 // pred_check
      _
    $region11: #{gcn_forward_padded.2} parent=1 // pred_check_branch
      %34 = sbr.rel (0) target = $region13
    $region12: #{gcn_forward_padded.2} parent=1 // pred_region
      %35 = dma.done [#allocation3], 24576
    $region13: #{gcn_forward_padded.2} parent=1 // pred_fallthru
      _
    // Predicated region
    $region14: #{gcn_forward_padded.2} parent=1 // pred_check
      _
    $region15: #{gcn_forward_padded.2} parent=1 // pred_check_branch
      %37 = sbr.rel (0) target = $region17
    $region16: #{gcn_forward_padded.2} parent=1 // pred_region
      %38 = dma.done [#allocation5], 12288
    $region17: #{gcn_forward_padded.2} parent=1 // pred_fallthru
      _
    %v40 = vld [vmem:[#allocation2] sm:$0xff]
    %v41 = vld [vmem:[#allocation2 + $0x8] sm:$0xff]
    %v42 = vld [vmem:[#allocation2 + $0x10] sm:$0xff]
    %v43 = vld [vmem:[#allocation2 + $0x18] sm:$0xff]
    %v44 = vld [vmem:[#allocation2 + $0x20] sm:$0xff]
    %v45 = vld [vmem:[#allocation2 + $0x28] sm:$0xff]
    %v46 = vld [vmem:[#allocation2 + $0x30] sm:$0xff]
    %v47 = vld [vmem:[#allocation2 + $0x38] sm:$0xff]
    %v48 = vld [vmem:[#allocation2 + $0x40] sm:$0xff]
    %v49 = vld [vmem:[#allocation2 + $0x48] sm:$0xff]
    %v50 = vld [vmem:[#allocation2 + $0x50] sm:$0xff]
    %v51 = vld [vmem:[#allocation2 + $0x58] sm:$0xff]
    %v52 = vld [vmem:[#allocation2 + $0x60] sm:$0xff]
    %v53 = vld [vmem:[#allocation2 + $0x68] sm:$0xff]
    %v54 = vld [vmem:[#allocation2 + $0x70] sm:$0xff]
    %v55 = vld [vmem:[#allocation2 + $0x78] sm:$0xff]
    %v56 = vld [vmem:[#allocation2 + $0x80] sm:$0xff]
    %v57 = vld [vmem:[#allocation2 + $0x88] sm:$0xff]
    %v58 = vld [vmem:[#allocation2 + $0x90] sm:$0xff]
    %v59 = vld [vmem:[#allocation2 + $0x98] sm:$0xff]
    %v60 = vld [vmem:[#allocation2 + $0xa0] sm:$0xff]
    %v61 = vld [vmem:[#allocation2 + $0xa8] sm:$0xff]
    %v62 = vld [vmem:[#allocation2 + $0xb0] sm:$0xff]
    %v63 = vld [vmem:[#allocation2 + $0xb8] sm:$0xff]
    %v64 = vld [vmem:[#allocation2 + $0xc0] sm:$0xff]
    %v65 = vld [vmem:[#allocation2 + $0xc8] sm:$0xff]
    %v66 = vld [vmem:[#allocation2 + $0xd0] sm:$0xff]
    %v67 = vld [vmem:[#allocation2 + $0xd8] sm:$0xff]
    %v68 = vld [vmem:[#allocation2 + $0xe0] sm:$0xff]
    %v69 = vld [vmem:[#allocation2 + $0xe8] sm:$0xff]
    %v70 = vld [vmem:[#allocation2 + $0xf0] sm:$0xff]
    %v71 = vld [vmem:[#allocation2 + $0xf8] sm:$0xff]
    %v72 = vld [vmem:[#allocation2 + $0x100] sm:$0xff]
    %v73 = vld [vmem:[#allocation2 + $0x108] sm:$0xff]
    %v74 = vld [vmem:[#allocation2 + $0x110] sm:$0xff]
    %v75 = vld [vmem:[#allocation2 + $0x118] sm:$0xff]
    %v76 = vld [vmem:[#allocation2 + $0x120] sm:$0xff]
    %v77 = vld [vmem:[#allocation2 + $0x128] sm:$0xff]
    %v78 = vld [vmem:[#allocation2 + $0x130] sm:$0xff]
    %v79 = vld [vmem:[#allocation2 + $0x138] sm:$0xff]
    %v80 = vld [vmem:[#allocation2 + $0x140] sm:$0xff]
    %v81 = vld [vmem:[#allocation2 + $0x148] sm:$0xff]
    %v82 = vld [vmem:[#allocation2 + $0x150] sm:$0xff]
    %v83 = vld [vmem:[#allocation2 + $0x158] sm:$0xff]
    %v84 = vld [vmem:[#allocation2 + $0x160] sm:$0xff]
    %v85 = vld [vmem:[#allocation2 + $0x168] sm:$0xff]
    %v86 = vld [vmem:[#allocation2 + $0x170] sm:$0xff]
    %v87 = vld [vmem:[#allocation2 + $0x178] sm:$0xff]
    %v88 = vld [vmem:[#allocation2 + $0x180] sm:$0xff]
    %v89 = vld [vmem:[#allocation2 + $0x188] sm:$0xff]
    %v90 = vld [vmem:[#allocation2 + $0x190] sm:$0xff]
    %v91 = vld [vmem:[#allocation2 + $0x198] sm:$0xff]
    %v92 = vld [vmem:[#allocation2 + $0x1a0] sm:$0xff]
    %v93 = vld [vmem:[#allocation2 + $0x1a8] sm:$0xff]
    %v94 = vld [vmem:[#allocation2 + $0x1b0] sm:$0xff]
    %v95 = vld [vmem:[#allocation2 + $0x1b8] sm:$0xff]
    %v96 = vld [vmem:[#allocation2 + $0x1c0] sm:$0xff]
    %v97 = vld [vmem:[#allocation2 + $0x1c8] sm:$0xff]
    %v98 = vld [vmem:[#allocation2 + $0x1d0] sm:$0xff]
    %v99 = vld [vmem:[#allocation2 + $0x1d8] sm:$0xff]
    %v100 = vld [vmem:[#allocation2 + $0x1e0] sm:$0xff]
    %v101 = vld [vmem:[#allocation2 + $0x1e8] sm:$0xff]
    %v102 = vld [vmem:[#allocation2 + $0x1f0] sm:$0xff]
    %v103 = vld [vmem:[#allocation2 + $0x1f8] sm:$0xff]
    %v104 = vld [vmem:[#allocation2 + $0x200] sm:$0xff]
    %v105 = vld [vmem:[#allocation2 + $0x208] sm:$0xff]
    %v106 = vld [vmem:[#allocation2 + $0x210] sm:$0xff]
    %v107 = vld [vmem:[#allocation2 + $0x218] sm:$0xff]
    %v108 = vld [vmem:[#allocation2 + $0x220] sm:$0xff]
    %v109 = vld [vmem:[#allocation2 + $0x228] sm:$0xff]
    %v110 = vld [vmem:[#allocation2 + $0x230] sm:$0xff]
    %v111 = vld [vmem:[#allocation2 + $0x238] sm:$0xff]
    %v112 = vld [vmem:[#allocation2 + $0x240] sm:$0xff]
    %v113 = vld [vmem:[#allocation2 + $0x248] sm:$0xff]
    %v114 = vld [vmem:[#allocation2 + $0x250] sm:$0xff]
    %v115 = vld [vmem:[#allocation2 + $0x258] sm:$0xff]
    %v116 = vld [vmem:[#allocation2 + $0x260] sm:$0xff]
    %v117 = vld [vmem:[#allocation2 + $0x268] sm:$0xff]
    %v118 = vld [vmem:[#allocation2 + $0x270] sm:$0xff]
    %v119 = vld [vmem:[#allocation2 + $0x278] sm:$0xff]
    %v120 = vld [vmem:[#allocation2 + $0x280] sm:$0xff]
    %v121 = vld [vmem:[#allocation2 + $0x288] sm:$0xff]
    %v122 = vld [vmem:[#allocation2 + $0x290] sm:$0xff]
    %v123 = vld [vmem:[#allocation2 + $0x298] sm:$0xff]
    %v124 = vld [vmem:[#allocation2 + $0x2a0] sm:$0xff]
    %v125 = vld [vmem:[#allocation2 + $0x2a8] sm:$0xff]
    %v126 = vld [vmem:[#allocation2 + $0x2b0] sm:$0xff]
    %v127 = vld [vmem:[#allocation2 + $0x2b8] sm:$0xff]
    %v128 = vld [vmem:[#allocation2 + $0x2c0] sm:$0xff]
    %v129 = vld [vmem:[#allocation2 + $0x2c8] sm:$0xff]
    %v130 = vld [vmem:[#allocation2 + $0x2d0] sm:$0xff]
    %v131 = vld [vmem:[#allocation2 + $0x2d8] sm:$0xff]
    %v132 = vld [vmem:[#allocation2 + $0x2e0] sm:$0xff]
    %v133 = vld [vmem:[#allocation2 + $0x2e8] sm:$0xff]
    %v134 = vld [vmem:[#allocation2 + $0x2f0] sm:$0xff]
    %v135 = vld [vmem:[#allocation2 + $0x2f8] sm:$0xff]
    %v136 = vld [vmem:[#allocation2 + $0x300] sm:$0xff]
    %v137 = vld [vmem:[#allocation2 + $0x308] sm:$0xff]
    %v138 = vld [vmem:[#allocation2 + $0x310] sm:$0xff]
    %v139 = vld [vmem:[#allocation2 + $0x318] sm:$0xff]
    %v140 = vld [vmem:[#allocation2 + $0x320] sm:$0xff]
    %v141 = vld [vmem:[#allocation2 + $0x328] sm:$0xff]
    %v142 = vld [vmem:[#allocation2 + $0x330] sm:$0xff]
    %v143 = vld [vmem:[#allocation2 + $0x338] sm:$0xff]
    %v144 = vld [vmem:[#allocation2 + $0x340] sm:$0xff]
    %v145 = vld [vmem:[#allocation2 + $0x348] sm:$0xff]
    %v146 = vld [vmem:[#allocation2 + $0x350] sm:$0xff]
    %v147 = vld [vmem:[#allocation2 + $0x358] sm:$0xff]
    %v148 = vld [vmem:[#allocation2 + $0x360] sm:$0xff]
    %v149 = vld [vmem:[#allocation2 + $0x368] sm:$0xff]
    %v150 = vld [vmem:[#allocation2 + $0x370] sm:$0xff]
    %v151 = vld [vmem:[#allocation2 + $0x378] sm:$0xff]
    %v152 = vld [vmem:[#allocation2 + $0x380] sm:$0xff]
    %v153 = vld [vmem:[#allocation2 + $0x388] sm:$0xff]
    %v154 = vld [vmem:[#allocation2 + $0x390] sm:$0xff]
    %v155 = vld [vmem:[#allocation2 + $0x398] sm:$0xff]
    %v156 = vld [vmem:[#allocation2 + $0x3a0] sm:$0xff]
    %v157 = vld [vmem:[#allocation2 + $0x3a8] sm:$0xff]
    %v158 = vld [vmem:[#allocation2 + $0x3b0] sm:$0xff]
    %v159 = vld [vmem:[#allocation2 + $0x3b8] sm:$0xff]
    %v160 = vld [vmem:[#allocation2 + $0x3c0] sm:$0xff]
    %v161 = vld [vmem:[#allocation2 + $0x3c8] sm:$0xff]
    %v162 = vld [vmem:[#allocation2 + $0x3d0] sm:$0xff]
    %v163 = vld [vmem:[#allocation2 + $0x3d8] sm:$0xff]
    %v164 = vld [vmem:[#allocation2 + $0x3e0] sm:$0xff]
    %v165 = vld [vmem:[#allocation2 + $0x3e8] sm:$0xff]
    %v166 = vld [vmem:[#allocation2 + $0x3f0] sm:$0xff]
    %v167 = vld [vmem:[#allocation2 + $0x3f8] sm:$0xff]
    %v168 = vld [vmem:[#allocation2 + $0x400] sm:$0xff]
    %v169 = vld [vmem:[#allocation2 + $0x408] sm:$0xff]
    %v170 = vld [vmem:[#allocation2 + $0x410] sm:$0xff]
    %v171 = vld [vmem:[#allocation2 + $0x418] sm:$0xff]
    %v172 = vld [vmem:[#allocation2 + $0x420] sm:$0xff]
    %v173 = vld [vmem:[#allocation2 + $0x428] sm:$0xff]
    %v174 = vld [vmem:[#allocation2 + $0x430] sm:$0xff]
    %v175 = vld [vmem:[#allocation2 + $0x438] sm:$0xff]
    %v176 = vld [vmem:[#allocation2 + $0x440] sm:$0xff]
    %v177 = vld [vmem:[#allocation2 + $0x448] sm:$0xff]
    %v178 = vld [vmem:[#allocation2 + $0x450] sm:$0xff]
    %v179 = vld [vmem:[#allocation2 + $0x458] sm:$0xff]
    %v180 = vld [vmem:[#allocation2 + $0x460] sm:$0xff]
    %v181 = vld [vmem:[#allocation2 + $0x468] sm:$0xff]
    %v182 = vld [vmem:[#allocation2 + $0x470] sm:$0xff]
    %v183 = vld [vmem:[#allocation2 + $0x478] sm:$0xff]
    %v184 = vld [vmem:[#allocation2 + $0x480] sm:$0xff]
    %v185 = vld [vmem:[#allocation2 + $0x488] sm:$0xff]
    %v186 = vld [vmem:[#allocation2 + $0x490] sm:$0xff]
    %v187 = vld [vmem:[#allocation2 + $0x498] sm:$0xff]
    %v188 = vld [vmem:[#allocation2 + $0x4a0] sm:$0xff]
    %v189 = vld [vmem:[#allocation2 + $0x4a8] sm:$0xff]
    %v190 = vld [vmem:[#allocation2 + $0x4b0] sm:$0xff]
    %v191 = vld [vmem:[#allocation2 + $0x4b8] sm:$0xff]
    %v192 = vld [vmem:[#allocation2 + $0x4c0] sm:$0xff]
    %v193 = vld [vmem:[#allocation2 + $0x4c8] sm:$0xff]
    %v194 = vld [vmem:[#allocation2 + $0x4d0] sm:$0xff]
    %v195 = vld [vmem:[#allocation2 + $0x4d8] sm:$0xff]
    %v196 = vld [vmem:[#allocation2 + $0x4e0] sm:$0xff]
    %v197 = vld [vmem:[#allocation2 + $0x4e8] sm:$0xff]
    %v198 = vld [vmem:[#allocation2 + $0x4f0] sm:$0xff]
    %v199 = vld [vmem:[#allocation2 + $0x4f8] sm:$0xff]
    %v200 = vld [vmem:[#allocation2 + $0x500] sm:$0xff]
    %v201 = vld [vmem:[#allocation2 + $0x508] sm:$0xff]
    %v202 = vld [vmem:[#allocation2 + $0x510] sm:$0xff]
    %v203 = vld [vmem:[#allocation2 + $0x518] sm:$0xff]
    %v204 = vld [vmem:[#allocation2 + $0x520] sm:$0xff]
    %v205 = vld [vmem:[#allocation2 + $0x528] sm:$0xff]
    %v206 = vld [vmem:[#allocation2 + $0x530] sm:$0xff]
    %v207 = vld [vmem:[#allocation2 + $0x538] sm:$0xff]
    %v208 = vld [vmem:[#allocation2 + $0x540] sm:$0xff]
    %v209 = vld [vmem:[#allocation2 + $0x548] sm:$0xff]
    %v210 = vld [vmem:[#allocation2 + $0x550] sm:$0xff]
    %v211 = vld [vmem:[#allocation2 + $0x558] sm:$0xff]
    %v212 = vld [vmem:[#allocation2 + $0x560] sm:$0xff]
    %v213 = vld [vmem:[#allocation2 + $0x568] sm:$0xff]
    %v214 = vld [vmem:[#allocation2 + $0x570] sm:$0xff]
    %v215 = vld [vmem:[#allocation2 + $0x578] sm:$0xff]
    %v216 = vld [vmem:[#allocation2 + $0x580] sm:$0xff]
    %v217 = vld [vmem:[#allocation2 + $0x588] sm:$0xff]
    %v218 = vld [vmem:[#allocation2 + $0x590] sm:$0xff]
    %v219 = vld [vmem:[#allocation2 + $0x598] sm:$0xff]
    %v220 = vld [vmem:[#allocation2 + $0x5a0] sm:$0xff]
    %v221 = vld [vmem:[#allocation2 + $0x5a8] sm:$0xff]
    %v222 = vld [vmem:[#allocation2 + $0x5b0] sm:$0xff]
    %v223 = vld [vmem:[#allocation2 + $0x5b8] sm:$0xff]
    %v224 = vld [vmem:[#allocation2 + $0x5c0] sm:$0xff]
    %v225 = vld [vmem:[#allocation2 + $0x5c8] sm:$0xff]
    %v226 = vld [vmem:[#allocation2 + $0x5d0] sm:$0xff]
    %v227 = vld [vmem:[#allocation2 + $0x5d8] sm:$0xff]
    %v228 = vld [vmem:[#allocation2 + $0x5e0] sm:$0xff]
    %v229 = vld [vmem:[#allocation2 + $0x5e8] sm:$0xff]
    %v230 = vld [vmem:[#allocation2 + $0x5f0] sm:$0xff]
    %v231 = vld [vmem:[#allocation2 + $0x5f8] sm:$0xff]
    %v232 = vld [vmem:[#allocation4] sm:$0xf]
    %v233 = vld [vmem:[#allocation4 + $0x4] sm:$0xf]
    %v234 = vld [vmem:[#allocation4 + $0x8] sm:$0xf]
    %v235 = vld [vmem:[#allocation4 + $0xc] sm:$0xf]
    %v236 = vld [vmem:[#allocation4 + $0x10] sm:$0xf]
    %v237 = vld [vmem:[#allocation4 + $0x14] sm:$0xf]
    %v238 = vld [vmem:[#allocation4 + $0x18] sm:$0xf]
    %v239 = vld [vmem:[#allocation4 + $0x1c] sm:$0xf]
    %v240 = vld [vmem:[#allocation4 + $0x20] sm:$0xf]
    %v241 = vld [vmem:[#allocation4 + $0x24] sm:$0xf]
    %v242 = vld [vmem:[#allocation4 + $0x28] sm:$0xf]
    %v243 = vld [vmem:[#allocation4 + $0x2c] sm:$0xf]
    %v244 = vld [vmem:[#allocation4 + $0x30] sm:$0xf]
    %v245 = vld [vmem:[#allocation4 + $0x34] sm:$0xf]
    %v246 = vld [vmem:[#allocation4 + $0x38] sm:$0xf]
    %v247 = vld [vmem:[#allocation4 + $0x3c] sm:$0xf]
    %v248 = vld [vmem:[#allocation4 + $0x40] sm:$0xf]
    %v249 = vld [vmem:[#allocation4 + $0x44] sm:$0xf]
    %v250 = vld [vmem:[#allocation4 + $0x48] sm:$0xf]
    %v251 = vld [vmem:[#allocation4 + $0x4c] sm:$0xf]
    %v252 = vld [vmem:[#allocation4 + $0x50] sm:$0xf]
    %v253 = vld [vmem:[#allocation4 + $0x54] sm:$0xf]
    %v254 = vld [vmem:[#allocation4 + $0x58] sm:$0xf]
    %v255 = vld [vmem:[#allocation4 + $0x5c] sm:$0xf]
    %v256 = vld [vmem:[#allocation4 + $0x60] sm:$0xf]
    %v257 = vld [vmem:[#allocation4 + $0x64] sm:$0xf]
    %v258 = vld [vmem:[#allocation4 + $0x68] sm:$0xf]
    %v259 = vld [vmem:[#allocation4 + $0x6c] sm:$0xf]
    %v260 = vld [vmem:[#allocation4 + $0x70] sm:$0xf]
    %v261 = vld [vmem:[#allocation4 + $0x74] sm:$0xf]
    %v262 = vld [vmem:[#allocation4 + $0x78] sm:$0xf]
    %v263 = vld [vmem:[#allocation4 + $0x7c] sm:$0xf]
    %v264 = vld [vmem:[#allocation4 + $0x80] sm:$0xf]
    %v265 = vld [vmem:[#allocation4 + $0x84] sm:$0xf]
    %v266 = vld [vmem:[#allocation4 + $0x88] sm:$0xf]
    %v267 = vld [vmem:[#allocation4 + $0x8c] sm:$0xf]
    %v268 = vld [vmem:[#allocation4 + $0x90] sm:$0xf]
    %v269 = vld [vmem:[#allocation4 + $0x94] sm:$0xf]
    %v270 = vld [vmem:[#allocation4 + $0x98] sm:$0xf]
    %v271 = vld [vmem:[#allocation4 + $0x9c] sm:$0xf]
    %v272 = vld [vmem:[#allocation4 + $0xa0] sm:$0xf]
    %v273 = vld [vmem:[#allocation4 + $0xa4] sm:$0xf]
    %v274 = vld [vmem:[#allocation4 + $0xa8] sm:$0xf]
    %v275 = vld [vmem:[#allocation4 + $0xac] sm:$0xf]
    %v276 = vld [vmem:[#allocation4 + $0xb0] sm:$0xf]
    %v277 = vld [vmem:[#allocation4 + $0xb4] sm:$0xf]
    %v278 = vld [vmem:[#allocation4 + $0xb8] sm:$0xf]
    %v279 = vld [vmem:[#allocation4 + $0xbc] sm:$0xf]
    %v280 = vld [vmem:[#allocation4 + $0xc0] sm:$0xf]
    %v281 = vld [vmem:[#allocation4 + $0xc4] sm:$0xf]
    %v282 = vld [vmem:[#allocation4 + $0xc8] sm:$0xf]
    %v283 = vld [vmem:[#allocation4 + $0xcc] sm:$0xf]
    %v284 = vld [vmem:[#allocation4 + $0xd0] sm:$0xf]
    %v285 = vld [vmem:[#allocation4 + $0xd4] sm:$0xf]
    %v286 = vld [vmem:[#allocation4 + $0xd8] sm:$0xf]
    %v287 = vld [vmem:[#allocation4 + $0xdc] sm:$0xf]
    %v288 = vld [vmem:[#allocation4 + $0xe0] sm:$0xf]
    %v289 = vld [vmem:[#allocation4 + $0xe4] sm:$0xf]
    %v290 = vld [vmem:[#allocation4 + $0xe8] sm:$0xf]
    %v291 = vld [vmem:[#allocation4 + $0xec] sm:$0xf]
    %v292 = vld [vmem:[#allocation4 + $0xf0] sm:$0xf]
    %v293 = vld [vmem:[#allocation4 + $0xf4] sm:$0xf]
    %v294 = vld [vmem:[#allocation4 + $0xf8] sm:$0xf]
    %v295 = vld [vmem:[#allocation4 + $0xfc] sm:$0xf]
    %v296 = vld [vmem:[#allocation4 + $0x100] sm:$0xf]
    %v297 = vld [vmem:[#allocation4 + $0x104] sm:$0xf]
    %v298 = vld [vmem:[#allocation4 + $0x108] sm:$0xf]
    %v299 = vld [vmem:[#allocation4 + $0x10c] sm:$0xf]
    %v300 = vld [vmem:[#allocation4 + $0x110] sm:$0xf]
    %v301 = vld [vmem:[#allocation4 + $0x114] sm:$0xf]
    %v302 = vld [vmem:[#allocation4 + $0x118] sm:$0xf]
    %v303 = vld [vmem:[#allocation4 + $0x11c] sm:$0xf]
    %v304 = vld [vmem:[#allocation4 + $0x120] sm:$0xf]
    %v305 = vld [vmem:[#allocation4 + $0x124] sm:$0xf]
    %v306 = vld [vmem:[#allocation4 + $0x128] sm:$0xf]
    %v307 = vld [vmem:[#allocation4 + $0x12c] sm:$0xf]
    %v308 = vld [vmem:[#allocation4 + $0x130] sm:$0xf]
    %v309 = vld [vmem:[#allocation4 + $0x134] sm:$0xf]
    %v310 = vld [vmem:[#allocation4 + $0x138] sm:$0xf]
    %v311 = vld [vmem:[#allocation4 + $0x13c] sm:$0xf]
    %v312 = vld [vmem:[#allocation4 + $0x140] sm:$0xf]
    %v313 = vld [vmem:[#allocation4 + $0x144] sm:$0xf]
    %v314 = vld [vmem:[#allocation4 + $0x148] sm:$0xf]
    %v315 = vld [vmem:[#allocation4 + $0x14c] sm:$0xf]
    %v316 = vld [vmem:[#allocation4 + $0x150] sm:$0xf]
    %v317 = vld [vmem:[#allocation4 + $0x154] sm:$0xf]
    %v318 = vld [vmem:[#allocation4 + $0x158] sm:$0xf]
    %v319 = vld [vmem:[#allocation4 + $0x15c] sm:$0xf]
    %v320 = vld [vmem:[#allocation4 + $0x160] sm:$0xf]
    %v321 = vld [vmem:[#allocation4 + $0x164] sm:$0xf]
    %v322 = vld [vmem:[#allocation4 + $0x168] sm:$0xf]
    %v323 = vld [vmem:[#allocation4 + $0x16c] sm:$0xf]
    %v324 = vld [vmem:[#allocation4 + $0x170] sm:$0xf]
    %v325 = vld [vmem:[#allocation4 + $0x174] sm:$0xf]
    %v326 = vld [vmem:[#allocation4 + $0x178] sm:$0xf]
    %v327 = vld [vmem:[#allocation4 + $0x17c] sm:$0xf]
    %v328 = vld [vmem:[#allocation4 + $0x180] sm:$0xf]
    %v329 = vld [vmem:[#allocation4 + $0x184] sm:$0xf]
    %v330 = vld [vmem:[#allocation4 + $0x188] sm:$0xf]
    %v331 = vld [vmem:[#allocation4 + $0x18c] sm:$0xf]
    %v332 = vld [vmem:[#allocation4 + $0x190] sm:$0xf]
    %v333 = vld [vmem:[#allocation4 + $0x194] sm:$0xf]
    %v334 = vld [vmem:[#allocation4 + $0x198] sm:$0xf]
    %v335 = vld [vmem:[#allocation4 + $0x19c] sm:$0xf]
    %v336 = vld [vmem:[#allocation4 + $0x1a0] sm:$0xf]
    %v337 = vld [vmem:[#allocation4 + $0x1a4] sm:$0xf]
    %v338 = vld [vmem:[#allocation4 + $0x1a8] sm:$0xf]
    %v339 = vld [vmem:[#allocation4 + $0x1ac] sm:$0xf]
    %v340 = vld [vmem:[#allocation4 + $0x1b0] sm:$0xf]
    %v341 = vld [vmem:[#allocation4 + $0x1b4] sm:$0xf]
    %v342 = vld [vmem:[#allocation4 + $0x1b8] sm:$0xf]
    %v343 = vld [vmem:[#allocation4 + $0x1bc] sm:$0xf]
    %v344 = vld [vmem:[#allocation4 + $0x1c0] sm:$0xf]
    %v345 = vld [vmem:[#allocation4 + $0x1c4] sm:$0xf]
    %v346 = vld [vmem:[#allocation4 + $0x1c8] sm:$0xf]
    %v347 = vld [vmem:[#allocation4 + $0x1cc] sm:$0xf]
    %v348 = vld [vmem:[#allocation4 + $0x1d0] sm:$0xf]
    %v349 = vld [vmem:[#allocation4 + $0x1d4] sm:$0xf]
    %v350 = vld [vmem:[#allocation4 + $0x1d8] sm:$0xf]
    %v351 = vld [vmem:[#allocation4 + $0x1dc] sm:$0xf]
    %v352 = vld [vmem:[#allocation4 + $0x1e0] sm:$0xf]
    %v353 = vld [vmem:[#allocation4 + $0x1e4] sm:$0xf]
    %v354 = vld [vmem:[#allocation4 + $0x1e8] sm:$0xf]
    %v355 = vld [vmem:[#allocation4 + $0x1ec] sm:$0xf]
    %v356 = vld [vmem:[#allocation4 + $0x1f0] sm:$0xf]
    %v357 = vld [vmem:[#allocation4 + $0x1f4] sm:$0xf]
    %v358 = vld [vmem:[#allocation4 + $0x1f8] sm:$0xf]
    %v359 = vld [vmem:[#allocation4 + $0x1fc] sm:$0xf]
    %v360 = vld [vmem:[#allocation4 + $0x200] sm:$0xf]
    %v361 = vld [vmem:[#allocation4 + $0x204] sm:$0xf]
    %v362 = vld [vmem:[#allocation4 + $0x208] sm:$0xf]
    %v363 = vld [vmem:[#allocation4 + $0x20c] sm:$0xf]
    %v364 = vld [vmem:[#allocation4 + $0x210] sm:$0xf]
    %v365 = vld [vmem:[#allocation4 + $0x214] sm:$0xf]
    %v366 = vld [vmem:[#allocation4 + $0x218] sm:$0xf]
    %v367 = vld [vmem:[#allocation4 + $0x21c] sm:$0xf]
    %v368 = vld [vmem:[#allocation4 + $0x220] sm:$0xf]
    %v369 = vld [vmem:[#allocation4 + $0x224] sm:$0xf]
    %v370 = vld [vmem:[#allocation4 + $0x228] sm:$0xf]
    %v371 = vld [vmem:[#allocation4 + $0x22c] sm:$0xf]
    %v372 = vld [vmem:[#allocation4 + $0x230] sm:$0xf]
    %v373 = vld [vmem:[#allocation4 + $0x234] sm:$0xf]
    %v374 = vld [vmem:[#allocation4 + $0x238] sm:$0xf]
    %v375 = vld [vmem:[#allocation4 + $0x23c] sm:$0xf]
    %v376 = vld [vmem:[#allocation4 + $0x240] sm:$0xf]
    %v377 = vld [vmem:[#allocation4 + $0x244] sm:$0xf]
    %v378 = vld [vmem:[#allocation4 + $0x248] sm:$0xf]
    %v379 = vld [vmem:[#allocation4 + $0x24c] sm:$0xf]
    %v380 = vld [vmem:[#allocation4 + $0x250] sm:$0xf]
    %v381 = vld [vmem:[#allocation4 + $0x254] sm:$0xf]
    %v382 = vld [vmem:[#allocation4 + $0x258] sm:$0xf]
    %v383 = vld [vmem:[#allocation4 + $0x25c] sm:$0xf]
    %v384 = vld [vmem:[#allocation4 + $0x260] sm:$0xf]
    %v385 = vld [vmem:[#allocation4 + $0x264] sm:$0xf]
    %v386 = vld [vmem:[#allocation4 + $0x268] sm:$0xf]
    %v387 = vld [vmem:[#allocation4 + $0x26c] sm:$0xf]
    %v388 = vld [vmem:[#allocation4 + $0x270] sm:$0xf]
    %v389 = vld [vmem:[#allocation4 + $0x274] sm:$0xf]
    %v390 = vld [vmem:[#allocation4 + $0x278] sm:$0xf]
    %v391 = vld [vmem:[#allocation4 + $0x27c] sm:$0xf]
    %v392 = vld [vmem:[#allocation4 + $0x280] sm:$0xf]
    %v393 = vld [vmem:[#allocation4 + $0x284] sm:$0xf]
    %v394 = vld [vmem:[#allocation4 + $0x288] sm:$0xf]
    %v395 = vld [vmem:[#allocation4 + $0x28c] sm:$0xf]
    %v396 = vld [vmem:[#allocation4 + $0x290] sm:$0xf]
    %v397 = vld [vmem:[#allocation4 + $0x294] sm:$0xf]
    %v398 = vld [vmem:[#allocation4 + $0x298] sm:$0xf]
    %v399 = vld [vmem:[#allocation4 + $0x29c] sm:$0xf]
    %v400 = vld [vmem:[#allocation4 + $0x2a0] sm:$0xf]
    %v401 = vld [vmem:[#allocation4 + $0x2a4] sm:$0xf]
    %v402 = vld [vmem:[#allocation4 + $0x2a8] sm:$0xf]
    %v403 = vld [vmem:[#allocation4 + $0x2ac] sm:$0xf]
    %v404 = vld [vmem:[#allocation4 + $0x2b0] sm:$0xf]
    %v405 = vld [vmem:[#allocation4 + $0x2b4] sm:$0xf]
    %v406 = vld [vmem:[#allocation4 + $0x2b8] sm:$0xf]
    %v407 = vld [vmem:[#allocation4 + $0x2bc] sm:$0xf]
    %v408 = vld [vmem:[#allocation4 + $0x2c0] sm:$0xf]
    %v409 = vld [vmem:[#allocation4 + $0x2c4] sm:$0xf]
    %v410 = vld [vmem:[#allocation4 + $0x2c8] sm:$0xf]
    %v411 = vld [vmem:[#allocation4 + $0x2cc] sm:$0xf]
    %v412 = vld [vmem:[#allocation4 + $0x2d0] sm:$0xf]
    %v413 = vld [vmem:[#allocation4 + $0x2d4] sm:$0xf]
    %v414 = vld [vmem:[#allocation4 + $0x2d8] sm:$0xf]
    %v415 = vld [vmem:[#allocation4 + $0x2dc] sm:$0xf]
    %v416 = vld [vmem:[#allocation4 + $0x2e0] sm:$0xf]
    %v417 = vld [vmem:[#allocation4 + $0x2e4] sm:$0xf]
    %v418 = vld [vmem:[#allocation4 + $0x2e8] sm:$0xf]
    %v419 = vld [vmem:[#allocation4 + $0x2ec] sm:$0xf]
    %v420 = vld [vmem:[#allocation4 + $0x2f0] sm:$0xf]
    %v421 = vld [vmem:[#allocation4 + $0x2f4] sm:$0xf]
    %v422 = vld [vmem:[#allocation4 + $0x2f8] sm:$0xf]
    %v423 = vld [vmem:[#allocation4 + $0x2fc] sm:$0xf]
    %v616 = vunpack.c.l.b16 %v40
    %v617 = vunpack.c.h.b16 %v40
    %v618 = vunpack.c.l.b16 %v41
    %v619 = vunpack.c.h.b16 %v41
    %v620 = vunpack.c.l.b16 %v42
    %v621 = vunpack.c.h.b16 %v42
    %v622 = vunpack.c.l.b16 %v43
    %v623 = vunpack.c.h.b16 %v43
    %v624 = vunpack.c.l.b16 %v44
    %v625 = vunpack.c.h.b16 %v44
    %v626 = vunpack.c.l.b16 %v45
    %v627 = vunpack.c.h.b16 %v45
    %v628 = vunpack.c.l.b16 %v46
    %v629 = vunpack.c.h.b16 %v46
    %v630 = vunpack.c.l.b16 %v47
    %v631 = vunpack.c.h.b16 %v47
    %v632 = vunpack.c.l.b16 %v48
    %v633 = vunpack.c.h.b16 %v48
    %v634 = vunpack.c.l.b16 %v49
    %v635 = vunpack.c.h.b16 %v49
    %v636 = vunpack.c.l.b16 %v50
    %v637 = vunpack.c.h.b16 %v50
    %v638 = vunpack.c.l.b16 %v51
    %v639 = vunpack.c.h.b16 %v51
    %v640 = vunpack.c.l.b16 %v52
    %v641 = vunpack.c.h.b16 %v52
    %v642 = vunpack.c.l.b16 %v53
    %v643 = vunpack.c.h.b16 %v53
    %v644 = vunpack.c.l.b16 %v54
    %v645 = vunpack.c.h.b16 %v54
    %v646 = vunpack.c.l.b16 %v55
    %v647 = vunpack.c.h.b16 %v55
    %v648 = vunpack.c.l.b16 %v56
    %v649 = vunpack.c.h.b16 %v56
    %v650 = vunpack.c.l.b16 %v57
    %v651 = vunpack.c.h.b16 %v57
    %v652 = vunpack.c.l.b16 %v58
    %v653 = vunpack.c.h.b16 %v58
    %v654 = vunpack.c.l.b16 %v59
    %v655 = vunpack.c.h.b16 %v59
    %v656 = vunpack.c.l.b16 %v60
    %v657 = vunpack.c.h.b16 %v60
    %v658 = vunpack.c.l.b16 %v61
    %v659 = vunpack.c.h.b16 %v61
    %v660 = vunpack.c.l.b16 %v62
    %v661 = vunpack.c.h.b16 %v62
    %v662 = vunpack.c.l.b16 %v63
    %v663 = vunpack.c.h.b16 %v63
    %v664 = vunpack.c.l.b16 %v64
    %v665 = vunpack.c.h.b16 %v64
    %v666 = vunpack.c.l.b16 %v65
    %v667 = vunpack.c.h.b16 %v65
    %v668 = vunpack.c.l.b16 %v66
    %v669 = vunpack.c.h.b16 %v66
    %v670 = vunpack.c.l.b16 %v67
    %v671 = vunpack.c.h.b16 %v67
    %v672 = vunpack.c.l.b16 %v68
    %v673 = vunpack.c.h.b16 %v68
    %v674 = vunpack.c.l.b16 %v69
    %v675 = vunpack.c.h.b16 %v69
    %v676 = vunpack.c.l.b16 %v70
    %v677 = vunpack.c.h.b16 %v70
    %v678 = vunpack.c.l.b16 %v71
    %v679 = vunpack.c.h.b16 %v71
    %v680 = vunpack.c.l.b16 %v72
    %v681 = vunpack.c.h.b16 %v72
    %v682 = vunpack.c.l.b16 %v73
    %v683 = vunpack.c.h.b16 %v73
    %v684 = vunpack.c.l.b16 %v74
    %v685 = vunpack.c.h.b16 %v74
    %v686 = vunpack.c.l.b16 %v75
    %v687 = vunpack.c.h.b16 %v75
    %v688 = vunpack.c.l.b16 %v76
    %v689 = vunpack.c.h.b16 %v76
    %v690 = vunpack.c.l.b16 %v77
    %v691 = vunpack.c.h.b16 %v77
    %v692 = vunpack.c.l.b16 %v78
    %v693 = vunpack.c.h.b16 %v78
    %v694 = vunpack.c.l.b16 %v79
    %v695 = vunpack.c.h.b16 %v79
    %v696 = vunpack.c.l.b16 %v80
    %v697 = vunpack.c.h.b16 %v80
    %v698 = vunpack.c.l.b16 %v81
    %v699 = vunpack.c.h.b16 %v81
    %v700 = vunpack.c.l.b16 %v82
    %v701 = vunpack.c.h.b16 %v82
    %v702 = vunpack.c.l.b16 %v83
    %v703 = vunpack.c.h.b16 %v83
    %v704 = vunpack.c.l.b16 %v84
    %v705 = vunpack.c.h.b16 %v84
    %v706 = vunpack.c.l.b16 %v85
    %v707 = vunpack.c.h.b16 %v85
    %v708 = vunpack.c.l.b16 %v86
    %v709 = vunpack.c.h.b16 %v86
    %v710 = vunpack.c.l.b16 %v87
    %v711 = vunpack.c.h.b16 %v87
    %v712 = vunpack.c.l.b16 %v88
    %v713 = vunpack.c.h.b16 %v88
    %v714 = vunpack.c.l.b16 %v89
    %v715 = vunpack.c.h.b16 %v89
    %v716 = vunpack.c.l.b16 %v90
    %v717 = vunpack.c.h.b16 %v90
    %v718 = vunpack.c.l.b16 %v91
    %v719 = vunpack.c.h.b16 %v91
    %v720 = vunpack.c.l.b16 %v92
    %v721 = vunpack.c.h.b16 %v92
    %v722 = vunpack.c.l.b16 %v93
    %v723 = vunpack.c.h.b16 %v93
    %v724 = vunpack.c.l.b16 %v94
    %v725 = vunpack.c.h.b16 %v94
    %v726 = vunpack.c.l.b16 %v95
    %v727 = vunpack.c.h.b16 %v95
    %v728 = vunpack.c.l.b16 %v96
    %v729 = vunpack.c.h.b16 %v96
    %v730 = vunpack.c.l.b16 %v97
    %v731 = vunpack.c.h.b16 %v97
    %v732 = vunpack.c.l.b16 %v98
    %v733 = vunpack.c.h.b16 %v98
    %v734 = vunpack.c.l.b16 %v99
    %v735 = vunpack.c.h.b16 %v99
    %v736 = vunpack.c.l.b16 %v100
    %v737 = vunpack.c.h.b16 %v100
    %v738 = vunpack.c.l.b16 %v101
    %v739 = vunpack.c.h.b16 %v101
    %v740 = vunpack.c.l.b16 %v102
    %v741 = vunpack.c.h.b16 %v102
    %v742 = vunpack.c.l.b16 %v103
    %v743 = vunpack.c.h.b16 %v103
    %v744 = vunpack.c.l.b16 %v104
    %v745 = vunpack.c.h.b16 %v104
    %v746 = vunpack.c.l.b16 %v105
    %v747 = vunpack.c.h.b16 %v105
    %v748 = vunpack.c.l.b16 %v106
    %v749 = vunpack.c.h.b16 %v106
    %v750 = vunpack.c.l.b16 %v107
    %v751 = vunpack.c.h.b16 %v107
    %v752 = vunpack.c.l.b16 %v108
    %v753 = vunpack.c.h.b16 %v108
    %v754 = vunpack.c.l.b16 %v109
    %v755 = vunpack.c.h.b16 %v109
    %v756 = vunpack.c.l.b16 %v110
    %v757 = vunpack.c.h.b16 %v110
    %v758 = vunpack.c.l.b16 %v111
    %v759 = vunpack.c.h.b16 %v111
    %v760 = vunpack.c.l.b16 %v112
    %v761 = vunpack.c.h.b16 %v112
    %v762 = vunpack.c.l.b16 %v113
    %v763 = vunpack.c.h.b16 %v113
    %v764 = vunpack.c.l.b16 %v114
    %v765 = vunpack.c.h.b16 %v114
    %v766 = vunpack.c.l.b16 %v115
    %v767 = vunpack.c.h.b16 %v115
    %v768 = vunpack.c.l.b16 %v116
    %v769 = vunpack.c.h.b16 %v116
    %v770 = vunpack.c.l.b16 %v117
    %v771 = vunpack.c.h.b16 %v117
    %v772 = vunpack.c.l.b16 %v118
    %v773 = vunpack.c.h.b16 %v118
    %v774 = vunpack.c.l.b16 %v119
    %v775 = vunpack.c.h.b16 %v119
    %v776 = vunpack.c.l.b16 %v120
    %v777 = vunpack.c.h.b16 %v120
    %v778 = vunpack.c.l.b16 %v121
    %v779 = vunpack.c.h.b16 %v121
    %v780 = vunpack.c.l.b16 %v122
    %v781 = vunpack.c.h.b16 %v122
    %v782 = vunpack.c.l.b16 %v123
    %v783 = vunpack.c.h.b16 %v123
    %v784 = vunpack.c.l.b16 %v124
    %v785 = vunpack.c.h.b16 %v124
    %v786 = vunpack.c.l.b16 %v125
    %v787 = vunpack.c.h.b16 %v125
    %v788 = vunpack.c.l.b16 %v126
    %v789 = vunpack.c.h.b16 %v126
    %v790 = vunpack.c.l.b16 %v127
    %v791 = vunpack.c.h.b16 %v127
    %v792 = vunpack.c.l.b16 %v128
    %v793 = vunpack.c.h.b16 %v128
    %v794 = vunpack.c.l.b16 %v129
    %v795 = vunpack.c.h.b16 %v129
    %v796 = vunpack.c.l.b16 %v130
    %v797 = vunpack.c.h.b16 %v130
    %v798 = vunpack.c.l.b16 %v131
    %v799 = vunpack.c.h.b16 %v131
    %v800 = vunpack.c.l.b16 %v132
    %v801 = vunpack.c.h.b16 %v132
    %v802 = vunpack.c.l.b16 %v133
    %v803 = vunpack.c.h.b16 %v133
    %v804 = vunpack.c.l.b16 %v134
    %v805 = vunpack.c.h.b16 %v134
    %v806 = vunpack.c.l.b16 %v135
    %v807 = vunpack.c.h.b16 %v135
    %v808 = vunpack.c.l.b16 %v136
    %v809 = vunpack.c.h.b16 %v136
    %v810 = vunpack.c.l.b16 %v137
    %v811 = vunpack.c.h.b16 %v137
    %v812 = vunpack.c.l.b16 %v138
    %v813 = vunpack.c.h.b16 %v138
    %v814 = vunpack.c.l.b16 %v139
    %v815 = vunpack.c.h.b16 %v139
    %v816 = vunpack.c.l.b16 %v140
    %v817 = vunpack.c.h.b16 %v140
    %v818 = vunpack.c.l.b16 %v141
    %v819 = vunpack.c.h.b16 %v141
    %v820 = vunpack.c.l.b16 %v142
    %v821 = vunpack.c.h.b16 %v142
    %v822 = vunpack.c.l.b16 %v143
    %v823 = vunpack.c.h.b16 %v143
    %v824 = vunpack.c.l.b16 %v144
    %v825 = vunpack.c.h.b16 %v144
    %v826 = vunpack.c.l.b16 %v145
    %v827 = vunpack.c.h.b16 %v145
    %v828 = vunpack.c.l.b16 %v146
    %v829 = vunpack.c.h.b16 %v146
    %v830 = vunpack.c.l.b16 %v147
    %v831 = vunpack.c.h.b16 %v147
    %v832 = vunpack.c.l.b16 %v148
    %v833 = vunpack.c.h.b16 %v148
    %v834 = vunpack.c.l.b16 %v149
    %v835 = vunpack.c.h.b16 %v149
    %v836 = vunpack.c.l.b16 %v150
    %v837 = vunpack.c.h.b16 %v150
    %v838 = vunpack.c.l.b16 %v151
    %v839 = vunpack.c.h.b16 %v151
    %v840 = vunpack.c.l.b16 %v152
    %v841 = vunpack.c.h.b16 %v152
    %v842 = vunpack.c.l.b16 %v153
    %v843 = vunpack.c.h.b16 %v153
    %v844 = vunpack.c.l.b16 %v154
    %v845 = vunpack.c.h.b16 %v154
    %v846 = vunpack.c.l.b16 %v155
    %v847 = vunpack.c.h.b16 %v155
    %v848 = vunpack.c.l.b16 %v156
    %v849 = vunpack.c.h.b16 %v156
    %v850 = vunpack.c.l.b16 %v157
    %v851 = vunpack.c.h.b16 %v157
    %v852 = vunpack.c.l.b16 %v158
    %v853 = vunpack.c.h.b16 %v158
    %v854 = vunpack.c.l.b16 %v159
    %v855 = vunpack.c.h.b16 %v159
    %v856 = vunpack.c.l.b16 %v160
    %v857 = vunpack.c.h.b16 %v160
    %v858 = vunpack.c.l.b16 %v161
    %v859 = vunpack.c.h.b16 %v161
    %v860 = vunpack.c.l.b16 %v162
    %v861 = vunpack.c.h.b16 %v162
    %v862 = vunpack.c.l.b16 %v163
    %v863 = vunpack.c.h.b16 %v163
    %v864 = vunpack.c.l.b16 %v164
    %v865 = vunpack.c.h.b16 %v164
    %v866 = vunpack.c.l.b16 %v165
    %v867 = vunpack.c.h.b16 %v165
    %v868 = vunpack.c.l.b16 %v166
    %v869 = vunpack.c.h.b16 %v166
    %v870 = vunpack.c.l.b16 %v167
    %v871 = vunpack.c.h.b16 %v167
    %v872 = vunpack.c.l.b16 %v168
    %v873 = vunpack.c.h.b16 %v168
    %v874 = vunpack.c.l.b16 %v169
    %v875 = vunpack.c.h.b16 %v169
    %v876 = vunpack.c.l.b16 %v170
    %v877 = vunpack.c.h.b16 %v170
    %v878 = vunpack.c.l.b16 %v171
    %v879 = vunpack.c.h.b16 %v171
    %v880 = vunpack.c.l.b16 %v172
    %v881 = vunpack.c.h.b16 %v172
    %v882 = vunpack.c.l.b16 %v173
    %v883 = vunpack.c.h.b16 %v173
    %v884 = vunpack.c.l.b16 %v174
    %v885 = vunpack.c.h.b16 %v174
    %v886 = vunpack.c.l.b16 %v175
    %v887 = vunpack.c.h.b16 %v175
    %v888 = vunpack.c.l.b16 %v176
    %v889 = vunpack.c.h.b16 %v176
    %v890 = vunpack.c.l.b16 %v177
    %v891 = vunpack.c.h.b16 %v177
    %v892 = vunpack.c.l.b16 %v178
    %v893 = vunpack.c.h.b16 %v178
    %v894 = vunpack.c.l.b16 %v179
    %v895 = vunpack.c.h.b16 %v179
    %v896 = vunpack.c.l.b16 %v180
    %v897 = vunpack.c.h.b16 %v180
    %v898 = vunpack.c.l.b16 %v181
    %v899 = vunpack.c.h.b16 %v181
    %v900 = vunpack.c.l.b16 %v182
    %v901 = vunpack.c.h.b16 %v182
    %v902 = vunpack.c.l.b16 %v183
    %v903 = vunpack.c.h.b16 %v183
    %v904 = vunpack.c.l.b16 %v184
    %v905 = vunpack.c.h.b16 %v184
    %v906 = vunpack.c.l.b16 %v185
    %v907 = vunpack.c.h.b16 %v185
    %v908 = vunpack.c.l.b16 %v186
    %v909 = vunpack.c.h.b16 %v186
    %v910 = vunpack.c.l.b16 %v187
    %v911 = vunpack.c.h.b16 %v187
    %v912 = vunpack.c.l.b16 %v188
    %v913 = vunpack.c.h.b16 %v188
    %v914 = vunpack.c.l.b16 %v189
    %v915 = vunpack.c.h.b16 %v189
    %v916 = vunpack.c.l.b16 %v190
    %v917 = vunpack.c.h.b16 %v190
    %v918 = vunpack.c.l.b16 %v191
    %v919 = vunpack.c.h.b16 %v191
    %v920 = vunpack.c.l.b16 %v192
    %v921 = vunpack.c.h.b16 %v192
    %v922 = vunpack.c.l.b16 %v193
    %v923 = vunpack.c.h.b16 %v193
    %v924 = vunpack.c.l.b16 %v194
    %v925 = vunpack.c.h.b16 %v194
    %v926 = vunpack.c.l.b16 %v195
    %v927 = vunpack.c.h.b16 %v195
    %v928 = vunpack.c.l.b16 %v196
    %v929 = vunpack.c.h.b16 %v196
    %v930 = vunpack.c.l.b16 %v197
    %v931 = vunpack.c.h.b16 %v197
    %v932 = vunpack.c.l.b16 %v198
    %v933 = vunpack.c.h.b16 %v198
    %v934 = vunpack.c.l.b16 %v199
    %v935 = vunpack.c.h.b16 %v199
    %v936 = vunpack.c.l.b16 %v200
    %v937 = vunpack.c.h.b16 %v200
    %v938 = vunpack.c.l.b16 %v201
    %v939 = vunpack.c.h.b16 %v201
    %v940 = vunpack.c.l.b16 %v202
    %v941 = vunpack.c.h.b16 %v202
    %v942 = vunpack.c.l.b16 %v203
    %v943 = vunpack.c.h.b16 %v203
    %v944 = vunpack.c.l.b16 %v204
    %v945 = vunpack.c.h.b16 %v204
    %v946 = vunpack.c.l.b16 %v205
    %v947 = vunpack.c.h.b16 %v205
    %v948 = vunpack.c.l.b16 %v206
    %v949 = vunpack.c.h.b16 %v206
    %v950 = vunpack.c.l.b16 %v207
    %v951 = vunpack.c.h.b16 %v207
    %v952 = vunpack.c.l.b16 %v208
    %v953 = vunpack.c.h.b16 %v208
    %v954 = vunpack.c.l.b16 %v209
    %v955 = vunpack.c.h.b16 %v209
    %v956 = vunpack.c.l.b16 %v210
    %v957 = vunpack.c.h.b16 %v210
    %v958 = vunpack.c.l.b16 %v211
    %v959 = vunpack.c.h.b16 %v211
    %v960 = vunpack.c.l.b16 %v212
    %v961 = vunpack.c.h.b16 %v212
    %v962 = vunpack.c.l.b16 %v213
    %v963 = vunpack.c.h.b16 %v213
    %v964 = vunpack.c.l.b16 %v214
    %v965 = vunpack.c.h.b16 %v214
    %v966 = vunpack.c.l.b16 %v215
    %v967 = vunpack.c.h.b16 %v215
    %v968 = vunpack.c.l.b16 %v216
    %v969 = vunpack.c.h.b16 %v216
    %v970 = vunpack.c.l.b16 %v217
    %v971 = vunpack.c.h.b16 %v217
    %v972 = vunpack.c.l.b16 %v218
    %v973 = vunpack.c.h.b16 %v218
    %v974 = vunpack.c.l.b16 %v219
    %v975 = vunpack.c.h.b16 %v219
    %v976 = vunpack.c.l.b16 %v220
    %v977 = vunpack.c.h.b16 %v220
    %v978 = vunpack.c.l.b16 %v221
    %v979 = vunpack.c.h.b16 %v221
    %v980 = vunpack.c.l.b16 %v222
    %v981 = vunpack.c.h.b16 %v222
    %v982 = vunpack.c.l.b16 %v223
    %v983 = vunpack.c.h.b16 %v223
    %v984 = vunpack.c.l.b16 %v224
    %v985 = vunpack.c.h.b16 %v224
    %v986 = vunpack.c.l.b16 %v225
    %v987 = vunpack.c.h.b16 %v225
    %v988 = vunpack.c.l.b16 %v226
    %v989 = vunpack.c.h.b16 %v226
    %v990 = vunpack.c.l.b16 %v227
    %v991 = vunpack.c.h.b16 %v227
    %v992 = vunpack.c.l.b16 %v228
    %v993 = vunpack.c.h.b16 %v228
    %v994 = vunpack.c.l.b16 %v229
    %v995 = vunpack.c.h.b16 %v229
    %v996 = vunpack.c.l.b16 %v230
    %v997 = vunpack.c.h.b16 %v230
    %v998 = vunpack.c.l.b16 %v231
    %v999 = vunpack.c.h.b16 %v231
    %v1000 = vpack.c.b16 %v628, %v616
    %v1001 = vpack.c.b16 %v629, %v617
    %v1002 = vpack.c.b16 %v630, %v618
    %v1003 = vpack.c.b16 %v631, %v619
    %v1004 = vpack.c.b16 %v632, %v620
    %v1005 = vpack.c.b16 %v633, %v621
    %v1006 = vpack.c.b16 %v634, %v622
    %v1007 = vpack.c.b16 %v635, %v623
    %v1008 = vpack.c.b16 %v636, %v624
    %v1009 = vpack.c.b16 %v637, %v625
    %v1010 = vpack.c.b16 %v638, %v626
    %v1011 = vpack.c.b16 %v639, %v627
    %v1012 = vpack.c.b16 %v652, %v640
    %v1013 = vpack.c.b16 %v653, %v641
    %v1014 = vpack.c.b16 %v654, %v642
    %v1015 = vpack.c.b16 %v655, %v643
    %v1016 = vpack.c.b16 %v656, %v644
    %v1017 = vpack.c.b16 %v657, %v645
    %v1018 = vpack.c.b16 %v658, %v646
    %v1019 = vpack.c.b16 %v659, %v647
    %v1020 = vpack.c.b16 %v660, %v648
    %v1021 = vpack.c.b16 %v661, %v649
    %v1022 = vpack.c.b16 %v662, %v650
    %v1023 = vpack.c.b16 %v663, %v651
    %v1024 = vpack.c.b16 %v676, %v664
    %v1025 = vpack.c.b16 %v677, %v665
    %v1026 = vpack.c.b16 %v678, %v666
    %v1027 = vpack.c.b16 %v679, %v667
    %v1028 = vpack.c.b16 %v680, %v668
    %v1029 = vpack.c.b16 %v681, %v669
    %v1030 = vpack.c.b16 %v682, %v670
    %v1031 = vpack.c.b16 %v683, %v671
    %v1032 = vpack.c.b16 %v684, %v672
    %v1033 = vpack.c.b16 %v685, %v673
    %v1034 = vpack.c.b16 %v686, %v674
    %v1035 = vpack.c.b16 %v687, %v675
    %v1036 = vpack.c.b16 %v700, %v688
    %v1037 = vpack.c.b16 %v701, %v689
    %v1038 = vpack.c.b16 %v702, %v690
    %v1039 = vpack.c.b16 %v703, %v691
    %v1040 = vpack.c.b16 %v704, %v692
    %v1041 = vpack.c.b16 %v705, %v693
    %v1042 = vpack.c.b16 %v706, %v694
    %v1043 = vpack.c.b16 %v707, %v695
    %v1044 = vpack.c.b16 %v708, %v696
    %v1045 = vpack.c.b16 %v709, %v697
    %v1046 = vpack.c.b16 %v710, %v698
    %v1047 = vpack.c.b16 %v711, %v699
    %v1048 = vpack.c.b16 %v724, %v712
    %v1049 = vpack.c.b16 %v725, %v713
    %v1050 = vpack.c.b16 %v726, %v714
    %v1051 = vpack.c.b16 %v727, %v715
    %v1052 = vpack.c.b16 %v728, %v716
    %v1053 = vpack.c.b16 %v729, %v717
    %v1054 = vpack.c.b16 %v730, %v718
    %v1055 = vpack.c.b16 %v731, %v719
    %v1056 = vpack.c.b16 %v732, %v720
    %v1057 = vpack.c.b16 %v733, %v721
    %v1058 = vpack.c.b16 %v734, %v722
    %v1059 = vpack.c.b16 %v735, %v723
    %v1060 = vpack.c.b16 %v748, %v736
    %v1061 = vpack.c.b16 %v749, %v737
    %v1062 = vpack.c.b16 %v750, %v738
    %v1063 = vpack.c.b16 %v751, %v739
    %v1064 = vpack.c.b16 %v752, %v740
    %v1065 = vpack.c.b16 %v753, %v741
    %v1066 = vpack.c.b16 %v754, %v742
    %v1067 = vpack.c.b16 %v755, %v743
    %v1068 = vpack.c.b16 %v756, %v744
    %v1069 = vpack.c.b16 %v757, %v745
    %v1070 = vpack.c.b16 %v758, %v746
    %v1071 = vpack.c.b16 %v759, %v747
    %v1072 = vpack.c.b16 %v772, %v760
    %v1073 = vpack.c.b16 %v773, %v761
    %v1074 = vpack.c.b16 %v774, %v762
    %v1075 = vpack.c.b16 %v775, %v763
    %v1076 = vpack.c.b16 %v776, %v764
    %v1077 = vpack.c.b16 %v777, %v765
    %v1078 = vpack.c.b16 %v778, %v766
    %v1079 = vpack.c.b16 %v779, %v767
    %v1080 = vpack.c.b16 %v780, %v768
    %v1081 = vpack.c.b16 %v781, %v769
    %v1082 = vpack.c.b16 %v782, %v770
    %v1083 = vpack.c.b16 %v783, %v771
    %v1084 = vpack.c.b16 %v796, %v784
    %v1085 = vpack.c.b16 %v797, %v785
    %v1086 = vpack.c.b16 %v798, %v786
    %v1087 = vpack.c.b16 %v799, %v787
    %v1088 = vpack.c.b16 %v800, %v788
    %v1089 = vpack.c.b16 %v801, %v789
    %v1090 = vpack.c.b16 %v802, %v790
    %v1091 = vpack.c.b16 %v803, %v791
    %v1092 = vpack.c.b16 %v804, %v792
    %v1093 = vpack.c.b16 %v805, %v793
    %v1094 = vpack.c.b16 %v806, %v794
    %v1095 = vpack.c.b16 %v807, %v795
    %v1096 = vpack.c.b16 %v820, %v808
    %v1097 = vpack.c.b16 %v821, %v809
    %v1098 = vpack.c.b16 %v822, %v810
    %v1099 = vpack.c.b16 %v823, %v811
    %v1100 = vpack.c.b16 %v824, %v812
    %v1101 = vpack.c.b16 %v825, %v813
    %v1102 = vpack.c.b16 %v826, %v814
    %v1103 = vpack.c.b16 %v827, %v815
    %v1104 = vpack.c.b16 %v828, %v816
    %v1105 = vpack.c.b16 %v829, %v817
    %v1106 = vpack.c.b16 %v830, %v818
    %v1107 = vpack.c.b16 %v831, %v819
    %v1108 = vpack.c.b16 %v844, %v832
    %v1109 = vpack.c.b16 %v845, %v833
    %v1110 = vpack.c.b16 %v846, %v834
    %v1111 = vpack.c.b16 %v847, %v835
    %v1112 = vpack.c.b16 %v848, %v836
    %v1113 = vpack.c.b16 %v849, %v837
    %v1114 = vpack.c.b16 %v850, %v838
    %v1115 = vpack.c.b16 %v851, %v839
    %v1116 = vpack.c.b16 %v852, %v840
    %v1117 = vpack.c.b16 %v853, %v841
    %v1118 = vpack.c.b16 %v854, %v842
    %v1119 = vpack.c.b16 %v855, %v843
    %v1120 = vpack.c.b16 %v868, %v856
    %v1121 = vpack.c.b16 %v869, %v857
    %v1122 = vpack.c.b16 %v870, %v858
    %v1123 = vpack.c.b16 %v871, %v859
    %v1124 = vpack.c.b16 %v872, %v860
    %v1125 = vpack.c.b16 %v873, %v861
    %v1126 = vpack.c.b16 %v874, %v862
    %v1127 = vpack.c.b16 %v875, %v863
    %v1128 = vpack.c.b16 %v876, %v864
    %v1129 = vpack.c.b16 %v877, %v865
    %v1130 = vpack.c.b16 %v878, %v866
    %v1131 = vpack.c.b16 %v879, %v867
    %v1132 = vpack.c.b16 %v892, %v880
    %v1133 = vpack.c.b16 %v893, %v881
    %v1134 = vpack.c.b16 %v894, %v882
    %v1135 = vpack.c.b16 %v895, %v883
    %v1136 = vpack.c.b16 %v896, %v884
    %v1137 = vpack.c.b16 %v897, %v885
    %v1138 = vpack.c.b16 %v898, %v886
    %v1139 = vpack.c.b16 %v899, %v887
    %v1140 = vpack.c.b16 %v900, %v888
    %v1141 = vpack.c.b16 %v901, %v889
    %v1142 = vpack.c.b16 %v902, %v890
    %v1143 = vpack.c.b16 %v903, %v891
    %v1144 = vpack.c.b16 %v916, %v904
    %v1145 = vpack.c.b16 %v917, %v905
    %v1146 = vpack.c.b16 %v918, %v906
    %v1147 = vpack.c.b16 %v919, %v907
    %v1148 = vpack.c.b16 %v920, %v908
    %v1149 = vpack.c.b16 %v921, %v909
    %v1150 = vpack.c.b16 %v922, %v910
    %v1151 = vpack.c.b16 %v923, %v911
    %v1152 = vpack.c.b16 %v924, %v912
    %v1153 = vpack.c.b16 %v925, %v913
    %v1154 = vpack.c.b16 %v926, %v914
    %v1155 = vpack.c.b16 %v927, %v915
    %v1156 = vpack.c.b16 %v940, %v928
    %v1157 = vpack.c.b16 %v941, %v929
    %v1158 = vpack.c.b16 %v942, %v930
    %v1159 = vpack.c.b16 %v943, %v931
    %v1160 = vpack.c.b16 %v944, %v932
    %v1161 = vpack.c.b16 %v945, %v933
    %v1162 = vpack.c.b16 %v946, %v934
    %v1163 = vpack.c.b16 %v947, %v935
    %v1164 = vpack.c.b16 %v948, %v936
    %v1165 = vpack.c.b16 %v949, %v937
    %v1166 = vpack.c.b16 %v950, %v938
    %v1167 = vpack.c.b16 %v951, %v939
    %v1168 = vpack.c.b16 %v964, %v952
    %v1169 = vpack.c.b16 %v965, %v953
    %v1170 = vpack.c.b16 %v966, %v954
    %v1171 = vpack.c.b16 %v967, %v955
    %v1172 = vpack.c.b16 %v968, %v956
    %v1173 = vpack.c.b16 %v969, %v957
    %v1174 = vpack.c.b16 %v970, %v958
    %v1175 = vpack.c.b16 %v971, %v959
    %v1176 = vpack.c.b16 %v972, %v960
    %v1177 = vpack.c.b16 %v973, %v961
    %v1178 = vpack.c.b16 %v974, %v962
    %v1179 = vpack.c.b16 %v975, %v963
    %v1180 = vpack.c.b16 %v988, %v976
    %v1181 = vpack.c.b16 %v989, %v977
    %v1182 = vpack.c.b16 %v990, %v978
    %v1183 = vpack.c.b16 %v991, %v979
    %v1184 = vpack.c.b16 %v992, %v980
    %v1185 = vpack.c.b16 %v993, %v981
    %v1186 = vpack.c.b16 %v994, %v982
    %v1187 = vpack.c.b16 %v995, %v983
    %v1188 = vpack.c.b16 %v996, %v984
    %v1189 = vpack.c.b16 %v997, %v985
    %v1190 = vpack.c.b16 %v998, %v986
    %v1191 = vpack.c.b16 %v999, %v987
    %v1576 = vunpack.c.l.b16 %v232
    %v1577 = vunpack.c.l.b16 %v233
    %v1578 = vunpack.c.l.b16 %v234
    %v1579 = vunpack.c.l.b16 %v235
    %v1580 = vunpack.c.l.b16 %v236
    %v1581 = vunpack.c.l.b16 %v237
    %v1582 = vunpack.c.l.b16 %v238
    %v1583 = vunpack.c.l.b16 %v239
    %v1584 = vunpack.c.l.b16 %v240
    %v1585 = vunpack.c.l.b16 %v241
    %v1586 = vunpack.c.l.b16 %v242
    %v1587 = vunpack.c.l.b16 %v243
    %v1588 = vunpack.c.l.b16 %v244
    %v1589 = vunpack.c.l.b16 %v245
    %v1590 = vunpack.c.l.b16 %v246
    %v1591 = vunpack.c.l.b16 %v247
    %v1592 = vunpack.c.l.b16 %v248
    %v1593 = vunpack.c.l.b16 %v249
    %v1594 = vunpack.c.l.b16 %v250
    %v1595 = vunpack.c.l.b16 %v251
    %v1596 = vunpack.c.l.b16 %v252
    %v1597 = vunpack.c.l.b16 %v253
    %v1598 = vunpack.c.l.b16 %v254
    %v1599 = vunpack.c.l.b16 %v255
    %v1600 = vunpack.c.l.b16 %v256
    %v1601 = vunpack.c.l.b16 %v257
    %v1602 = vunpack.c.l.b16 %v258
    %v1603 = vunpack.c.l.b16 %v259
    %v1604 = vunpack.c.l.b16 %v260
    %v1605 = vunpack.c.l.b16 %v261
    %v1606 = vunpack.c.l.b16 %v262
    %v1607 = vunpack.c.l.b16 %v263
    %v1608 = vunpack.c.l.b16 %v264
    %v1609 = vunpack.c.l.b16 %v265
    %v1610 = vunpack.c.l.b16 %v266
    %v1611 = vunpack.c.l.b16 %v267
    %v1612 = vunpack.c.l.b16 %v268
    %v1613 = vunpack.c.l.b16 %v269
    %v1614 = vunpack.c.l.b16 %v270
    %v1615 = vunpack.c.l.b16 %v271
    %v1616 = vunpack.c.l.b16 %v272
    %v1617 = vunpack.c.l.b16 %v273
    %v1618 = vunpack.c.l.b16 %v274
    %v1619 = vunpack.c.l.b16 %v275
    %v1620 = vunpack.c.l.b16 %v276
    %v1621 = vunpack.c.l.b16 %v277
    %v1622 = vunpack.c.l.b16 %v278
    %v1623 = vunpack.c.l.b16 %v279
    %v1624 = vunpack.c.l.b16 %v280
    %v1625 = vunpack.c.l.b16 %v281
    %v1626 = vunpack.c.l.b16 %v282
    %v1627 = vunpack.c.l.b16 %v283
    %v1628 = vunpack.c.l.b16 %v284
    %v1629 = vunpack.c.l.b16 %v285
    %v1630 = vunpack.c.l.b16 %v286
    %v1631 = vunpack.c.l.b16 %v287
    %v1632 = vunpack.c.l.b16 %v288
    %v1633 = vunpack.c.l.b16 %v289
    %v1634 = vunpack.c.l.b16 %v290
    %v1635 = vunpack.c.l.b16 %v291
    %v1636 = vunpack.c.l.b16 %v292
    %v1637 = vunpack.c.l.b16 %v293
    %v1638 = vunpack.c.l.b16 %v294
    %v1639 = vunpack.c.l.b16 %v295
    %v1640 = vunpack.c.l.b16 %v296
    %v1641 = vunpack.c.l.b16 %v297
    %v1642 = vunpack.c.l.b16 %v298
    %v1643 = vunpack.c.l.b16 %v299
    %v1644 = vunpack.c.l.b16 %v300
    %v1645 = vunpack.c.l.b16 %v301
    %v1646 = vunpack.c.l.b16 %v302
    %v1647 = vunpack.c.l.b16 %v303
    %v1648 = vunpack.c.l.b16 %v304
    %v1649 = vunpack.c.l.b16 %v305
    %v1650 = vunpack.c.l.b16 %v306
    %v1651 = vunpack.c.l.b16 %v307
    %v1652 = vunpack.c.l.b16 %v308
    %v1653 = vunpack.c.l.b16 %v309
    %v1654 = vunpack.c.l.b16 %v310
    %v1655 = vunpack.c.l.b16 %v311
    %v1656 = vunpack.c.l.b16 %v312
    %v1657 = vunpack.c.l.b16 %v313
    %v1658 = vunpack.c.l.b16 %v314
    %v1659 = vunpack.c.l.b16 %v315
    %v1660 = vunpack.c.l.b16 %v316
    %v1661 = vunpack.c.l.b16 %v317
    %v1662 = vunpack.c.l.b16 %v318
    %v1663 = vunpack.c.l.b16 %v319
    %v1664 = vunpack.c.l.b16 %v320
    %v1665 = vunpack.c.l.b16 %v321
    %v1666 = vunpack.c.l.b16 %v322
    %v1667 = vunpack.c.l.b16 %v323
    %v1668 = vunpack.c.l.b16 %v324
    %v1669 = vunpack.c.l.b16 %v325
    %v1670 = vunpack.c.l.b16 %v326
    %v1671 = vunpack.c.l.b16 %v327
    %v1672 = vunpack.c.l.b16 %v328
    %v1673 = vunpack.c.l.b16 %v329
    %v1674 = vunpack.c.l.b16 %v330
    %v1675 = vunpack.c.l.b16 %v331
    %v1676 = vunpack.c.l.b16 %v332
    %v1677 = vunpack.c.l.b16 %v333
    %v1678 = vunpack.c.l.b16 %v334
    %v1679 = vunpack.c.l.b16 %v335
    %v1680 = vunpack.c.l.b16 %v336
    %v1681 = vunpack.c.l.b16 %v337
    %v1682 = vunpack.c.l.b16 %v338
    %v1683 = vunpack.c.l.b16 %v339
    %v1684 = vunpack.c.l.b16 %v340
    %v1685 = vunpack.c.l.b16 %v341
    %v1686 = vunpack.c.l.b16 %v342
    %v1687 = vunpack.c.l.b16 %v343
    %v1688 = vunpack.c.l.b16 %v344
    %v1689 = vunpack.c.l.b16 %v345
    %v1690 = vunpack.c.l.b16 %v346
    %v1691 = vunpack.c.l.b16 %v347
    %v1692 = vunpack.c.l.b16 %v348
    %v1693 = vunpack.c.l.b16 %v349
    %v1694 = vunpack.c.l.b16 %v350
    %v1695 = vunpack.c.l.b16 %v351
    %v1696 = vunpack.c.l.b16 %v352
    %v1697 = vunpack.c.l.b16 %v353
    %v1698 = vunpack.c.l.b16 %v354
    %v1699 = vunpack.c.l.b16 %v355
    %v1700 = vunpack.c.l.b16 %v356
    %v1701 = vunpack.c.l.b16 %v357
    %v1702 = vunpack.c.l.b16 %v358
    %v1703 = vunpack.c.l.b16 %v359
    %v1704 = vunpack.c.l.b16 %v360
    %v1705 = vunpack.c.l.b16 %v361
    %v1706 = vunpack.c.l.b16 %v362
    %v1707 = vunpack.c.l.b16 %v363
    %v1708 = vunpack.c.l.b16 %v364
    %v1709 = vunpack.c.l.b16 %v365
    %v1710 = vunpack.c.l.b16 %v366
    %v1711 = vunpack.c.l.b16 %v367
    %v1712 = vunpack.c.l.b16 %v368
    %v1713 = vunpack.c.l.b16 %v369
    %v1714 = vunpack.c.l.b16 %v370
    %v1715 = vunpack.c.l.b16 %v371
    %v1716 = vunpack.c.l.b16 %v372
    %v1717 = vunpack.c.l.b16 %v373
    %v1718 = vunpack.c.l.b16 %v374
    %v1719 = vunpack.c.l.b16 %v375
    %v1720 = vunpack.c.l.b16 %v376
    %v1721 = vunpack.c.l.b16 %v377
    %v1722 = vunpack.c.l.b16 %v378
    %v1723 = vunpack.c.l.b16 %v379
    %v1724 = vunpack.c.l.b16 %v380
    %v1725 = vunpack.c.l.b16 %v381
    %v1726 = vunpack.c.l.b16 %v382
    %v1727 = vunpack.c.l.b16 %v383
    %v1728 = vunpack.c.l.b16 %v384
    %v1729 = vunpack.c.l.b16 %v385
    %v1730 = vunpack.c.l.b16 %v386
    %v1731 = vunpack.c.l.b16 %v387
    %v1732 = vunpack.c.l.b16 %v388
    %v1733 = vunpack.c.l.b16 %v389
    %v1734 = vunpack.c.l.b16 %v390
    %v1735 = vunpack.c.l.b16 %v391
    %v1736 = vunpack.c.l.b16 %v392
    %v1737 = vunpack.c.l.b16 %v393
    %v1738 = vunpack.c.l.b16 %v394
    %v1739 = vunpack.c.l.b16 %v395
    %v1740 = vunpack.c.l.b16 %v396
    %v1741 = vunpack.c.l.b16 %v397
    %v1742 = vunpack.c.l.b16 %v398
    %v1743 = vunpack.c.l.b16 %v399
    %v1744 = vunpack.c.l.b16 %v400
    %v1745 = vunpack.c.l.b16 %v401
    %v1746 = vunpack.c.l.b16 %v402
    %v1747 = vunpack.c.l.b16 %v403
    %v1748 = vunpack.c.l.b16 %v404
    %v1749 = vunpack.c.l.b16 %v405
    %v1750 = vunpack.c.l.b16 %v406
    %v1751 = vunpack.c.l.b16 %v407
    %v1752 = vunpack.c.l.b16 %v408
    %v1753 = vunpack.c.l.b16 %v409
    %v1754 = vunpack.c.l.b16 %v410
    %v1755 = vunpack.c.l.b16 %v411
    %v1756 = vunpack.c.l.b16 %v412
    %v1757 = vunpack.c.l.b16 %v413
    %v1758 = vunpack.c.l.b16 %v414
    %v1759 = vunpack.c.l.b16 %v415
    %v1760 = vunpack.c.l.b16 %v416
    %v1761 = vunpack.c.l.b16 %v417
    %v1762 = vunpack.c.l.b16 %v418
    %v1763 = vunpack.c.l.b16 %v419
    %v1764 = vunpack.c.l.b16 %v420
    %v1765 = vunpack.c.l.b16 %v421
    %v1766 = vunpack.c.l.b16 %v422
    %v1767 = vunpack.c.l.b16 %v423
    %v1768 = vpack.c.b16 %v1577, %v1576
    %v1769 = vpack.c.b16 %v1579, %v1578
    %v1770 = vpack.c.b16 %v1581, %v1580
    %v1771 = vpack.c.b16 %v1583, %v1582
    %v1772 = vpack.c.b16 %v1585, %v1584
    %v1773 = vpack.c.b16 %v1587, %v1586
    %v1774 = vpack.c.b16 %v1589, %v1588
    %v1775 = vpack.c.b16 %v1591, %v1590
    %v1776 = vpack.c.b16 %v1593, %v1592
    %v1777 = vpack.c.b16 %v1595, %v1594
    %v1778 = vpack.c.b16 %v1597, %v1596
    %v1779 = vpack.c.b16 %v1599, %v1598
    %v1780 = vpack.c.b16 %v1601, %v1600
    %v1781 = vpack.c.b16 %v1603, %v1602
    %v1782 = vpack.c.b16 %v1605, %v1604
    %v1783 = vpack.c.b16 %v1607, %v1606
    %v1784 = vpack.c.b16 %v1609, %v1608
    %v1785 = vpack.c.b16 %v1611, %v1610
    %v1786 = vpack.c.b16 %v1613, %v1612
    %v1787 = vpack.c.b16 %v1615, %v1614
    %v1788 = vpack.c.b16 %v1617, %v1616
    %v1789 = vpack.c.b16 %v1619, %v1618
    %v1790 = vpack.c.b16 %v1621, %v1620
    %v1791 = vpack.c.b16 %v1623, %v1622
    %v1792 = vpack.c.b16 %v1625, %v1624
    %v1793 = vpack.c.b16 %v1627, %v1626
    %v1794 = vpack.c.b16 %v1629, %v1628
    %v1795 = vpack.c.b16 %v1631, %v1630
    %v1796 = vpack.c.b16 %v1633, %v1632
    %v1797 = vpack.c.b16 %v1635, %v1634
    %v1798 = vpack.c.b16 %v1637, %v1636
    %v1799 = vpack.c.b16 %v1639, %v1638
    %v1800 = vpack.c.b16 %v1641, %v1640
    %v1801 = vpack.c.b16 %v1643, %v1642
    %v1802 = vpack.c.b16 %v1645, %v1644
    %v1803 = vpack.c.b16 %v1647, %v1646
    %v1804 = vpack.c.b16 %v1649, %v1648
    %v1805 = vpack.c.b16 %v1651, %v1650
    %v1806 = vpack.c.b16 %v1653, %v1652
    %v1807 = vpack.c.b16 %v1655, %v1654
    %v1808 = vpack.c.b16 %v1657, %v1656
    %v1809 = vpack.c.b16 %v1659, %v1658
    %v1810 = vpack.c.b16 %v1661, %v1660
    %v1811 = vpack.c.b16 %v1663, %v1662
    %v1812 = vpack.c.b16 %v1665, %v1664
    %v1813 = vpack.c.b16 %v1667, %v1666
    %v1814 = vpack.c.b16 %v1669, %v1668
    %v1815 = vpack.c.b16 %v1671, %v1670
    %v1816 = vpack.c.b16 %v1673, %v1672
    %v1817 = vpack.c.b16 %v1675, %v1674
    %v1818 = vpack.c.b16 %v1677, %v1676
    %v1819 = vpack.c.b16 %v1679, %v1678
    %v1820 = vpack.c.b16 %v1681, %v1680
    %v1821 = vpack.c.b16 %v1683, %v1682
    %v1822 = vpack.c.b16 %v1685, %v1684
    %v1823 = vpack.c.b16 %v1687, %v1686
    %v1824 = vpack.c.b16 %v1689, %v1688
    %v1825 = vpack.c.b16 %v1691, %v1690
    %v1826 = vpack.c.b16 %v1693, %v1692
    %v1827 = vpack.c.b16 %v1695, %v1694
    %v1828 = vpack.c.b16 %v1697, %v1696
    %v1829 = vpack.c.b16 %v1699, %v1698
    %v1830 = vpack.c.b16 %v1701, %v1700
    %v1831 = vpack.c.b16 %v1703, %v1702
    %v1832 = vpack.c.b16 %v1705, %v1704
    %v1833 = vpack.c.b16 %v1707, %v1706
    %v1834 = vpack.c.b16 %v1709, %v1708
    %v1835 = vpack.c.b16 %v1711, %v1710
    %v1836 = vpack.c.b16 %v1713, %v1712
    %v1837 = vpack.c.b16 %v1715, %v1714
    %v1838 = vpack.c.b16 %v1717, %v1716
    %v1839 = vpack.c.b16 %v1719, %v1718
    %v1840 = vpack.c.b16 %v1721, %v1720
    %v1841 = vpack.c.b16 %v1723, %v1722
    %v1842 = vpack.c.b16 %v1725, %v1724
    %v1843 = vpack.c.b16 %v1727, %v1726
    %v1844 = vpack.c.b16 %v1729, %v1728
    %v1845 = vpack.c.b16 %v1731, %v1730
    %v1846 = vpack.c.b16 %v1733, %v1732
    %v1847 = vpack.c.b16 %v1735, %v1734
    %v1848 = vpack.c.b16 %v1737, %v1736
    %v1849 = vpack.c.b16 %v1739, %v1738
    %v1850 = vpack.c.b16 %v1741, %v1740
    %v1851 = vpack.c.b16 %v1743, %v1742
    %v1852 = vpack.c.b16 %v1745, %v1744
    %v1853 = vpack.c.b16 %v1747, %v1746
    %v1854 = vpack.c.b16 %v1749, %v1748
    %v1855 = vpack.c.b16 %v1751, %v1750
    %v1856 = vpack.c.b16 %v1753, %v1752
    %v1857 = vpack.c.b16 %v1755, %v1754
    %v1858 = vpack.c.b16 %v1757, %v1756
    %v1859 = vpack.c.b16 %v1759, %v1758
    %v1860 = vpack.c.b16 %v1761, %v1760
    %v1861 = vpack.c.b16 %v1763, %v1762
    %v1862 = vpack.c.b16 %v1765, %v1764
    %v1863 = vpack.c.b16 %v1767, %v1766
    %1960 = vmatprep.subr.bf16.mxu0 0
    %1961 = vmatpush1.bf16.msra.mxu0 %v1775
    %1962 = vmatprep.subr.bf16.mxu0 0
    %1963 = vmatpush1.bf16.msra.mxu0 %v1774
    %1964 = vmatprep.subr.bf16.mxu0 0
    %1965 = vmatpush1.bf16.msra.mxu0 %v1773
    %1966 = vmatprep.subr.bf16.mxu0 0
    %1967 = vmatpush1.bf16.msra.mxu0 %v1772
    %1968 = vmatprep.subr.bf16.mxu0 0
    %1969 = vmatpush1.bf16.msra.mxu0 %v1771
    %1970 = vmatprep.subr.bf16.mxu0 0
    %1971 = vmatpush1.bf16.msra.mxu0 %v1770
    %1972 = vmatprep.subr.bf16.mxu0 0
    %1973 = vmatpush1.bf16.msra.mxu0 %v1769
    %1974 = vmatprep.subr.bf16.mxu0 0
    %1975 = vmatpush1.bf16.msra.mxu0 %v1768
    %1976 = vmatprep.subr.bf16.mxu0 0
    %1977 = vmatpush2.bf16.msra.mxu0 %v1783
    %1978 = vmatprep.subr.bf16.mxu0 0
    %1979 = vmatpush2.bf16.msra.mxu0 %v1782
    %1980 = vmatprep.subr.bf16.mxu0 0
    %1981 = vmatpush2.bf16.msra.mxu0 %v1781
    %1982 = vmatprep.subr.bf16.mxu0 0
    %1983 = vmatpush2.bf16.msra.mxu0 %v1780
    %1984 = vmatprep.subr.bf16.mxu0 0
    %1985 = vmatpush2.bf16.msra.mxu0 %v1779
    %1986 = vmatprep.subr.bf16.mxu0 0
    %1987 = vmatpush2.bf16.msra.mxu0 %v1778
    %1988 = vmatprep.subr.bf16.mxu0 0
    %1989 = vmatpush2.bf16.msra.mxu0 %v1777
    %1990 = vmatprep.subr.bf16.mxu0 0
    %1991 = vmatpush2.bf16.msra.mxu0 %v1776
    %1992 = vmatprep.mubr.bf16.mxu0 %v1001
    %1993 = vmatmul.mubr.bf16.gmra.mxu0 %v1000
    %v1994 = vpop.f32.mrf.mxu0
    %v1995 = vadd.f32 0.0, %v1994
    %v1996 = vpop.f32.mrf.mxu0
    %v1997 = vpop.f32.mrf.mxu0
    %v1998 = vadd.f32 0.0, %v1997
    %v1999 = vpop.f32.mrf.mxu0
    %2000 = vmatprep.mubr.bf16.mxu0 %v1013
    %2001 = vmatmul.mubr.bf16.gmra.mxu0 %v1012
    %v2002 = vpop.f32.mrf.mxu0
    %v2003 = vadd.f32 0.0, %v2002
    %v2004 = vpop.f32.mrf.mxu0
    %v2005 = vpop.f32.mrf.mxu0
    %v2006 = vadd.f32 0.0, %v2005
    %v2007 = vpop.f32.mrf.mxu0
    %2008 = vmatprep.mubr.bf16.mxu0 %v1025
    %2009 = vmatmul.mubr.bf16.gmra.mxu0 %v1024
    %v2010 = vpop.f32.mrf.mxu0
    %v2011 = vadd.f32 0.0, %v2010
    %v2012 = vpop.f32.mrf.mxu0
    %v2013 = vpop.f32.mrf.mxu0
    %v2014 = vadd.f32 0.0, %v2013
    %v2015 = vpop.f32.mrf.mxu0
    %2016 = vmatprep.mubr.bf16.mxu0 %v1037
    %2017 = vmatmul.mubr.bf16.gmra.mxu0 %v1036
    %v2018 = vpop.f32.mrf.mxu0
    %v2019 = vadd.f32 0.0, %v2018
    %v2020 = vpop.f32.mrf.mxu0
    %v2021 = vpop.f32.mrf.mxu0
    %v2022 = vadd.f32 0.0, %v2021
    %v2023 = vpop.f32.mrf.mxu0
    %2024 = vmatprep.mubr.bf16.mxu0 %v1049
    %2025 = vmatmul.mubr.bf16.gmra.mxu0 %v1048
    %v2026 = vpop.f32.mrf.mxu0
    %v2027 = vadd.f32 0.0, %v2026
    %v2028 = vpop.f32.mrf.mxu0
    %v2029 = vpop.f32.mrf.mxu0
    %v2030 = vadd.f32 0.0, %v2029
    %v2031 = vpop.f32.mrf.mxu0
    %2032 = vmatprep.mubr.bf16.mxu0 %v1061
    %2033 = vmatmul.mubr.bf16.gmra.mxu0 %v1060
    %v2034 = vpop.f32.mrf.mxu0
    %v2035 = vadd.f32 0.0, %v2034
    %v2036 = vpop.f32.mrf.mxu0
    %v2037 = vpop.f32.mrf.mxu0
    %v2038 = vadd.f32 0.0, %v2037
    %v2039 = vpop.f32.mrf.mxu0
    %2040 = vmatprep.mubr.bf16.mxu0 %v1073
    %2041 = vmatmul.mubr.bf16.gmra.mxu0 %v1072
    %v2042 = vpop.f32.mrf.mxu0
    %v2043 = vadd.f32 0.0, %v2042
    %v2044 = vpop.f32.mrf.mxu0
    %v2045 = vpop.f32.mrf.mxu0
    %v2046 = vadd.f32 0.0, %v2045
    %v2047 = vpop.f32.mrf.mxu0
    %2048 = vmatprep.mubr.bf16.mxu0 %v1085
    %2049 = vmatmul.mubr.bf16.gmra.mxu0 %v1084
    %v2050 = vpop.f32.mrf.mxu0
    %v2051 = vadd.f32 0.0, %v2050
    %v2052 = vpop.f32.mrf.mxu0
    %v2053 = vpop.f32.mrf.mxu0
    %v2054 = vadd.f32 0.0, %v2053
    %v2055 = vpop.f32.mrf.mxu0
    %2056 = vmatprep.mubr.bf16.mxu0 %v1097
    %2057 = vmatmul.mubr.bf16.gmra.mxu0 %v1096
    %v2058 = vpop.f32.mrf.mxu0
    %v2059 = vadd.f32 0.0, %v2058
    %v2060 = vpop.f32.mrf.mxu0
    %v2061 = vpop.f32.mrf.mxu0
    %v2062 = vadd.f32 0.0, %v2061
    %v2063 = vpop.f32.mrf.mxu0
    %2064 = vmatprep.mubr.bf16.mxu0 %v1109
    %2065 = vmatmul.mubr.bf16.gmra.mxu0 %v1108
    %v2066 = vpop.f32.mrf.mxu0
    %v2067 = vadd.f32 0.0, %v2066
    %v2068 = vpop.f32.mrf.mxu0
    %v2069 = vpop.f32.mrf.mxu0
    %v2070 = vadd.f32 0.0, %v2069
    %v2071 = vpop.f32.mrf.mxu0
    %2072 = vmatprep.mubr.bf16.mxu0 %v1121
    %2073 = vmatmul.mubr.bf16.gmra.mxu0 %v1120
    %v2074 = vpop.f32.mrf.mxu0
    %v2075 = vadd.f32 0.0, %v2074
    %v2076 = vpop.f32.mrf.mxu0
    %v2077 = vpop.f32.mrf.mxu0
    %v2078 = vadd.f32 0.0, %v2077
    %v2079 = vpop.f32.mrf.mxu0
    %2080 = vmatprep.mubr.bf16.mxu0 %v1133
    %2081 = vmatmul.mubr.bf16.gmra.mxu0 %v1132
    %v2082 = vpop.f32.mrf.mxu0
    %v2083 = vadd.f32 0.0, %v2082
    %v2084 = vpop.f32.mrf.mxu0
    %v2085 = vpop.f32.mrf.mxu0
    %v2086 = vadd.f32 0.0, %v2085
    %v2087 = vpop.f32.mrf.mxu0
    %2088 = vmatprep.mubr.bf16.mxu0 %v1145
    %2089 = vmatmul.mubr.bf16.gmra.mxu0 %v1144
    %v2090 = vpop.f32.mrf.mxu0
    %v2091 = vadd.f32 0.0, %v2090
    %v2092 = vpop.f32.mrf.mxu0
    %v2093 = vpop.f32.mrf.mxu0
    %v2094 = vadd.f32 0.0, %v2093
    %v2095 = vpop.f32.mrf.mxu0
    %2096 = vmatprep.mubr.bf16.mxu0 %v1157
    %2097 = vmatmul.mubr.bf16.gmra.mxu0 %v1156
    %v2098 = vpop.f32.mrf.mxu0
    %v2099 = vadd.f32 0.0, %v2098
    %v2100 = vpop.f32.mrf.mxu0
    %v2101 = vpop.f32.mrf.mxu0
    %v2102 = vadd.f32 0.0, %v2101
    %v2103 = vpop.f32.mrf.mxu0
    %2104 = vmatprep.mubr.bf16.mxu0 %v1169
    %2105 = vmatmul.mubr.bf16.gmra.mxu0 %v1168
    %v2106 = vpop.f32.mrf.mxu0
    %v2107 = vadd.f32 0.0, %v2106
    %v2108 = vpop.f32.mrf.mxu0
    %v2109 = vpop.f32.mrf.mxu0
    %v2110 = vadd.f32 0.0, %v2109
    %v2111 = vpop.f32.mrf.mxu0
    %2112 = vmatprep.mubr.bf16.mxu0 %v1181
    %2113 = vmatmul.mubr.bf16.gmra.mxu0 %v1180
    %v2114 = vpop.f32.mrf.mxu0
    %v2115 = vadd.f32 0.0, %v2114
    %v2116 = vpop.f32.mrf.mxu0
    %v2117 = vpop.f32.mrf.mxu0
    %v2118 = vadd.f32 0.0, %v2117
    %v2119 = vpop.f32.mrf.mxu0
    %2120 = vdwg.mxu0
    %2121 = vmatprep.subr.bf16.mxu0 0
    %2122 = vmatpush1.bf16.msra.mxu0 %v1791
    %2123 = vmatprep.subr.bf16.mxu0 0
    %2124 = vmatpush1.bf16.msra.mxu0 %v1790
    %2125 = vmatprep.subr.bf16.mxu0 0
    %2126 = vmatpush1.bf16.msra.mxu0 %v1789
    %2127 = vmatprep.subr.bf16.mxu0 0
    %2128 = vmatpush1.bf16.msra.mxu0 %v1788
    %2129 = vmatprep.subr.bf16.mxu0 0
    %2130 = vmatpush1.bf16.msra.mxu0 %v1787
    %2131 = vmatprep.subr.bf16.mxu0 0
    %2132 = vmatpush1.bf16.msra.mxu0 %v1786
    %2133 = vmatprep.subr.bf16.mxu0 0
    %2134 = vmatpush1.bf16.msra.mxu0 %v1785
    %2135 = vmatprep.subr.bf16.mxu0 0
    %2136 = vmatpush1.bf16.msra.mxu0 %v1784
    %2137 = vmatprep.subr.bf16.mxu0 0
    %2138 = vmatpush2.bf16.msra.mxu0 %v1799
    %2139 = vmatprep.subr.bf16.mxu0 0
    %2140 = vmatpush2.bf16.msra.mxu0 %v1798
    %2141 = vmatprep.subr.bf16.mxu0 0
    %2142 = vmatpush2.bf16.msra.mxu0 %v1797
    %2143 = vmatprep.subr.bf16.mxu0 0
    %2144 = vmatpush2.bf16.msra.mxu0 %v1796
    %2145 = vmatprep.subr.bf16.mxu0 0
    %2146 = vmatpush2.bf16.msra.mxu0 %v1795
    %2147 = vmatprep.subr.bf16.mxu0 0
    %2148 = vmatpush2.bf16.msra.mxu0 %v1794
    %2149 = vmatprep.subr.bf16.mxu0 0
    %2150 = vmatpush2.bf16.msra.mxu0 %v1793
    %2151 = vmatprep.subr.bf16.mxu0 0
    %2152 = vmatpush2.bf16.msra.mxu0 %v1792
    %2153 = vmatprep.mubr.bf16.mxu0 %v1003
    %2154 = vmatmul.mubr.bf16.gmra.mxu0 %v1002
    %v2155 = vpop.f32.mrf.mxu0
    %v2156 = vadd.f32 %v1995, %v2155
    %v2157 = vpop.f32.mrf.mxu0
    %v2158 = vpop.f32.mrf.mxu0
    %v2159 = vadd.f32 %v1998, %v2158
    %v2160 = vpop.f32.mrf.mxu0
    %2161 = vmatprep.mubr.bf16.mxu0 %v1015
    %2162 = vmatmul.mubr.bf16.gmra.mxu0 %v1014
    %v2163 = vpop.f32.mrf.mxu0
    %v2164 = vadd.f32 %v2003, %v2163
    %v2165 = vpop.f32.mrf.mxu0
    %v2166 = vpop.f32.mrf.mxu0
    %v2167 = vadd.f32 %v2006, %v2166
    %v2168 = vpop.f32.mrf.mxu0
    %2169 = vmatprep.mubr.bf16.mxu0 %v1027
    %2170 = vmatmul.mubr.bf16.gmra.mxu0 %v1026
    %v2171 = vpop.f32.mrf.mxu0
    %v2172 = vadd.f32 %v2011, %v2171
    %v2173 = vpop.f32.mrf.mxu0
    %v2174 = vpop.f32.mrf.mxu0
    %v2175 = vadd.f32 %v2014, %v2174
    %v2176 = vpop.f32.mrf.mxu0
    %2177 = vmatprep.mubr.bf16.mxu0 %v1039
    %2178 = vmatmul.mubr.bf16.gmra.mxu0 %v1038
    %v2179 = vpop.f32.mrf.mxu0
    %v2180 = vadd.f32 %v2019, %v2179
    %v2181 = vpop.f32.mrf.mxu0
    %v2182 = vpop.f32.mrf.mxu0
    %v2183 = vadd.f32 %v2022, %v2182
    %v2184 = vpop.f32.mrf.mxu0
    %2185 = vmatprep.mubr.bf16.mxu0 %v1051
    %2186 = vmatmul.mubr.bf16.gmra.mxu0 %v1050
    %v2187 = vpop.f32.mrf.mxu0
    %v2188 = vadd.f32 %v2027, %v2187
    %v2189 = vpop.f32.mrf.mxu0
    %v2190 = vpop.f32.mrf.mxu0
    %v2191 = vadd.f32 %v2030, %v2190
    %v2192 = vpop.f32.mrf.mxu0
    %2193 = vmatprep.mubr.bf16.mxu0 %v1063
    %2194 = vmatmul.mubr.bf16.gmra.mxu0 %v1062
    %v2195 = vpop.f32.mrf.mxu0
    %v2196 = vadd.f32 %v2035, %v2195
    %v2197 = vpop.f32.mrf.mxu0
    %v2198 = vpop.f32.mrf.mxu0
    %v2199 = vadd.f32 %v2038, %v2198
    %v2200 = vpop.f32.mrf.mxu0
    %2201 = vmatprep.mubr.bf16.mxu0 %v1075
    %2202 = vmatmul.mubr.bf16.gmra.mxu0 %v1074
    %v2203 = vpop.f32.mrf.mxu0
    %v2204 = vadd.f32 %v2043, %v2203
    %v2205 = vpop.f32.mrf.mxu0
    %v2206 = vpop.f32.mrf.mxu0
    %v2207 = vadd.f32 %v2046, %v2206
    %v2208 = vpop.f32.mrf.mxu0
    %2209 = vmatprep.mubr.bf16.mxu0 %v1087
    %2210 = vmatmul.mubr.bf16.gmra.mxu0 %v1086
    %v2211 = vpop.f32.mrf.mxu0
    %v2212 = vadd.f32 %v2051, %v2211
    %v2213 = vpop.f32.mrf.mxu0
    %v2214 = vpop.f32.mrf.mxu0
    %v2215 = vadd.f32 %v2054, %v2214
    %v2216 = vpop.f32.mrf.mxu0
    %2217 = vmatprep.mubr.bf16.mxu0 %v1099
    %2218 = vmatmul.mubr.bf16.gmra.mxu0 %v1098
    %v2219 = vpop.f32.mrf.mxu0
    %v2220 = vadd.f32 %v2059, %v2219
    %v2221 = vpop.f32.mrf.mxu0
    %v2222 = vpop.f32.mrf.mxu0
    %v2223 = vadd.f32 %v2062, %v2222
    %v2224 = vpop.f32.mrf.mxu0
    %2225 = vmatprep.mubr.bf16.mxu0 %v1111
    %2226 = vmatmul.mubr.bf16.gmra.mxu0 %v1110
    %v2227 = vpop.f32.mrf.mxu0
    %v2228 = vadd.f32 %v2067, %v2227
    %v2229 = vpop.f32.mrf.mxu0
    %v2230 = vpop.f32.mrf.mxu0
    %v2231 = vadd.f32 %v2070, %v2230
    %v2232 = vpop.f32.mrf.mxu0
    %2233 = vmatprep.mubr.bf16.mxu0 %v1123
    %2234 = vmatmul.mubr.bf16.gmra.mxu0 %v1122
    %v2235 = vpop.f32.mrf.mxu0
    %v2236 = vadd.f32 %v2075, %v2235
    %v2237 = vpop.f32.mrf.mxu0
    %v2238 = vpop.f32.mrf.mxu0
    %v2239 = vadd.f32 %v2078, %v2238
    %v2240 = vpop.f32.mrf.mxu0
    %2241 = vmatprep.mubr.bf16.mxu0 %v1135
    %2242 = vmatmul.mubr.bf16.gmra.mxu0 %v1134
    %v2243 = vpop.f32.mrf.mxu0
    %v2244 = vadd.f32 %v2083, %v2243
    %v2245 = vpop.f32.mrf.mxu0
    %v2246 = vpop.f32.mrf.mxu0
    %v2247 = vadd.f32 %v2086, %v2246
    %v2248 = vpop.f32.mrf.mxu0
    %2249 = vmatprep.mubr.bf16.mxu0 %v1147
    %2250 = vmatmul.mubr.bf16.gmra.mxu0 %v1146
    %v2251 = vpop.f32.mrf.mxu0
    %v2252 = vadd.f32 %v2091, %v2251
    %v2253 = vpop.f32.mrf.mxu0
    %v2254 = vpop.f32.mrf.mxu0
    %v2255 = vadd.f32 %v2094, %v2254
    %v2256 = vpop.f32.mrf.mxu0
    %2257 = vmatprep.mubr.bf16.mxu0 %v1159
    %2258 = vmatmul.mubr.bf16.gmra.mxu0 %v1158
    %v2259 = vpop.f32.mrf.mxu0
    %v2260 = vadd.f32 %v2099, %v2259
    %v2261 = vpop.f32.mrf.mxu0
    %v2262 = vpop.f32.mrf.mxu0
    %v2263 = vadd.f32 %v2102, %v2262
    %v2264 = vpop.f32.mrf.mxu0
    %2265 = vmatprep.mubr.bf16.mxu0 %v1171
    %2266 = vmatmul.mubr.bf16.gmra.mxu0 %v1170
    %v2267 = vpop.f32.mrf.mxu0
    %v2268 = vadd.f32 %v2107, %v2267
    %v2269 = vpop.f32.mrf.mxu0
    %v2270 = vpop.f32.mrf.mxu0
    %v2271 = vadd.f32 %v2110, %v2270
    %v2272 = vpop.f32.mrf.mxu0
    %2273 = vmatprep.mubr.bf16.mxu0 %v1183
    %2274 = vmatmul.mubr.bf16.gmra.mxu0 %v1182
    %v2275 = vpop.f32.mrf.mxu0
    %v2276 = vadd.f32 %v2115, %v2275
    %v2277 = vpop.f32.mrf.mxu0
    %v2278 = vpop.f32.mrf.mxu0
    %v2279 = vadd.f32 %v2118, %v2278
    %v2280 = vpop.f32.mrf.mxu0
    %2281 = vdwg.mxu0
    %2282 = vmatprep.subr.bf16.mxu0 0
    %2283 = vmatpush1.bf16.msra.mxu0 %v1807
    %2284 = vmatprep.subr.bf16.mxu0 0
    %2285 = vmatpush1.bf16.msra.mxu0 %v1806
    %2286 = vmatprep.subr.bf16.mxu0 0
    %2287 = vmatpush1.bf16.msra.mxu0 %v1805
    %2288 = vmatprep.subr.bf16.mxu0 0
    %2289 = vmatpush1.bf16.msra.mxu0 %v1804
    %2290 = vmatprep.subr.bf16.mxu0 0
    %2291 = vmatpush1.bf16.msra.mxu0 %v1803
    %2292 = vmatprep.subr.bf16.mxu0 0
    %2293 = vmatpush1.bf16.msra.mxu0 %v1802
    %2294 = vmatprep.subr.bf16.mxu0 0
    %2295 = vmatpush1.bf16.msra.mxu0 %v1801
    %2296 = vmatprep.subr.bf16.mxu0 0
    %2297 = vmatpush1.bf16.msra.mxu0 %v1800
    %2298 = vmatprep.subr.bf16.mxu0 0
    %2299 = vmatpush2.bf16.msra.mxu0 %v1815
    %2300 = vmatprep.subr.bf16.mxu0 0
    %2301 = vmatpush2.bf16.msra.mxu0 %v1814
    %2302 = vmatprep.subr.bf16.mxu0 0
    %2303 = vmatpush2.bf16.msra.mxu0 %v1813
    %2304 = vmatprep.subr.bf16.mxu0 0
    %2305 = vmatpush2.bf16.msra.mxu0 %v1812
    %2306 = vmatprep.subr.bf16.mxu0 0
    %2307 = vmatpush2.bf16.msra.mxu0 %v1811
    %2308 = vmatprep.subr.bf16.mxu0 0
    %2309 = vmatpush2.bf16.msra.mxu0 %v1810
    %2310 = vmatprep.subr.bf16.mxu0 0
    %2311 = vmatpush2.bf16.msra.mxu0 %v1809
    %2312 = vmatprep.subr.bf16.mxu0 0
    %2313 = vmatpush2.bf16.msra.mxu0 %v1808
    %2314 = vmatprep.mubr.bf16.mxu0 %v1005
    %2315 = vmatmul.mubr.bf16.gmra.mxu0 %v1004
    %v2316 = vpop.f32.mrf.mxu0
    %v2317 = vadd.f32 %v2156, %v2316
    %v2318 = vpop.f32.mrf.mxu0
    %v2319 = vpop.f32.mrf.mxu0
    %v2320 = vadd.f32 %v2159, %v2319
    %v2321 = vpop.f32.mrf.mxu0
    %2322 = vmatprep.mubr.bf16.mxu0 %v1017
    %2323 = vmatmul.mubr.bf16.gmra.mxu0 %v1016
    %v2324 = vpop.f32.mrf.mxu0
    %v2325 = vadd.f32 %v2164, %v2324
    %v2326 = vpop.f32.mrf.mxu0
    %v2327 = vpop.f32.mrf.mxu0
    %v2328 = vadd.f32 %v2167, %v2327
    %v2329 = vpop.f32.mrf.mxu0
    %2330 = vmatprep.mubr.bf16.mxu0 %v1029
    %2331 = vmatmul.mubr.bf16.gmra.mxu0 %v1028
    %v2332 = vpop.f32.mrf.mxu0
    %v2333 = vadd.f32 %v2172, %v2332
    %v2334 = vpop.f32.mrf.mxu0
    %v2335 = vpop.f32.mrf.mxu0
    %v2336 = vadd.f32 %v2175, %v2335
    %v2337 = vpop.f32.mrf.mxu0
    %2338 = vmatprep.mubr.bf16.mxu0 %v1041
    %2339 = vmatmul.mubr.bf16.gmra.mxu0 %v1040
    %v2340 = vpop.f32.mrf.mxu0
    %v2341 = vadd.f32 %v2180, %v2340
    %v2342 = vpop.f32.mrf.mxu0
    %v2343 = vpop.f32.mrf.mxu0
    %v2344 = vadd.f32 %v2183, %v2343
    %v2345 = vpop.f32.mrf.mxu0
    %2346 = vmatprep.mubr.bf16.mxu0 %v1053
    %2347 = vmatmul.mubr.bf16.gmra.mxu0 %v1052
    %v2348 = vpop.f32.mrf.mxu0
    %v2349 = vadd.f32 %v2188, %v2348
    %v2350 = vpop.f32.mrf.mxu0
    %v2351 = vpop.f32.mrf.mxu0
    %v2352 = vadd.f32 %v2191, %v2351
    %v2353 = vpop.f32.mrf.mxu0
    %2354 = vmatprep.mubr.bf16.mxu0 %v1065
    %2355 = vmatmul.mubr.bf16.gmra.mxu0 %v1064
    %v2356 = vpop.f32.mrf.mxu0
    %v2357 = vadd.f32 %v2196, %v2356
    %v2358 = vpop.f32.mrf.mxu0
    %v2359 = vpop.f32.mrf.mxu0
    %v2360 = vadd.f32 %v2199, %v2359
    %v2361 = vpop.f32.mrf.mxu0
    %2362 = vmatprep.mubr.bf16.mxu0 %v1077
    %2363 = vmatmul.mubr.bf16.gmra.mxu0 %v1076
    %v2364 = vpop.f32.mrf.mxu0
    %v2365 = vadd.f32 %v2204, %v2364
    %v2366 = vpop.f32.mrf.mxu0
    %v2367 = vpop.f32.mrf.mxu0
    %v2368 = vadd.f32 %v2207, %v2367
    %v2369 = vpop.f32.mrf.mxu0
    %2370 = vmatprep.mubr.bf16.mxu0 %v1089
    %2371 = vmatmul.mubr.bf16.gmra.mxu0 %v1088
    %v2372 = vpop.f32.mrf.mxu0
    %v2373 = vadd.f32 %v2212, %v2372
    %v2374 = vpop.f32.mrf.mxu0
    %v2375 = vpop.f32.mrf.mxu0
    %v2376 = vadd.f32 %v2215, %v2375
    %v2377 = vpop.f32.mrf.mxu0
    %2378 = vmatprep.mubr.bf16.mxu0 %v1101
    %2379 = vmatmul.mubr.bf16.gmra.mxu0 %v1100
    %v2380 = vpop.f32.mrf.mxu0
    %v2381 = vadd.f32 %v2220, %v2380
    %v2382 = vpop.f32.mrf.mxu0
    %v2383 = vpop.f32.mrf.mxu0
    %v2384 = vadd.f32 %v2223, %v2383
    %v2385 = vpop.f32.mrf.mxu0
    %2386 = vmatprep.mubr.bf16.mxu0 %v1113
    %2387 = vmatmul.mubr.bf16.gmra.mxu0 %v1112
    %v2388 = vpop.f32.mrf.mxu0
    %v2389 = vadd.f32 %v2228, %v2388
    %v2390 = vpop.f32.mrf.mxu0
    %v2391 = vpop.f32.mrf.mxu0
    %v2392 = vadd.f32 %v2231, %v2391
    %v2393 = vpop.f32.mrf.mxu0
    %2394 = vmatprep.mubr.bf16.mxu0 %v1125
    %2395 = vmatmul.mubr.bf16.gmra.mxu0 %v1124
    %v2396 = vpop.f32.mrf.mxu0
    %v2397 = vadd.f32 %v2236, %v2396
    %v2398 = vpop.f32.mrf.mxu0
    %v2399 = vpop.f32.mrf.mxu0
    %v2400 = vadd.f32 %v2239, %v2399
    %v2401 = vpop.f32.mrf.mxu0
    %2402 = vmatprep.mubr.bf16.mxu0 %v1137
    %2403 = vmatmul.mubr.bf16.gmra.mxu0 %v1136
    %v2404 = vpop.f32.mrf.mxu0
    %v2405 = vadd.f32 %v2244, %v2404
    %v2406 = vpop.f32.mrf.mxu0
    %v2407 = vpop.f32.mrf.mxu0
    %v2408 = vadd.f32 %v2247, %v2407
    %v2409 = vpop.f32.mrf.mxu0
    %2410 = vmatprep.mubr.bf16.mxu0 %v1149
    %2411 = vmatmul.mubr.bf16.gmra.mxu0 %v1148
    %v2412 = vpop.f32.mrf.mxu0
    %v2413 = vadd.f32 %v2252, %v2412
    %v2414 = vpop.f32.mrf.mxu0
    %v2415 = vpop.f32.mrf.mxu0
    %v2416 = vadd.f32 %v2255, %v2415
    %v2417 = vpop.f32.mrf.mxu0
    %2418 = vmatprep.mubr.bf16.mxu0 %v1161
    %2419 = vmatmul.mubr.bf16.gmra.mxu0 %v1160
    %v2420 = vpop.f32.mrf.mxu0
    %v2421 = vadd.f32 %v2260, %v2420
    %v2422 = vpop.f32.mrf.mxu0
    %v2423 = vpop.f32.mrf.mxu0
    %v2424 = vadd.f32 %v2263, %v2423
    %v2425 = vpop.f32.mrf.mxu0
    %2426 = vmatprep.mubr.bf16.mxu0 %v1173
    %2427 = vmatmul.mubr.bf16.gmra.mxu0 %v1172
    %v2428 = vpop.f32.mrf.mxu0
    %v2429 = vadd.f32 %v2268, %v2428
    %v2430 = vpop.f32.mrf.mxu0
    %v2431 = vpop.f32.mrf.mxu0
    %v2432 = vadd.f32 %v2271, %v2431
    %v2433 = vpop.f32.mrf.mxu0
    %2434 = vmatprep.mubr.bf16.mxu0 %v1185
    %2435 = vmatmul.mubr.bf16.gmra.mxu0 %v1184
    %v2436 = vpop.f32.mrf.mxu0
    %v2437 = vadd.f32 %v2276, %v2436
    %v2438 = vpop.f32.mrf.mxu0
    %v2439 = vpop.f32.mrf.mxu0
    %v2440 = vadd.f32 %v2279, %v2439
    %v2441 = vpop.f32.mrf.mxu0
    %2442 = vdwg.mxu0
    %2443 = vmatprep.subr.bf16.mxu0 0
    %2444 = vmatpush1.bf16.msra.mxu0 %v1823
    %2445 = vmatprep.subr.bf16.mxu0 0
    %2446 = vmatpush1.bf16.msra.mxu0 %v1822
    %2447 = vmatprep.subr.bf16.mxu0 0
    %2448 = vmatpush1.bf16.msra.mxu0 %v1821
    %2449 = vmatprep.subr.bf16.mxu0 0
    %2450 = vmatpush1.bf16.msra.mxu0 %v1820
    %2451 = vmatprep.subr.bf16.mxu0 0
    %2452 = vmatpush1.bf16.msra.mxu0 %v1819
    %2453 = vmatprep.subr.bf16.mxu0 0
    %2454 = vmatpush1.bf16.msra.mxu0 %v1818
    %2455 = vmatprep.subr.bf16.mxu0 0
    %2456 = vmatpush1.bf16.msra.mxu0 %v1817
    %2457 = vmatprep.subr.bf16.mxu0 0
    %2458 = vmatpush1.bf16.msra.mxu0 %v1816
    %2459 = vmatprep.subr.bf16.mxu0 0
    %2460 = vmatpush2.bf16.msra.mxu0 %v1831
    %2461 = vmatprep.subr.bf16.mxu0 0
    %2462 = vmatpush2.bf16.msra.mxu0 %v1830
    %2463 = vmatprep.subr.bf16.mxu0 0
    %2464 = vmatpush2.bf16.msra.mxu0 %v1829
    %2465 = vmatprep.subr.bf16.mxu0 0
    %2466 = vmatpush2.bf16.msra.mxu0 %v1828
    %2467 = vmatprep.subr.bf16.mxu0 0
    %2468 = vmatpush2.bf16.msra.mxu0 %v1827
    %2469 = vmatprep.subr.bf16.mxu0 0
    %2470 = vmatpush2.bf16.msra.mxu0 %v1826
    %2471 = vmatprep.subr.bf16.mxu0 0
    %2472 = vmatpush2.bf16.msra.mxu0 %v1825
    %2473 = vmatprep.subr.bf16.mxu0 0
    %2474 = vmatpush2.bf16.msra.mxu0 %v1824
    %2475 = vmatprep.mubr.bf16.mxu0 %v1007
    %2476 = vmatmul.mubr.bf16.gmra.mxu0 %v1006
    %v2477 = vpop.f32.mrf.mxu0
    %v2478 = vadd.f32 %v2317, %v2477
    %v2479 = vpop.f32.mrf.mxu0
    %v2480 = vpop.f32.mrf.mxu0
    %v2481 = vadd.f32 %v2320, %v2480
    %v2482 = vpop.f32.mrf.mxu0
    %2483 = vmatprep.mubr.bf16.mxu0 %v1019
    %2484 = vmatmul.mubr.bf16.gmra.mxu0 %v1018
    %v2485 = vpop.f32.mrf.mxu0
    %v2486 = vadd.f32 %v2325, %v2485
    %v2487 = vpop.f32.mrf.mxu0
    %v2488 = vpop.f32.mrf.mxu0
    %v2489 = vadd.f32 %v2328, %v2488
    %v2490 = vpop.f32.mrf.mxu0
    %2491 = vmatprep.mubr.bf16.mxu0 %v1031
    %2492 = vmatmul.mubr.bf16.gmra.mxu0 %v1030
    %v2493 = vpop.f32.mrf.mxu0
    %v2494 = vadd.f32 %v2333, %v2493
    %v2495 = vpop.f32.mrf.mxu0
    %v2496 = vpop.f32.mrf.mxu0
    %v2497 = vadd.f32 %v2336, %v2496
    %v2498 = vpop.f32.mrf.mxu0
    %2499 = vmatprep.mubr.bf16.mxu0 %v1043
    %2500 = vmatmul.mubr.bf16.gmra.mxu0 %v1042
    %v2501 = vpop.f32.mrf.mxu0
    %v2502 = vadd.f32 %v2341, %v2501
    %v2503 = vpop.f32.mrf.mxu0
    %v2504 = vpop.f32.mrf.mxu0
    %v2505 = vadd.f32 %v2344, %v2504
    %v2506 = vpop.f32.mrf.mxu0
    %2507 = vmatprep.mubr.bf16.mxu0 %v1055
    %2508 = vmatmul.mubr.bf16.gmra.mxu0 %v1054
    %v2509 = vpop.f32.mrf.mxu0
    %v2510 = vadd.f32 %v2349, %v2509
    %v2511 = vpop.f32.mrf.mxu0
    %v2512 = vpop.f32.mrf.mxu0
    %v2513 = vadd.f32 %v2352, %v2512
    %v2514 = vpop.f32.mrf.mxu0
    %2515 = vmatprep.mubr.bf16.mxu0 %v1067
    %2516 = vmatmul.mubr.bf16.gmra.mxu0 %v1066
    %v2517 = vpop.f32.mrf.mxu0
    %v2518 = vadd.f32 %v2357, %v2517
    %v2519 = vpop.f32.mrf.mxu0
    %v2520 = vpop.f32.mrf.mxu0
    %v2521 = vadd.f32 %v2360, %v2520
    %v2522 = vpop.f32.mrf.mxu0
    %2523 = vmatprep.mubr.bf16.mxu0 %v1079
    %2524 = vmatmul.mubr.bf16.gmra.mxu0 %v1078
    %v2525 = vpop.f32.mrf.mxu0
    %v2526 = vadd.f32 %v2365, %v2525
    %v2527 = vpop.f32.mrf.mxu0
    %v2528 = vpop.f32.mrf.mxu0
    %v2529 = vadd.f32 %v2368, %v2528
    %v2530 = vpop.f32.mrf.mxu0
    %2531 = vmatprep.mubr.bf16.mxu0 %v1091
    %2532 = vmatmul.mubr.bf16.gmra.mxu0 %v1090
    %v2533 = vpop.f32.mrf.mxu0
    %v2534 = vadd.f32 %v2373, %v2533
    %v2535 = vpop.f32.mrf.mxu0
    %v2536 = vpop.f32.mrf.mxu0
    %v2537 = vadd.f32 %v2376, %v2536
    %v2538 = vpop.f32.mrf.mxu0
    %2539 = vmatprep.mubr.bf16.mxu0 %v1103
    %2540 = vmatmul.mubr.bf16.gmra.mxu0 %v1102
    %v2541 = vpop.f32.mrf.mxu0
    %v2542 = vadd.f32 %v2381, %v2541
    %v2543 = vpop.f32.mrf.mxu0
    %v2544 = vpop.f32.mrf.mxu0
    %v2545 = vadd.f32 %v2384, %v2544
    %v2546 = vpop.f32.mrf.mxu0
    %2547 = vmatprep.mubr.bf16.mxu0 %v1115
    %2548 = vmatmul.mubr.bf16.gmra.mxu0 %v1114
    %v2549 = vpop.f32.mrf.mxu0
    %v2550 = vadd.f32 %v2389, %v2549
    %v2551 = vpop.f32.mrf.mxu0
    %v2552 = vpop.f32.mrf.mxu0
    %v2553 = vadd.f32 %v2392, %v2552
    %v2554 = vpop.f32.mrf.mxu0
    %2555 = vmatprep.mubr.bf16.mxu0 %v1127
    %2556 = vmatmul.mubr.bf16.gmra.mxu0 %v1126
    %v2557 = vpop.f32.mrf.mxu0
    %v2558 = vadd.f32 %v2397, %v2557
    %v2559 = vpop.f32.mrf.mxu0
    %v2560 = vpop.f32.mrf.mxu0
    %v2561 = vadd.f32 %v2400, %v2560
    %v2562 = vpop.f32.mrf.mxu0
    %2563 = vmatprep.mubr.bf16.mxu0 %v1139
    %2564 = vmatmul.mubr.bf16.gmra.mxu0 %v1138
    %v2565 = vpop.f32.mrf.mxu0
    %v2566 = vadd.f32 %v2405, %v2565
    %v2567 = vpop.f32.mrf.mxu0
    %v2568 = vpop.f32.mrf.mxu0
    %v2569 = vadd.f32 %v2408, %v2568
    %v2570 = vpop.f32.mrf.mxu0
    %2571 = vmatprep.mubr.bf16.mxu0 %v1151
    %2572 = vmatmul.mubr.bf16.gmra.mxu0 %v1150
    %v2573 = vpop.f32.mrf.mxu0
    %v2574 = vadd.f32 %v2413, %v2573
    %v2575 = vpop.f32.mrf.mxu0
    %v2576 = vpop.f32.mrf.mxu0
    %v2577 = vadd.f32 %v2416, %v2576
    %v2578 = vpop.f32.mrf.mxu0
    %2579 = vmatprep.mubr.bf16.mxu0 %v1163
    %2580 = vmatmul.mubr.bf16.gmra.mxu0 %v1162
    %v2581 = vpop.f32.mrf.mxu0
    %v2582 = vadd.f32 %v2421, %v2581
    %v2583 = vpop.f32.mrf.mxu0
    %v2584 = vpop.f32.mrf.mxu0
    %v2585 = vadd.f32 %v2424, %v2584
    %v2586 = vpop.f32.mrf.mxu0
    %2587 = vmatprep.mubr.bf16.mxu0 %v1175
    %2588 = vmatmul.mubr.bf16.gmra.mxu0 %v1174
    %v2589 = vpop.f32.mrf.mxu0
    %v2590 = vadd.f32 %v2429, %v2589
    %v2591 = vpop.f32.mrf.mxu0
    %v2592 = vpop.f32.mrf.mxu0
    %v2593 = vadd.f32 %v2432, %v2592
    %v2594 = vpop.f32.mrf.mxu0
    %2595 = vmatprep.mubr.bf16.mxu0 %v1187
    %2596 = vmatmul.mubr.bf16.gmra.mxu0 %v1186
    %v2597 = vpop.f32.mrf.mxu0
    %v2598 = vadd.f32 %v2437, %v2597
    %v2599 = vpop.f32.mrf.mxu0
    %v2600 = vpop.f32.mrf.mxu0
    %v2601 = vadd.f32 %v2440, %v2600
    %v2602 = vpop.f32.mrf.mxu0
    %2603 = vdwg.mxu0
    %2604 = vmatprep.subr.bf16.mxu0 0
    %2605 = vmatpush1.bf16.msra.mxu0 %v1839
    %2606 = vmatprep.subr.bf16.mxu0 0
    %2607 = vmatpush1.bf16.msra.mxu0 %v1838
    %2608 = vmatprep.subr.bf16.mxu0 0
    %2609 = vmatpush1.bf16.msra.mxu0 %v1837
    %2610 = vmatprep.subr.bf16.mxu0 0
    %2611 = vmatpush1.bf16.msra.mxu0 %v1836
    %2612 = vmatprep.subr.bf16.mxu0 0
    %2613 = vmatpush1.bf16.msra.mxu0 %v1835
    %2614 = vmatprep.subr.bf16.mxu0 0
    %2615 = vmatpush1.bf16.msra.mxu0 %v1834
    %2616 = vmatprep.subr.bf16.mxu0 0
    %2617 = vmatpush1.bf16.msra.mxu0 %v1833
    %2618 = vmatprep.subr.bf16.mxu0 0
    %2619 = vmatpush1.bf16.msra.mxu0 %v1832
    %2620 = vmatprep.subr.bf16.mxu0 0
    %2621 = vmatpush2.bf16.msra.mxu0 %v1847
    %2622 = vmatprep.subr.bf16.mxu0 0
    %2623 = vmatpush2.bf16.msra.mxu0 %v1846
    %2624 = vmatprep.subr.bf16.mxu0 0
    %2625 = vmatpush2.bf16.msra.mxu0 %v1845
    %2626 = vmatprep.subr.bf16.mxu0 0
    %2627 = vmatpush2.bf16.msra.mxu0 %v1844
    %2628 = vmatprep.subr.bf16.mxu0 0
    %2629 = vmatpush2.bf16.msra.mxu0 %v1843
    %2630 = vmatprep.subr.bf16.mxu0 0
    %2631 = vmatpush2.bf16.msra.mxu0 %v1842
    %2632 = vmatprep.subr.bf16.mxu0 0
    %2633 = vmatpush2.bf16.msra.mxu0 %v1841
    %2634 = vmatprep.subr.bf16.mxu0 0
    %2635 = vmatpush2.bf16.msra.mxu0 %v1840
    %2636 = vmatprep.mubr.bf16.mxu0 %v1009
    %2637 = vmatmul.mubr.bf16.gmra.mxu0 %v1008
    %v2638 = vpop.f32.mrf.mxu0
    %v2639 = vadd.f32 %v2478, %v2638
    %v2640 = vpop.f32.mrf.mxu0
    %v2641 = vpop.f32.mrf.mxu0
    %v2642 = vadd.f32 %v2481, %v2641
    %v2643 = vpop.f32.mrf.mxu0
    %2644 = vmatprep.mubr.bf16.mxu0 %v1021
    %2645 = vmatmul.mubr.bf16.gmra.mxu0 %v1020
    %v2646 = vpop.f32.mrf.mxu0
    %v2647 = vadd.f32 %v2486, %v2646
    %v2648 = vpop.f32.mrf.mxu0
    %v2649 = vpop.f32.mrf.mxu0
    %v2650 = vadd.f32 %v2489, %v2649
    %v2651 = vpop.f32.mrf.mxu0
    %2652 = vmatprep.mubr.bf16.mxu0 %v1033
    %2653 = vmatmul.mubr.bf16.gmra.mxu0 %v1032
    %v2654 = vpop.f32.mrf.mxu0
    %v2655 = vadd.f32 %v2494, %v2654
    %v2656 = vpop.f32.mrf.mxu0
    %v2657 = vpop.f32.mrf.mxu0
    %v2658 = vadd.f32 %v2497, %v2657
    %v2659 = vpop.f32.mrf.mxu0
    %2660 = vmatprep.mubr.bf16.mxu0 %v1045
    %2661 = vmatmul.mubr.bf16.gmra.mxu0 %v1044
    %v2662 = vpop.f32.mrf.mxu0
    %v2663 = vadd.f32 %v2502, %v2662
    %v2664 = vpop.f32.mrf.mxu0
    %v2665 = vpop.f32.mrf.mxu0
    %v2666 = vadd.f32 %v2505, %v2665
    %v2667 = vpop.f32.mrf.mxu0
    %2668 = vmatprep.mubr.bf16.mxu0 %v1057
    %2669 = vmatmul.mubr.bf16.gmra.mxu0 %v1056
    %v2670 = vpop.f32.mrf.mxu0
    %v2671 = vadd.f32 %v2510, %v2670
    %v2672 = vpop.f32.mrf.mxu0
    %v2673 = vpop.f32.mrf.mxu0
    %v2674 = vadd.f32 %v2513, %v2673
    %v2675 = vpop.f32.mrf.mxu0
    %2676 = vmatprep.mubr.bf16.mxu0 %v1069
    %2677 = vmatmul.mubr.bf16.gmra.mxu0 %v1068
    %v2678 = vpop.f32.mrf.mxu0
    %v2679 = vadd.f32 %v2518, %v2678
    %v2680 = vpop.f32.mrf.mxu0
    %v2681 = vpop.f32.mrf.mxu0
    %v2682 = vadd.f32 %v2521, %v2681
    %v2683 = vpop.f32.mrf.mxu0
    %2684 = vmatprep.mubr.bf16.mxu0 %v1081
    %2685 = vmatmul.mubr.bf16.gmra.mxu0 %v1080
    %v2686 = vpop.f32.mrf.mxu0
    %v2687 = vadd.f32 %v2526, %v2686
    %v2688 = vpop.f32.mrf.mxu0
    %v2689 = vpop.f32.mrf.mxu0
    %v2690 = vadd.f32 %v2529, %v2689
    %v2691 = vpop.f32.mrf.mxu0
    %2692 = vmatprep.mubr.bf16.mxu0 %v1093
    %2693 = vmatmul.mubr.bf16.gmra.mxu0 %v1092
    %v2694 = vpop.f32.mrf.mxu0
    %v2695 = vadd.f32 %v2534, %v2694
    %v2696 = vpop.f32.mrf.mxu0
    %v2697 = vpop.f32.mrf.mxu0
    %v2698 = vadd.f32 %v2537, %v2697
    %v2699 = vpop.f32.mrf.mxu0
    %2700 = vmatprep.mubr.bf16.mxu0 %v1105
    %2701 = vmatmul.mubr.bf16.gmra.mxu0 %v1104
    %v2702 = vpop.f32.mrf.mxu0
    %v2703 = vadd.f32 %v2542, %v2702
    %v2704 = vpop.f32.mrf.mxu0
    %v2705 = vpop.f32.mrf.mxu0
    %v2706 = vadd.f32 %v2545, %v2705
    %v2707 = vpop.f32.mrf.mxu0
    %2708 = vmatprep.mubr.bf16.mxu0 %v1117
    %2709 = vmatmul.mubr.bf16.gmra.mxu0 %v1116
    %v2710 = vpop.f32.mrf.mxu0
    %v2711 = vadd.f32 %v2550, %v2710
    %v2712 = vpop.f32.mrf.mxu0
    %v2713 = vpop.f32.mrf.mxu0
    %v2714 = vadd.f32 %v2553, %v2713
    %v2715 = vpop.f32.mrf.mxu0
    %2716 = vmatprep.mubr.bf16.mxu0 %v1129
    %2717 = vmatmul.mubr.bf16.gmra.mxu0 %v1128
    %v2718 = vpop.f32.mrf.mxu0
    %v2719 = vadd.f32 %v2558, %v2718
    %v2720 = vpop.f32.mrf.mxu0
    %v2721 = vpop.f32.mrf.mxu0
    %v2722 = vadd.f32 %v2561, %v2721
    %v2723 = vpop.f32.mrf.mxu0
    %2724 = vmatprep.mubr.bf16.mxu0 %v1141
    %2725 = vmatmul.mubr.bf16.gmra.mxu0 %v1140
    %v2726 = vpop.f32.mrf.mxu0
    %v2727 = vadd.f32 %v2566, %v2726
    %v2728 = vpop.f32.mrf.mxu0
    %v2729 = vpop.f32.mrf.mxu0
    %v2730 = vadd.f32 %v2569, %v2729
    %v2731 = vpop.f32.mrf.mxu0
    %2732 = vmatprep.mubr.bf16.mxu0 %v1153
    %2733 = vmatmul.mubr.bf16.gmra.mxu0 %v1152
    %v2734 = vpop.f32.mrf.mxu0
    %v2735 = vadd.f32 %v2574, %v2734
    %v2736 = vpop.f32.mrf.mxu0
    %v2737 = vpop.f32.mrf.mxu0
    %v2738 = vadd.f32 %v2577, %v2737
    %v2739 = vpop.f32.mrf.mxu0
    %2740 = vmatprep.mubr.bf16.mxu0 %v1165
    %2741 = vmatmul.mubr.bf16.gmra.mxu0 %v1164
    %v2742 = vpop.f32.mrf.mxu0
    %v2743 = vadd.f32 %v2582, %v2742
    %v2744 = vpop.f32.mrf.mxu0
    %v2745 = vpop.f32.mrf.mxu0
    %v2746 = vadd.f32 %v2585, %v2745
    %v2747 = vpop.f32.mrf.mxu0
    %2748 = vmatprep.mubr.bf16.mxu0 %v1177
    %2749 = vmatmul.mubr.bf16.gmra.mxu0 %v1176
    %v2750 = vpop.f32.mrf.mxu0
    %v2751 = vadd.f32 %v2590, %v2750
    %v2752 = vpop.f32.mrf.mxu0
    %v2753 = vpop.f32.mrf.mxu0
    %v2754 = vadd.f32 %v2593, %v2753
    %v2755 = vpop.f32.mrf.mxu0
    %2756 = vmatprep.mubr.bf16.mxu0 %v1189
    %2757 = vmatmul.mubr.bf16.gmra.mxu0 %v1188
    %v2758 = vpop.f32.mrf.mxu0
    %v2759 = vadd.f32 %v2598, %v2758
    %v2760 = vpop.f32.mrf.mxu0
    %v2761 = vpop.f32.mrf.mxu0
    %v2762 = vadd.f32 %v2601, %v2761
    %v2763 = vpop.f32.mrf.mxu0
    %2764 = vdwg.mxu0
    %2765 = vmatprep.subr.bf16.mxu0 0
    %2766 = vmatpush1.bf16.msra.mxu0 %v1855
    %2767 = vmatprep.subr.bf16.mxu0 0
    %2768 = vmatpush1.bf16.msra.mxu0 %v1854
    %2769 = vmatprep.subr.bf16.mxu0 0
    %2770 = vmatpush1.bf16.msra.mxu0 %v1853
    %2771 = vmatprep.subr.bf16.mxu0 0
    %2772 = vmatpush1.bf16.msra.mxu0 %v1852
    %2773 = vmatprep.subr.bf16.mxu0 0
    %2774 = vmatpush1.bf16.msra.mxu0 %v1851
    %2775 = vmatprep.subr.bf16.mxu0 0
    %2776 = vmatpush1.bf16.msra.mxu0 %v1850
    %2777 = vmatprep.subr.bf16.mxu0 0
    %2778 = vmatpush1.bf16.msra.mxu0 %v1849
    %2779 = vmatprep.subr.bf16.mxu0 0
    %2780 = vmatpush1.bf16.msra.mxu0 %v1848
    %2781 = vmatprep.subr.bf16.mxu0 0
    %2782 = vmatpush2.bf16.msra.mxu0 %v1863
    %2783 = vmatprep.subr.bf16.mxu0 0
    %2784 = vmatpush2.bf16.msra.mxu0 %v1862
    %2785 = vmatprep.subr.bf16.mxu0 0
    %2786 = vmatpush2.bf16.msra.mxu0 %v1861
    %2787 = vmatprep.subr.bf16.mxu0 0
    %2788 = vmatpush2.bf16.msra.mxu0 %v1860
    %2789 = vmatprep.subr.bf16.mxu0 0
    %2790 = vmatpush2.bf16.msra.mxu0 %v1859
    %2791 = vmatprep.subr.bf16.mxu0 0
    %2792 = vmatpush2.bf16.msra.mxu0 %v1858
    %2793 = vmatprep.subr.bf16.mxu0 0
    %2794 = vmatpush2.bf16.msra.mxu0 %v1857
    %2795 = vmatprep.subr.bf16.mxu0 0
    %2796 = vmatpush2.bf16.msra.mxu0 %v1856
    %2797 = vmatprep.mubr.bf16.mxu0 %v1011
    %2798 = vmatmul.mubr.bf16.gmra.mxu0 %v1010
    %v2799 = vpop.f32.mrf.mxu0
    %v2800 = vadd.f32 %v2639, %v2799
    %v2801 = vpop.f32.mrf.mxu0
    %v2802 = vpop.f32.mrf.mxu0
    %v2803 = vadd.f32 %v2642, %v2802
    %v2804 = vpop.f32.mrf.mxu0
    %2805 = vmatprep.mubr.bf16.mxu0 %v1023
    %2806 = vmatmul.mubr.bf16.gmra.mxu0 %v1022
    %v2807 = vpop.f32.mrf.mxu0
    %v2808 = vadd.f32 %v2647, %v2807
    %v2809 = vpop.f32.mrf.mxu0
    %v2810 = vpop.f32.mrf.mxu0
    %v2811 = vadd.f32 %v2650, %v2810
    %v2812 = vpop.f32.mrf.mxu0
    %2813 = vmatprep.mubr.bf16.mxu0 %v1035
    %2814 = vmatmul.mubr.bf16.gmra.mxu0 %v1034
    %v2815 = vpop.f32.mrf.mxu0
    %v2816 = vadd.f32 %v2655, %v2815
    %v2817 = vpop.f32.mrf.mxu0
    %v2818 = vpop.f32.mrf.mxu0
    %v2819 = vadd.f32 %v2658, %v2818
    %v2820 = vpop.f32.mrf.mxu0
    %2821 = vmatprep.mubr.bf16.mxu0 %v1047
    %2822 = vmatmul.mubr.bf16.gmra.mxu0 %v1046
    %v2823 = vpop.f32.mrf.mxu0
    %v2824 = vadd.f32 %v2663, %v2823
    %v2825 = vpop.f32.mrf.mxu0
    %v2826 = vpop.f32.mrf.mxu0
    %v2827 = vadd.f32 %v2666, %v2826
    %v2828 = vpop.f32.mrf.mxu0
    %2829 = vmatprep.mubr.bf16.mxu0 %v1059
    %2830 = vmatmul.mubr.bf16.gmra.mxu0 %v1058
    %v2831 = vpop.f32.mrf.mxu0
    %v2832 = vadd.f32 %v2671, %v2831
    %v2833 = vpop.f32.mrf.mxu0
    %v2834 = vpop.f32.mrf.mxu0
    %v2835 = vadd.f32 %v2674, %v2834
    %v2836 = vpop.f32.mrf.mxu0
    %2837 = vmatprep.mubr.bf16.mxu0 %v1071
    %2838 = vmatmul.mubr.bf16.gmra.mxu0 %v1070
    %v2839 = vpop.f32.mrf.mxu0
    %v2840 = vadd.f32 %v2679, %v2839
    %v2841 = vpop.f32.mrf.mxu0
    %v2842 = vpop.f32.mrf.mxu0
    %v2843 = vadd.f32 %v2682, %v2842
    %v2844 = vpop.f32.mrf.mxu0
    %2845 = vmatprep.mubr.bf16.mxu0 %v1083
    %2846 = vmatmul.mubr.bf16.gmra.mxu0 %v1082
    %v2847 = vpop.f32.mrf.mxu0
    %v2848 = vadd.f32 %v2687, %v2847
    %v2849 = vpop.f32.mrf.mxu0
    %v2850 = vpop.f32.mrf.mxu0
    %v2851 = vadd.f32 %v2690, %v2850
    %v2852 = vpop.f32.mrf.mxu0
    %2853 = vmatprep.mubr.bf16.mxu0 %v1095
    %2854 = vmatmul.mubr.bf16.gmra.mxu0 %v1094
    %v2855 = vpop.f32.mrf.mxu0
    %v2856 = vadd.f32 %v2695, %v2855
    %v2857 = vpop.f32.mrf.mxu0
    %v2858 = vpop.f32.mrf.mxu0
    %v2859 = vadd.f32 %v2698, %v2858
    %v2860 = vpop.f32.mrf.mxu0
    %2861 = vmatprep.mubr.bf16.mxu0 %v1107
    %2862 = vmatmul.mubr.bf16.gmra.mxu0 %v1106
    %v2863 = vpop.f32.mrf.mxu0
    %v2864 = vadd.f32 %v2703, %v2863
    %v2865 = vpop.f32.mrf.mxu0
    %v2866 = vpop.f32.mrf.mxu0
    %v2867 = vadd.f32 %v2706, %v2866
    %v2868 = vpop.f32.mrf.mxu0
    %2869 = vmatprep.mubr.bf16.mxu0 %v1119
    %2870 = vmatmul.mubr.bf16.gmra.mxu0 %v1118
    %v2871 = vpop.f32.mrf.mxu0
    %v2872 = vadd.f32 %v2711, %v2871
    %v2873 = vpop.f32.mrf.mxu0
    %v2874 = vpop.f32.mrf.mxu0
    %v2875 = vadd.f32 %v2714, %v2874
    %v2876 = vpop.f32.mrf.mxu0
    %2877 = vmatprep.mubr.bf16.mxu0 %v1131
    %2878 = vmatmul.mubr.bf16.gmra.mxu0 %v1130
    %v2879 = vpop.f32.mrf.mxu0
    %v2880 = vadd.f32 %v2719, %v2879
    %v2881 = vpop.f32.mrf.mxu0
    %v2882 = vpop.f32.mrf.mxu0
    %v2883 = vadd.f32 %v2722, %v2882
    %v2884 = vpop.f32.mrf.mxu0
    %2885 = vmatprep.mubr.bf16.mxu0 %v1143
    %2886 = vmatmul.mubr.bf16.gmra.mxu0 %v1142
    %v2887 = vpop.f32.mrf.mxu0
    %v2888 = vadd.f32 %v2727, %v2887
    %v2889 = vpop.f32.mrf.mxu0
    %v2890 = vpop.f32.mrf.mxu0
    %v2891 = vadd.f32 %v2730, %v2890
    %v2892 = vpop.f32.mrf.mxu0
    %2893 = vmatprep.mubr.bf16.mxu0 %v1155
    %2894 = vmatmul.mubr.bf16.gmra.mxu0 %v1154
    %v2895 = vpop.f32.mrf.mxu0
    %v2896 = vadd.f32 %v2735, %v2895
    %v2897 = vpop.f32.mrf.mxu0
    %v2898 = vpop.f32.mrf.mxu0
    %v2899 = vadd.f32 %v2738, %v2898
    %v2900 = vpop.f32.mrf.mxu0
    %2901 = vmatprep.mubr.bf16.mxu0 %v1167
    %2902 = vmatmul.mubr.bf16.gmra.mxu0 %v1166
    %v2903 = vpop.f32.mrf.mxu0
    %v2904 = vadd.f32 %v2743, %v2903
    %v2905 = vpop.f32.mrf.mxu0
    %v2906 = vpop.f32.mrf.mxu0
    %v2907 = vadd.f32 %v2746, %v2906
    %v2908 = vpop.f32.mrf.mxu0
    %2909 = vmatprep.mubr.bf16.mxu0 %v1179
    %2910 = vmatmul.mubr.bf16.gmra.mxu0 %v1178
    %v2911 = vpop.f32.mrf.mxu0
    %v2912 = vadd.f32 %v2751, %v2911
    %v2913 = vpop.f32.mrf.mxu0
    %v2914 = vpop.f32.mrf.mxu0
    %v2915 = vadd.f32 %v2754, %v2914
    %v2916 = vpop.f32.mrf.mxu0
    %2917 = vmatprep.mubr.bf16.mxu0 %v1191
    %2918 = vmatmul.mubr.bf16.gmra.mxu0 %v1190
    %v2919 = vpop.f32.mrf.mxu0
    %v2920 = vadd.f32 %v2759, %v2919
    %v2921 = vpop.f32.mrf.mxu0
    %v2922 = vpop.f32.mrf.mxu0
    %v2923 = vadd.f32 %v2762, %v2922
    %v2924 = vpop.f32.mrf.mxu0
    %2925 = vdwg.mxu0
    %v2926 = vpack.c.bf16 %v2803, %v2800
    %v2927 = vpack.c.bf16 %v2811, %v2808
    %v2928 = vpack.c.bf16 %v2819, %v2816
    %v2929 = vpack.c.bf16 %v2827, %v2824
    %v2930 = vpack.c.bf16 %v2835, %v2832
    %v2931 = vpack.c.bf16 %v2843, %v2840
    %v2932 = vpack.c.bf16 %v2851, %v2848
    %v2933 = vpack.c.bf16 %v2859, %v2856
    %v2934 = vpack.c.bf16 %v2867, %v2864
    %v2935 = vpack.c.bf16 %v2875, %v2872
    %v2936 = vpack.c.bf16 %v2883, %v2880
    %v2937 = vpack.c.bf16 %v2891, %v2888
    %v2938 = vpack.c.bf16 %v2899, %v2896
    %v2939 = vpack.c.bf16 %v2907, %v2904
    %v2940 = vpack.c.bf16 %v2915, %v2912
    %v2941 = vpack.c.bf16 %v2923, %v2920
    %v2958 = vunpack.c.l.b16 %v2926
    %v2959 = vunpack.c.h.b16 %v2926
    %v2960 = vunpack.c.l.b16 %v2927
    %v2961 = vunpack.c.h.b16 %v2927
    %v2962 = vunpack.c.l.b16 %v2928
    %v2963 = vunpack.c.h.b16 %v2928
    %v2964 = vunpack.c.l.b16 %v2929
    %v2965 = vunpack.c.h.b16 %v2929
    %v2966 = vunpack.c.l.b16 %v2930
    %v2967 = vunpack.c.h.b16 %v2930
    %v2968 = vunpack.c.l.b16 %v2931
    %v2969 = vunpack.c.h.b16 %v2931
    %v2970 = vunpack.c.l.b16 %v2932
    %v2971 = vunpack.c.h.b16 %v2932
    %v2972 = vunpack.c.l.b16 %v2933
    %v2973 = vunpack.c.h.b16 %v2933
    %v2974 = vunpack.c.l.b16 %v2934
    %v2975 = vunpack.c.h.b16 %v2934
    %v2976 = vunpack.c.l.b16 %v2935
    %v2977 = vunpack.c.h.b16 %v2935
    %v2978 = vunpack.c.l.b16 %v2936
    %v2979 = vunpack.c.h.b16 %v2936
    %v2980 = vunpack.c.l.b16 %v2937
    %v2981 = vunpack.c.h.b16 %v2937
    %v2982 = vunpack.c.l.b16 %v2938
    %v2983 = vunpack.c.h.b16 %v2938
    %v2984 = vunpack.c.l.b16 %v2939
    %v2985 = vunpack.c.h.b16 %v2939
    %v2986 = vunpack.c.l.b16 %v2940
    %v2987 = vunpack.c.h.b16 %v2940
    %v2988 = vunpack.c.l.b16 %v2941
    %v2989 = vunpack.c.h.b16 %v2941
    %v2990 = vpack.c.b16 %v2958, %v2958
    %v2991 = vpack.c.b16 %v2959, %v2959
    %v2992 = vpack.c.b16 %v2960, %v2960
    %v2993 = vpack.c.b16 %v2961, %v2961
    %v2994 = vpack.c.b16 %v2962, %v2962
    %v2995 = vpack.c.b16 %v2963, %v2963
    %v2996 = vpack.c.b16 %v2964, %v2964
    %v2997 = vpack.c.b16 %v2965, %v2965
    %v2998 = vpack.c.b16 %v2966, %v2966
    %v2999 = vpack.c.b16 %v2967, %v2967
    %v3000 = vpack.c.b16 %v2968, %v2968
    %v3001 = vpack.c.b16 %v2969, %v2969
    %v3002 = vpack.c.b16 %v2970, %v2970
    %v3003 = vpack.c.b16 %v2971, %v2971
    %v3004 = vpack.c.b16 %v2972, %v2972
    %v3005 = vpack.c.b16 %v2973, %v2973
    %v3006 = vpack.c.b16 %v2974, %v2974
    %v3007 = vpack.c.b16 %v2975, %v2975
    %v3008 = vpack.c.b16 %v2976, %v2976
    %v3009 = vpack.c.b16 %v2977, %v2977
    %v3010 = vpack.c.b16 %v2978, %v2978
    %v3011 = vpack.c.b16 %v2979, %v2979
    %v3012 = vpack.c.b16 %v2980, %v2980
    %v3013 = vpack.c.b16 %v2981, %v2981
    %v3014 = vpack.c.b16 %v2982, %v2982
    %v3015 = vpack.c.b16 %v2983, %v2983
    %v3016 = vpack.c.b16 %v2984, %v2984
    %v3017 = vpack.c.b16 %v2985, %v2985
    %v3018 = vpack.c.b16 %v2986, %v2986
    %v3019 = vpack.c.b16 %v2987, %v2987
    %v3020 = vpack.c.b16 %v2988, %v2988
    %v3021 = vpack.c.b16 %v2989, %v2989
    %3054 = vst [vmem:[%s2] sm:$0xf] %v2990
    %3055 = vst [vmem:[%s2 + $0x4] sm:$0xf] %v2991
    %3056 = vst [vmem:[%s2 + $0x8] sm:$0xf] %v2992
    %3057 = vst [vmem:[%s2 + $0xc] sm:$0xf] %v2993
    %3058 = vst [vmem:[%s2 + $0x10] sm:$0xf] %v2994
    %3059 = vst [vmem:[%s2 + $0x14] sm:$0xf] %v2995
    %3060 = vst [vmem:[%s2 + $0x18] sm:$0xf] %v2996
    %3061 = vst [vmem:[%s2 + $0x1c] sm:$0xf] %v2997
    %3062 = vst [vmem:[%s2 + $0x20] sm:$0xf] %v2998
    %3063 = vst [vmem:[%s2 + $0x24] sm:$0xf] %v2999
    %3064 = vst [vmem:[%s2 + $0x28] sm:$0xf] %v3000
    %3065 = vst [vmem:[%s2 + $0x2c] sm:$0xf] %v3001
    %3066 = vst [vmem:[%s2 + $0x30] sm:$0xf] %v3002
    %3067 = vst [vmem:[%s2 + $0x34] sm:$0xf] %v3003
    %3068 = vst [vmem:[%s2 + $0x38] sm:$0xf] %v3004
    %3069 = vst [vmem:[%s2 + $0x3c] sm:$0xf] %v3005
    %3070 = vst [vmem:[%s2 + $0x40] sm:$0xf] %v3006
    %3071 = vst [vmem:[%s2 + $0x44] sm:$0xf] %v3007
    %3072 = vst [vmem:[%s2 + $0x48] sm:$0xf] %v3008
    %3073 = vst [vmem:[%s2 + $0x4c] sm:$0xf] %v3009
    %3074 = vst [vmem:[%s2 + $0x50] sm:$0xf] %v3010
    %3075 = vst [vmem:[%s2 + $0x54] sm:$0xf] %v3011
    %3076 = vst [vmem:[%s2 + $0x58] sm:$0xf] %v3012
    %3077 = vst [vmem:[%s2 + $0x5c] sm:$0xf] %v3013
    %3078 = vst [vmem:[%s2 + $0x60] sm:$0xf] %v3014
    %3079 = vst [vmem:[%s2 + $0x64] sm:$0xf] %v3015
    %3080 = vst [vmem:[%s2 + $0x68] sm:$0xf] %v3016
    %3081 = vst [vmem:[%s2 + $0x6c] sm:$0xf] %v3017
    %3082 = vst [vmem:[%s2 + $0x70] sm:$0xf] %v3018
    %3083 = vst [vmem:[%s2 + $0x74] sm:$0xf] %v3019
    %3084 = vst [vmem:[%s2 + $0x78] sm:$0xf] %v3020
    %3085 = vst [vmem:[%s2 + $0x7c] sm:$0xf] %v3021
    // Predicated region
    $region18: #{gcn_forward_padded.2} parent=1 // pred_check
      _
    $region19: #{gcn_forward_padded.2} parent=1 // pred_check_branch
      %3087 = sbr.rel (0) target = $region21
    $region20: #{gcn_forward_padded.2} parent=1 // pred_region
      _
    $region21: #{gcn_forward_padded.2} parent=1 // pred_fallthru
      _
    // Predicated region
    $region22: #{gcn_forward_padded.2} parent=1 // pred_check
      _
    $region23: #{gcn_forward_padded.2} parent=1 // pred_check_branch
      %3089 = sbr.rel (0) target = $region25
    $region24: #{gcn_forward_padded.2} parent=1 // pred_region
      _
    $region25: #{gcn_forward_padded.2} parent=1 // pred_fallthru
      _
    %3090 = vsyncpa [#allocation3], 1
    %3091 = vsyncpa [#allocation5], 1

</llo_original>
